<compile_context>
chip_gen: v6e
topology: v6e:2x2x1
jax: 0.10.0
libtpu: 0.0.40
codegen_flags: <defaults>
</compile_context>

<pallas_src>
from functools import partial

import numpy as np
import jax
import jax.numpy as jnp
from jax.experimental import pallas as pl
from jax.experimental.pallas import tpu as pltpu


# --------------------------------------------------------------------------- #
# In-kernel helpers
# --------------------------------------------------------------------------- #
def _tap_row(tapw_ref, row, nb):
    """Load tap-weight row `row` broadcast to (nb, HWp).

    For nb > 1 the sublane broadcast happens inside the vld via a stride-0
    dynamic slice (frees XLU/VALU issue); for nb == 1 a plain row load.
    """
    if nb == 1:
        return tapw_ref[pl.ds(row, 1), :]
    return tapw_ref[pl.ds(row, nb, stride=0), :]


def _conv_taps(ssum, smax, tapw_ref, *, W, K):
    """K x K 'same' conv of the (sum, max) maps, fully unrolled over taps.

    ssum/smax: (nb, HWp) f32 channel-sum / channel-max maps (1/C for the mean
    is folded into the sum-channel rows of tapw on the host).
    tapw_ref:  (2*K*K, HWp) per-tap weight * zero-padding-validity table;
               rows [0, K*K) -> avg channel, [K*K, 2*K*K) -> max channel.
    Each tap is a circular lane roll (XLU slot); wrapped / out-of-bounds
    positions are killed by the validity mask baked into tapw.
    Returns the pre-sigmoid conv output, shape (nb, HWp), f32.
    """
    nb, HWp = ssum.shape
    KK = K * K
    P = K // 2

    # 4 independent partial accumulators (2 per stream) to restore ILP across
    # the VALU slots; lazily initialized from the first tap (no zeros init).
    accs = [None, None, None, None]
    for kh in range(K):
        dh = kh - P
        for kw in range(K):
            dw = kw - P
            t = kh * K + kw
            shift = (-(dh * W + dw)) % HWp   # rolled[p] = in[p + dh*W + dw]
            r_s = ssum if shift == 0 else pltpu.roll(ssum, shift, 1)
            r_m = smax if shift == 0 else pltpu.roll(smax, shift, 1)
            w_s = _tap_row(tapw_ref, t, nb)
            w_m = _tap_row(tapw_ref, KK + t, nb)
            pa = t & 1
            term_s = w_s * r_s
            term_m = w_m * r_m
            accs[pa] = term_s if accs[pa] is None else accs[pa] + term_s
            accs[2 + pa] = term_m if accs[2 + pa] is None else accs[2 + pa] + term_m

    parts = [a for a in accs if a is not None]
    acc = parts[0]
    for p in parts[1:]:
        acc = acc + p
    return acc


def _sigmoid(acc):
    # exp on the EUP; reciprocal instead of a generic divide.  approx=True
    # would push the divide fully onto the EUP at ~1e-3 accuracy; keep exact.
    return pl.reciprocal(1.0 + jnp.exp(-acc), approx=False)


# --------------------------------------------------------------------------- #
# Kernels
# --------------------------------------------------------------------------- #
def _sa_fused_kernel(x_ref, tapw_ref, o_ref, *, W, K, c_chunk, gate_dtype):
    """Single-pass kernel: x block (Nb, C, HWp) -> gated output block."""
    C = x_ref.shape[1]

    # Streaming channel reduction (sum + running max) in f32, chunked over C,
    # so no full f32 copy of the block stays live across the tap loop.
    ssum = None
    smax = None
    for c0 in range(0, C, c_chunk):
        cc = min(c_chunk, C - c0)
        xc = x_ref[:, pl.ds(c0, cc), :].astype(jnp.float32)   # (Nb, cc, HWp)
        s = jnp.sum(xc, axis=1)
        m = jnp.max(xc, axis=1)
        ssum = s if ssum is None else ssum + s
        smax = m if smax is None else jnp.maximum(smax, m)

    acc = _conv_taps(ssum, smax, tapw_ref, W=W, K=K)           # (Nb, HWp)
    attn = _sigmoid(acc).astype(gate_dtype)

    # Gating: re-read x from VMEM chunk-by-chunk (under-utilized vld slots)
    # instead of holding an up-front f32 copy of the whole block.
    for c0 in range(0, C, c_chunk):
        cc = min(c_chunk, C - c0)
        xc = x_ref[:, pl.ds(c0, cc), :]
        o_ref[:, pl.ds(c0, cc), :] = (
            xc.astype(gate_dtype) * attn[:, None, :]
        ).astype(o_ref.dtype)


def _sa_reduce_kernel(x_ref, tapw_ref, attn_ref, sum_sc, max_sc, *, W, K, c_chunk):
    """Two-pass path, pass 1: grid (N, C/Cb); C axis is a reduction carried in
    VMEM scratch; the attention map is written at the last C step."""
    c_step = pl.program_id(1)

    @pl.when(c_step == 0)
    def _init():
        sum_sc[...] = jnp.zeros_like(sum_sc)
        max_sc[...] = jnp.full_like(max_sc, -jnp.inf)

    Cb = x_ref.shape[1]
    s = sum_sc[...]
    m = max_sc[...]
    for c0 in range(0, Cb, c_chunk):
        cc = min(c_chunk, Cb - c0)
        xc = x_ref[:, pl.ds(c0, cc), :].astype(jnp.float32)    # (1, cc, HWp)
        s = s + jnp.sum(xc, axis=1)
        m = jnp.maximum(m, jnp.max(xc, axis=1))
    sum_sc[...] = s
    max_sc[...] = m

    @pl.when(c_step == pl.num_programs(1) - 1)
    def _finalize():
        acc = _conv_taps(sum_sc[...], max_sc[...], tapw_ref, W=W, K=K)  # (1, HWp)
        attn_ref[...] = _sigmoid(acc)[:, None, :]                       # (1, 1, HWp)


def _sa_apply_kernel(x_ref, attn_ref, o_ref, *, c_chunk, gate_dtype):
    """Two-pass path, pass 2: elementwise gating, fully parallel."""
    attn = attn_ref[...][:, 0, :].astype(gate_dtype)           # (1, HWp)
    C = x_ref.shape[1]
    for c0 in range(0, C, c_chunk):
        cc = min(c_chunk, C - c0)
        xc = x_ref[:, pl.ds(c0, cc), :]
        o_ref[:, pl.ds(c0, cc), :] = (
            xc.astype(gate_dtype) * attn[:, None, :]
        ).astype(o_ref.dtype)


# --------------------------------------------------------------------------- #
# Host-side helpers
# --------------------------------------------------------------------------- #
def _round_up(x, m):
    return (x + m - 1) // m * m


def _vmem_capacity_bytes():
    try:
        return int(pltpu.get_tpu_info().vmem_capacity_bytes)
    except Exception:
        return 128 * 1024 * 1024   # conservative fallback (v5e/v6e physical VMEM)


def _tap_weight_table(conv_w, H, W, HWp, C):
    """(2*K*K, HWp) f32 table: per-tap conv weight x zero-padding validity mask.

    Rows [0, K*K) are the avg input channel (with 1/C folded in so the kernel
    can use a raw channel sum); rows [K*K, 2*K*K) are the max channel.
    Columns >= H*W (spatial padding) are zero.
    """
    K = conv_w.shape[-1]
    P = K // 2
    h = np.arange(H)[:, None]
    w = np.arange(W)[None, :]
    masks = np.zeros((K * K, HWp), np.float32)
    for kh in range(K):
        dh = kh - P
        for kw in range(K):
            dw = kw - P
            valid = (h + dh >= 0) & (h + dh < H) & (w + dw >= 0) & (w + dw < W)
            masks[kh * K + kw, :H * W] = valid.reshape(-1).astype(np.float32)
    masks = jnp.asarray(masks)                                    # (K*K, HWp)
    wf = conv_w.reshape(2, K * K).astype(jnp.float32)             # [0]=avg, [1]=max
    avg_rows = (wf[0][:, None] / float(C)) * masks
    max_rows = wf[1][:, None] * masks
    return jnp.concatenate([avg_rows, max_rows], axis=0)          # (2*K*K, HWp)


# --------------------------------------------------------------------------- #
# Wrapper
# --------------------------------------------------------------------------- #
def spatial_attention(x, conv_w):
    """x: (N, C, H, W); conv_w: (1, 2, K, K) OIHW (nn.Conv2d(2, 1, K, bias=False))."""
    N, C, H, W = x.shape
    K = conv_w.shape[-1]
    HW = H * W
    HWp = _round_up(HW, 128)             # lane-dense flattened spatial dim
    itemsize = x.dtype.itemsize

    # ---- host/XLA-side prep -------------------------------------------------
    x2 = x.reshape(N, C, HW)
    if HWp != HW:
        x2 = jnp.pad(x2, ((0, 0), (0, 0), (0, HWp - HW)))
    tapw = _tap_weight_table(conv_w, H, W, HWp, C)                # (2*K*K, HWp) f32
    tapw_bytes = int(tapw.size) * 4

    # Final-multiply dtype: bf16 inputs keep bf16 math (halves VALU/store
    # traffic on v6e/v7x); everything else stays f32.
    # TODO(synk): force f32 gating on v5e (no bf16 VALU/EUP) via a chip-version
    # query, and pad C to a multiple of 8 (needs -inf-aware max handling).
    gate_dtype = jnp.bfloat16 if x.dtype == jnp.bfloat16 else jnp.float32

    c_chunk = max(1, min(C, 16))

    # ---- VMEM-aware block sizing (per TPU generation) -------------------------
    vmem_phys = _vmem_capacity_bytes()
    # ~12 MiB blocks on 128 MiB chips (v5e/v6e), ~8 MiB on v7x (64 MiB VMEM).
    block_target = min(12 << 20, vmem_phys // 8)

    per_batch_bytes = C * HWp * itemsize
    max_nb = N if N == 1 else N // 2        # guarantee >= 2 grid steps when N >= 2
    cands = [d for d in range(1, max_nb + 1)
             if N % d == 0 and d * per_batch_bytes <= block_target]

    KK = K * K
    if cands:
        # -------------------- single-pass fused kernel ----------------------
        even = [d for d in cands if (N // d) % 2 == 0]   # prefer even #steps (v7x TCs)
        nb = max(even) if even else max(cands)

        blk = nb * C * HWp * itemsize                    # in block == out block
        vmem_need = 4 * blk + tapw_bytes                 # 2x in + 2x out (double-buffered)
        vmem_limit = int(min(max(vmem_need + (4 << 20), 16 << 20),
                             int(vmem_phys * 0.9)))

        cost = pl.CostEstimate(
            flops=int((4 * KK + 3) * N * HWp + 2 * N * C * HWp),
            transcendentals=int(N * HWp),
            bytes_accessed=int(2 * N * C * HWp * itemsize + tapw_bytes),
        )
        kernel = partial(_sa_fused_kernel, W=W, K=K,
                         c_chunk=c_chunk, gate_dtype=gate_dtype)
        out = pl.pallas_call(
            kernel,
            out_shape=jax.ShapeDtypeStruct((N, C, HWp), x.dtype),
            grid=(N // nb,),
            in_specs=[
                pl.BlockSpec((nb, C, HWp), lambda n: (n, 0, 0)),
                pl.BlockSpec((2 * KK, HWp), lambda n: (0, 0)),    # resident, fetched once
            ],
            out_specs=pl.BlockSpec((nb, C, HWp), lambda n: (n, 0, 0)),
            compiler_params=pltpu.CompilerParams(
                dimension_semantics=("parallel",),
                vmem_limit_bytes=vmem_limit,
            ),
            cost_estimate=cost,
        )(x2, tapw)
    else:
        # --------- two-pass C-tiled path (single batch slab too big) --------
        # Channel tile: divisor of C, multiple of 8 (or == C), fitting budget.
        c_cands = [d for d in range(1, C + 1)
                   if C % d == 0 and (d % 8 == 0 or d == C)
                   and d * HWp * itemsize <= block_target]
        if c_cands:
            cb = max(c_cands)
        else:
            c_cands = [d for d in range(1, C + 1)
                       if C % d == 0 and (d % 8 == 0 or d == C)]
            cb = min(c_cands)
        n_c = C // cb

        blk_x = cb * HWp * itemsize
        attn_blk = HWp * 4

        # Pass 1: per-batch attention map (C-streaming reduce + conv + sigmoid).
        vmem_limit1 = int(min(max(2 * blk_x + tapw_bytes + 4 * attn_blk + (4 << 20),
                                  16 << 20), int(vmem_phys * 0.9)))
        attn = pl.pallas_call(
            partial(_sa_reduce_kernel, W=W, K=K, c_chunk=c_chunk),
            out_shape=jax.ShapeDtypeStruct((N, 1, HWp), jnp.float32),
            grid=(N, n_c),
            in_specs=[
                pl.BlockSpec((1, cb, HWp), lambda n, c: (n, c, 0)),
                pl.BlockSpec((2 * KK, HWp), lambda n, c: (0, 0)),
            ],
            out_specs=pl.BlockSpec((1, 1, HWp), lambda n, c: (n, 0, 0)),
            scratch_shapes=[pltpu.VMEM((1, HWp), jnp.float32),
                            pltpu.VMEM((1, HWp), jnp.float32)],
            compiler_params=pltpu.CompilerParams(
                dimension_semantics=("parallel", "arbitrary"),
                vmem_limit_bytes=vmem_limit1,
            ),
        )(x2, tapw)

        # Pass 2: gating apply (elementwise, fully parallel).
        vmem_limit2 = int(min(max(4 * blk_x + 2 * attn_blk + (4 << 20), 16 << 20),
                              int(vmem_phys * 0.9)))
        out = pl.pallas_call(
            partial(_sa_apply_kernel, c_chunk=c_chunk, gate_dtype=gate_dtype),
            out_shape=jax.ShapeDtypeStruct((N, C, HWp), x.dtype),
            grid=(N, n_c),
            in_specs=[
                pl.BlockSpec((1, cb, HWp), lambda n, c: (n, c, 0)),
                pl.BlockSpec((1, 1, HWp), lambda n, c: (n, 0, 0)),
            ],
            out_specs=pl.BlockSpec((1, cb, HWp), lambda n, c: (n, c, 0)),
            compiler_params=pltpu.CompilerParams(
                dimension_semantics=("parallel", "parallel"),
                vmem_limit_bytes=vmem_limit2,
            ),
        )(x2, attn)

    if HWp != HW:
        out = out[..., :HW]
    return out.reshape(N, C, H, W)


# --------------------------------------------------------------------------- #
# Pure-JAX reference (matches the PyTorch forward)
# --------------------------------------------------------------------------- #
def spatial_attention_reference(x, conv_w):
    avg = jnp.mean(x, axis=1, keepdims=True)
    mx = jnp.max(x, axis=1, keepdims=True)
    a = jnp.concatenate([avg, mx], axis=1)
    pad = conv_w.shape[-1] // 2
    conv = jax.lax.conv_general_dilated(
        a, conv_w, window_strides=(1, 1),
        padding=[(pad, pad), (pad, pad)],
        dimension_numbers=("NCHW", "OIHW", "NCHW"),
    )
    return x * jax.nn.sigmoid(conv)


if __name__ == "__main__":
    key = jax.random.PRNGKey(0)
    kx, kw = jax.random.split(key)

    N, C, H, W, K = 2, 4, 16, 16, 7
    x = jax.random.normal(kx, (N, C, H, W), dtype=jnp.float32)

    # Deterministic Conv2d(2, 1, K, bias=False) weight (uniform, Kaiming-style bound).
    fan_in = 2 * K * K
    bound = 1.0 / (fan_in ** 0.5)
    conv_w = jax.random.uniform(kw, (1, 2, K, K), jnp.float32, -bound, bound)

    out = jax.block_until_ready(spatial_attention(x, conv_w))

    ref = spatial_attention_reference(x, conv_w)
    assert out.shape == x.shape and out.dtype == x.dtype
    assert jnp.allclose(out, ref, atol=1e-4, rtol=1e-4), "mismatch vs reference"
    print("KERNEL_OK")
</pallas_src>

<mosaic_0001>
module attributes {stable_mosaic.version = 11 : i64} {
  func.func @_sa_fused_kernel(%arg0: i32, %arg1: memref<1x4x256xf32, #tpu.memory_space<vmem>>, %arg2: memref<98x256xf32, #tpu.memory_space<vmem>>, %arg3: memref<1x4x256xf32, #tpu.memory_space<vmem>>) attributes {dimension_semantics = [#tpu.dimension_semantics<parallel>], iteration_bounds = array<i64: 2>, scalar_prefetch = 0 : i64, scratch_operands = 0 : i64, tpu.core_type = #tpu.core_type<tc>, window_params = [{transform_indices = @transform_0, window_bounds = array<i64: 1, 4, 256>}, {pipeline_mode = #tpu.pipeline_mode<synchronous>, transform_indices = @transform_1, window_bounds = array<i64: 98, 256>}, {transform_indices = @transform_2, window_bounds = array<i64: 1, 4, 256>}]} {
    %c0 = arith.constant 0 : index
    %c0_0 = arith.constant 0 : index
    %c0_1 = arith.constant 0 : index
    %0 = vector.load %arg1[%c0, %c0_0, %c0_1] : memref<1x4x256xf32, #tpu.memory_space<vmem>>, vector<1x4x256xf32>
    %cst = arith.constant dense<0.000000e+00> : vector<1x256xf32>
    %1 = vector.multi_reduction <add>, %0, %cst [1] : vector<1x4x256xf32> to vector<1x256xf32>
    %cst_2 = arith.constant dense<0xFF800000> : vector<1x256xf32>
    %2 = vector.multi_reduction <maximumf>, %0, %cst_2 [1] : vector<1x4x256xf32> to vector<1x256xf32>
    %c51_i32 = arith.constant 51 : i32
    %3 = tpu.dynamic_rotate %1 by %c51_i32 dim 1 : vector<1x256xf32>, i32 -> vector<1x256xf32>
    %c51_i32_3 = arith.constant 51 : i32
    %4 = tpu.dynamic_rotate %2 by %c51_i32_3 dim 1 : vector<1x256xf32>, i32 -> vector<1x256xf32>
    %c0_4 = arith.constant 0 : index
    %c0_5 = arith.constant 0 : index
    %5 = vector.load %arg2[%c0_4, %c0_5] : memref<98x256xf32, #tpu.memory_space<vmem>>, vector<1x256xf32>
    %c49 = arith.constant 49 : index
    %c0_6 = arith.constant 0 : index
    %6 = vector.load %arg2[%c49, %c0_6] : memref<98x256xf32, #tpu.memory_space<vmem>>, vector<1x256xf32>
    %7 = arith.mulf %5, %3 : vector<1x256xf32>
    %8 = arith.mulf %6, %4 : vector<1x256xf32>
    %c50_i32 = arith.constant 50 : i32
    %9 = tpu.dynamic_rotate %1 by %c50_i32 dim 1 : vector<1x256xf32>, i32 -> vector<1x256xf32>
    %c50_i32_7 = arith.constant 50 : i32
    %10 = tpu.dynamic_rotate %2 by %c50_i32_7 dim 1 : vector<1x256xf32>, i32 -> vector<1x256xf32>
    %c1 = arith.constant 1 : index
    %c0_8 = arith.constant 0 : index
    %11 = vector.load %arg2[%c1, %c0_8] : memref<98x256xf32, #tpu.memory_space<vmem>>, vector<1x256xf32>
    %c50 = arith.constant 50 : index
    %c0_9 = arith.constant 0 : index
    %12 = vector.load %arg2[%c50, %c0_9] : memref<98x256xf32, #tpu.memory_space<vmem>>, vector<1x256xf32>
    %13 = arith.mulf %11, %9 : vector<1x256xf32>
    %14 = arith.mulf %12, %10 : vector<1x256xf32>
    %c49_i32 = arith.constant 49 : i32
    %15 = tpu.dynamic_rotate %1 by %c49_i32 dim 1 : vector<1x256xf32>, i32 -> vector<1x256xf32>
    %c49_i32_10 = arith.constant 49 : i32
    %16 = tpu.dynamic_rotate %2 by %c49_i32_10 dim 1 : vector<1x256xf32>, i32 -> vector<1x256xf32>
    %c2 = arith.constant 2 : index
    %c0_11 = arith.constant 0 : index
    %17 = vector.load %arg2[%c2, %c0_11] : memref<98x256xf32, #tpu.memory_space<vmem>>, vector<1x256xf32>
    %c51 = arith.constant 51 : index
    %c0_12 = arith.constant 0 : index
    %18 = vector.load %arg2[%c51, %c0_12] : memref<98x256xf32, #tpu.memory_space<vmem>>, vector<1x256xf32>
    %19 = arith.mulf %17, %15 : vector<1x256xf32>
    %20 = arith.mulf %18, %16 : vector<1x256xf32>
    %21 = arith.addf %7, %19 : vector<1x256xf32>
    %22 = arith.addf %8, %20 : vector<1x256xf32>
    %c48_i32 = arith.constant 48 : i32
    %23 = tpu.dynamic_rotate %1 by %c48_i32 dim 1 : vector<1x256xf32>, i32 -> vector<1x256xf32>
    %c48_i32_13 = arith.constant 48 : i32
    %24 = tpu.dynamic_rotate %2 by %c48_i32_13 dim 1 : vector<1x256xf32>, i32 -> vector<1x256xf32>
    %c3 = arith.constant 3 : index
    %c0_14 = arith.constant 0 : index
    %25 = vector.load %arg2[%c3, %c0_14] : memref<98x256xf32, #tpu.memory_space<vmem>>, vector<1x256xf32>
    %c52 = arith.constant 52 : index
    %c0_15 = arith.constant 0 : index
    %26 = vector.load %arg2[%c52, %c0_15] : memref<98x256xf32, #tpu.memory_space<vmem>>, vector<1x256xf32>
    %27 = arith.mulf %25, %23 : vector<1x256xf32>
    %28 = arith.mulf %26, %24 : vector<1x256xf32>
    %29 = arith.addf %13, %27 : vector<1x256xf32>
    %30 = arith.addf %14, %28 : vector<1x256xf32>
    %c47_i32 = arith.constant 47 : i32
    %31 = tpu.dynamic_rotate %1 by %c47_i32 dim 1 : vector<1x256xf32>, i32 -> vector<1x256xf32>
    %c47_i32_16 = arith.constant 47 : i32
    %32 = tpu.dynamic_rotate %2 by %c47_i32_16 dim 1 : vector<1x256xf32>, i32 -> vector<1x256xf32>
    %c4 = arith.constant 4 : index
    %c0_17 = arith.constant 0 : index
    %33 = vector.load %arg2[%c4, %c0_17] : memref<98x256xf32, #tpu.memory_space<vmem>>, vector<1x256xf32>
    %c53 = arith.constant 53 : index
    %c0_18 = arith.constant 0 : index
    %34 = vector.load %arg2[%c53, %c0_18] : memref<98x256xf32, #tpu.memory_space<vmem>>, vector<1x256xf32>
    %35 = arith.mulf %33, %31 : vector<1x256xf32>
    %36 = arith.mulf %34, %32 : vector<1x256xf32>
    %37 = arith.addf %21, %35 : vector<1x256xf32>
    %38 = arith.addf %22, %36 : vector<1x256xf32>
    %c46_i32 = arith.constant 46 : i32
    %39 = tpu.dynamic_rotate %1 by %c46_i32 dim 1 : vector<1x256xf32>, i32 -> vector<1x256xf32>
    %c46_i32_19 = arith.constant 46 : i32
    %40 = tpu.dynamic_rotate %2 by %c46_i32_19 dim 1 : vector<1x256xf32>, i32 -> vector<1x256xf32>
    %c5 = arith.constant 5 : index
    %c0_20 = arith.constant 0 : index
    %41 = vector.load %arg2[%c5, %c0_20] : memref<98x256xf32, #tpu.memory_space<vmem>>, vector<1x256xf32>
    %c54 = arith.constant 54 : index
    %c0_21 = arith.constant 0 : index
    %42 = vector.load %arg2[%c54, %c0_21] : memref<98x256xf32, #tpu.memory_space<vmem>>, vector<1x256xf32>
    %43 = arith.mulf %41, %39 : vector<1x256xf32>
    %44 = arith.mulf %42, %40 : vector<1x256xf32>
    %45 = arith.addf %29, %43 : vector<1x256xf32>
    %46 = arith.addf %30, %44 : vector<1x256xf32>
    %c45_i32 = arith.constant 45 : i32
    %47 = tpu.dynamic_rotate %1 by %c45_i32 dim 1 : vector<1x256xf32>, i32 -> vector<1x256xf32>
    %c45_i32_22 = arith.constant 45 : i32
    %48 = tpu.dynamic_rotate %2 by %c45_i32_22 dim 1 : vector<1x256xf32>, i32 -> vector<1x256xf32>
    %c6 = arith.constant 6 : index
    %c0_23 = arith.constant 0 : index
    %49 = vector.load %arg2[%c6, %c0_23] : memref<98x256xf32, #tpu.memory_space<vmem>>, vector<1x256xf32>
    %c55 = arith.constant 55 : index
    %c0_24 = arith.constant 0 : index
    %50 = vector.load %arg2[%c55, %c0_24] : memref<98x256xf32, #tpu.memory_space<vmem>>, vector<1x256xf32>
    %51 = arith.mulf %49, %47 : vector<1x256xf32>
    %52 = arith.mulf %50, %48 : vector<1x256xf32>
    %53 = arith.addf %37, %51 : vector<1x256xf32>
    %54 = arith.addf %38, %52 : vector<1x256xf32>
    %c35_i32 = arith.constant 35 : i32
    %55 = tpu.dynamic_rotate %1 by %c35_i32 dim 1 : vector<1x256xf32>, i32 -> vector<1x256xf32>
    %c35_i32_25 = arith.constant 35 : i32
    %56 = tpu.dynamic_rotate %2 by %c35_i32_25 dim 1 : vector<1x256xf32>, i32 -> vector<1x256xf32>
    %c7 = arith.constant 7 : index
    %c0_26 = arith.constant 0 : index
    %57 = vector.load %arg2[%c7, %c0_26] : memref<98x256xf32, #tpu.memory_space<vmem>>, vector<1x256xf32>
    %c56 = arith.constant 56 : index
    %c0_27 = arith.constant 0 : index
    %58 = vector.load %arg2[%c56, %c0_27] : memref<98x256xf32, #tpu.memory_space<vmem>>, vector<1x256xf32>
    %59 = arith.mulf %57, %55 : vector<1x256xf32>
    %60 = arith.mulf %58, %56 : vector<1x256xf32>
    %61 = arith.addf %45, %59 : vector<1x256xf32>
    %62 = arith.addf %46, %60 : vector<1x256xf32>
    %c34_i32 = arith.constant 34 : i32
    %63 = tpu.dynamic_rotate %1 by %c34_i32 dim 1 : vector<1x256xf32>, i32 -> vector<1x256xf32>
    %c34_i32_28 = arith.constant 34 : i32
    %64 = tpu.dynamic_rotate %2 by %c34_i32_28 dim 1 : vector<1x256xf32>, i32 -> vector<1x256xf32>
    %c8 = arith.constant 8 : index
    %c0_29 = arith.constant 0 : index
    %65 = vector.load %arg2[%c8, %c0_29] : memref<98x256xf32, #tpu.memory_space<vmem>>, vector<1x256xf32>
    %c57 = arith.constant 57 : index
    %c0_30 = arith.constant 0 : index
    %66 = vector.load %arg2[%c57, %c0_30] : memref<98x256xf32, #tpu.memory_space<vmem>>, vector<1x256xf32>
    %67 = arith.mulf %65, %63 : vector<1x256xf32>
    %68 = arith.mulf %66, %64 : vector<1x256xf32>
    %69 = arith.addf %53, %67 : vector<1x256xf32>
    %70 = arith.addf %54, %68 : vector<1x256xf32>
    %c33_i32 = arith.constant 33 : i32
    %71 = tpu.dynamic_rotate %1 by %c33_i32 dim 1 : vector<1x256xf32>, i32 -> vector<1x256xf32>
    %c33_i32_31 = arith.constant 33 : i32
    %72 = tpu.dynamic_rotate %2 by %c33_i32_31 dim 1 : vector<1x256xf32>, i32 -> vector<1x256xf32>
    %c9 = arith.constant 9 : index
    %c0_32 = arith.constant 0 : index
    %73 = vector.load %arg2[%c9, %c0_32] : memref<98x256xf32, #tpu.memory_space<vmem>>, vector<1x256xf32>
    %c58 = arith.constant 58 : index
    %c0_33 = arith.constant 0 : index
    %74 = vector.load %arg2[%c58, %c0_33] : memref<98x256xf32, #tpu.memory_space<vmem>>, vector<1x256xf32>
    %75 = arith.mulf %73, %71 : vector<1x256xf32>
    %76 = arith.mulf %74, %72 : vector<1x256xf32>
    %77 = arith.addf %61, %75 : vector<1x256xf32>
    %78 = arith.addf %62, %76 : vector<1x256xf32>
    %c32_i32 = arith.constant 32 : i32
    %79 = tpu.dynamic_rotate %1 by %c32_i32 dim 1 : vector<1x256xf32>, i32 -> vector<1x256xf32>
    %c32_i32_34 = arith.constant 32 : i32
    %80 = tpu.dynamic_rotate %2 by %c32_i32_34 dim 1 : vector<1x256xf32>, i32 -> vector<1x256xf32>
    %c10 = arith.constant 10 : index
    %c0_35 = arith.constant 0 : index
    %81 = vector.load %arg2[%c10, %c0_35] : memref<98x256xf32, #tpu.memory_space<vmem>>, vector<1x256xf32>
    %c59 = arith.constant 59 : index
    %c0_36 = arith.constant 0 : index
    %82 = vector.load %arg2[%c59, %c0_36] : memref<98x256xf32, #tpu.memory_space<vmem>>, vector<1x256xf32>
    %83 = arith.mulf %81, %79 : vector<1x256xf32>
    %84 = arith.mulf %82, %80 : vector<1x256xf32>
    %85 = arith.addf %69, %83 : vector<1x256xf32>
    %86 = arith.addf %70, %84 : vector<1x256xf32>
    %c31_i32 = arith.constant 31 : i32
    %87 = tpu.dynamic_rotate %1 by %c31_i32 dim 1 : vector<1x256xf32>, i32 -> vector<1x256xf32>
    %c31_i32_37 = arith.constant 31 : i32
    %88 = tpu.dynamic_rotate %2 by %c31_i32_37 dim 1 : vector<1x256xf32>, i32 -> vector<1x256xf32>
    %c11 = arith.constant 11 : index
    %c0_38 = arith.constant 0 : index
    %89 = vector.load %arg2[%c11, %c0_38] : memref<98x256xf32, #tpu.memory_space<vmem>>, vector<1x256xf32>
    %c60 = arith.constant 60 : index
    %c0_39 = arith.constant 0 : index
    %90 = vector.load %arg2[%c60, %c0_39] : memref<98x256xf32, #tpu.memory_space<vmem>>, vector<1x256xf32>
    %91 = arith.mulf %89, %87 : vector<1x256xf32>
    %92 = arith.mulf %90, %88 : vector<1x256xf32>
    %93 = arith.addf %77, %91 : vector<1x256xf32>
    %94 = arith.addf %78, %92 : vector<1x256xf32>
    %c30_i32 = arith.constant 30 : i32
    %95 = tpu.dynamic_rotate %1 by %c30_i32 dim 1 : vector<1x256xf32>, i32 -> vector<1x256xf32>
    %c30_i32_40 = arith.constant 30 : i32
    %96 = tpu.dynamic_rotate %2 by %c30_i32_40 dim 1 : vector<1x256xf32>, i32 -> vector<1x256xf32>
    %c12 = arith.constant 12 : index
    %c0_41 = arith.constant 0 : index
    %97 = vector.load %arg2[%c12, %c0_41] : memref<98x256xf32, #tpu.memory_space<vmem>>, vector<1x256xf32>
    %c61 = arith.constant 61 : index
    %c0_42 = arith.constant 0 : index
    %98 = vector.load %arg2[%c61, %c0_42] : memref<98x256xf32, #tpu.memory_space<vmem>>, vector<1x256xf32>
    %99 = arith.mulf %97, %95 : vector<1x256xf32>
    %100 = arith.mulf %98, %96 : vector<1x256xf32>
    %101 = arith.addf %85, %99 : vector<1x256xf32>
    %102 = arith.addf %86, %100 : vector<1x256xf32>
    %c29_i32 = arith.constant 29 : i32
    %103 = tpu.dynamic_rotate %1 by %c29_i32 dim 1 : vector<1x256xf32>, i32 -> vector<1x256xf32>
    %c29_i32_43 = arith.constant 29 : i32
    %104 = tpu.dynamic_rotate %2 by %c29_i32_43 dim 1 : vector<1x256xf32>, i32 -> vector<1x256xf32>
    %c13 = arith.constant 13 : index
    %c0_44 = arith.constant 0 : index
    %105 = vector.load %arg2[%c13, %c0_44] : memref<98x256xf32, #tpu.memory_space<vmem>>, vector<1x256xf32>
    %c62 = arith.constant 62 : index
    %c0_45 = arith.constant 0 : index
    %106 = vector.load %arg2[%c62, %c0_45] : memref<98x256xf32, #tpu.memory_space<vmem>>, vector<1x256xf32>
    %107 = arith.mulf %105, %103 : vector<1x256xf32>
    %108 = arith.mulf %106, %104 : vector<1x256xf32>
    %109 = arith.addf %93, %107 : vector<1x256xf32>
    %110 = arith.addf %94, %108 : vector<1x256xf32>
    %c19_i32 = arith.constant 19 : i32
    %111 = tpu.dynamic_rotate %1 by %c19_i32 dim 1 : vector<1x256xf32>, i32 -> vector<1x256xf32>
    %c19_i32_46 = arith.constant 19 : i32
    %112 = tpu.dynamic_rotate %2 by %c19_i32_46 dim 1 : vector<1x256xf32>, i32 -> vector<1x256xf32>
    %c14 = arith.constant 14 : index
    %c0_47 = arith.constant 0 : index
    %113 = vector.load %arg2[%c14, %c0_47] : memref<98x256xf32, #tpu.memory_space<vmem>>, vector<1x256xf32>
    %c63 = arith.constant 63 : index
    %c0_48 = arith.constant 0 : index
    %114 = vector.load %arg2[%c63, %c0_48] : memref<98x256xf32, #tpu.memory_space<vmem>>, vector<1x256xf32>
    %115 = arith.mulf %113, %111 : vector<1x256xf32>
    %116 = arith.mulf %114, %112 : vector<1x256xf32>
    %117 = arith.addf %101, %115 : vector<1x256xf32>
    %118 = arith.addf %102, %116 : vector<1x256xf32>
    %c18_i32 = arith.constant 18 : i32
    %119 = tpu.dynamic_rotate %1 by %c18_i32 dim 1 : vector<1x256xf32>, i32 -> vector<1x256xf32>
    %c18_i32_49 = arith.constant 18 : i32
    %120 = tpu.dynamic_rotate %2 by %c18_i32_49 dim 1 : vector<1x256xf32>, i32 -> vector<1x256xf32>
    %c15 = arith.constant 15 : index
    %c0_50 = arith.constant 0 : index
    %121 = vector.load %arg2[%c15, %c0_50] : memref<98x256xf32, #tpu.memory_space<vmem>>, vector<1x256xf32>
    %c64 = arith.constant 64 : index
    %c0_51 = arith.constant 0 : index
    %122 = vector.load %arg2[%c64, %c0_51] : memref<98x256xf32, #tpu.memory_space<vmem>>, vector<1x256xf32>
    %123 = arith.mulf %121, %119 : vector<1x256xf32>
    %124 = arith.mulf %122, %120 : vector<1x256xf32>
    %125 = arith.addf %109, %123 : vector<1x256xf32>
    %126 = arith.addf %110, %124 : vector<1x256xf32>
    %c17_i32 = arith.constant 17 : i32
    %127 = tpu.dynamic_rotate %1 by %c17_i32 dim 1 : vector<1x256xf32>, i32 -> vector<1x256xf32>
    %c17_i32_52 = arith.constant 17 : i32
    %128 = tpu.dynamic_rotate %2 by %c17_i32_52 dim 1 : vector<1x256xf32>, i32 -> vector<1x256xf32>
    %c16 = arith.constant 16 : index
    %c0_53 = arith.constant 0 : index
    %129 = vector.load %arg2[%c16, %c0_53] : memref<98x256xf32, #tpu.memory_space<vmem>>, vector<1x256xf32>
    %c65 = arith.constant 65 : index
    %c0_54 = arith.constant 0 : index
    %130 = vector.load %arg2[%c65, %c0_54] : memref<98x256xf32, #tpu.memory_space<vmem>>, vector<1x256xf32>
    %131 = arith.mulf %129, %127 : vector<1x256xf32>
    %132 = arith.mulf %130, %128 : vector<1x256xf32>
    %133 = arith.addf %117, %131 : vector<1x256xf32>
    %134 = arith.addf %118, %132 : vector<1x256xf32>
    %c16_i32 = arith.constant 16 : i32
    %135 = tpu.dynamic_rotate %1 by %c16_i32 dim 1 : vector<1x256xf32>, i32 -> vector<1x256xf32>
    %c16_i32_55 = arith.constant 16 : i32
    %136 = tpu.dynamic_rotate %2 by %c16_i32_55 dim 1 : vector<1x256xf32>, i32 -> vector<1x256xf32>
    %c17 = arith.constant 17 : index
    %c0_56 = arith.constant 0 : index
    %137 = vector.load %arg2[%c17, %c0_56] : memref<98x256xf32, #tpu.memory_space<vmem>>, vector<1x256xf32>
    %c66 = arith.constant 66 : index
    %c0_57 = arith.constant 0 : index
    %138 = vector.load %arg2[%c66, %c0_57] : memref<98x256xf32, #tpu.memory_space<vmem>>, vector<1x256xf32>
    %139 = arith.mulf %137, %135 : vector<1x256xf32>
    %140 = arith.mulf %138, %136 : vector<1x256xf32>
    %141 = arith.addf %125, %139 : vector<1x256xf32>
    %142 = arith.addf %126, %140 : vector<1x256xf32>
    %c15_i32 = arith.constant 15 : i32
    %143 = tpu.dynamic_rotate %1 by %c15_i32 dim 1 : vector<1x256xf32>, i32 -> vector<1x256xf32>
    %c15_i32_58 = arith.constant 15 : i32
    %144 = tpu.dynamic_rotate %2 by %c15_i32_58 dim 1 : vector<1x256xf32>, i32 -> vector<1x256xf32>
    %c18 = arith.constant 18 : index
    %c0_59 = arith.constant 0 : index
    %145 = vector.load %arg2[%c18, %c0_59] : memref<98x256xf32, #tpu.memory_space<vmem>>, vector<1x256xf32>
    %c67 = arith.constant 67 : index
    %c0_60 = arith.constant 0 : index
    %146 = vector.load %arg2[%c67, %c0_60] : memref<98x256xf32, #tpu.memory_space<vmem>>, vector<1x256xf32>
    %147 = arith.mulf %145, %143 : vector<1x256xf32>
    %148 = arith.mulf %146, %144 : vector<1x256xf32>
    %149 = arith.addf %133, %147 : vector<1x256xf32>
    %150 = arith.addf %134, %148 : vector<1x256xf32>
    %c14_i32 = arith.constant 14 : i32
    %151 = tpu.dynamic_rotate %1 by %c14_i32 dim 1 : vector<1x256xf32>, i32 -> vector<1x256xf32>
    %c14_i32_61 = arith.constant 14 : i32
    %152 = tpu.dynamic_rotate %2 by %c14_i32_61 dim 1 : vector<1x256xf32>, i32 -> vector<1x256xf32>
    %c19 = arith.constant 19 : index
    %c0_62 = arith.constant 0 : index
    %153 = vector.load %arg2[%c19, %c0_62] : memref<98x256xf32, #tpu.memory_space<vmem>>, vector<1x256xf32>
    %c68 = arith.constant 68 : index
    %c0_63 = arith.constant 0 : index
    %154 = vector.load %arg2[%c68, %c0_63] : memref<98x256xf32, #tpu.memory_space<vmem>>, vector<1x256xf32>
    %155 = arith.mulf %153, %151 : vector<1x256xf32>
    %156 = arith.mulf %154, %152 : vector<1x256xf32>
    %157 = arith.addf %141, %155 : vector<1x256xf32>
    %158 = arith.addf %142, %156 : vector<1x256xf32>
    %c13_i32 = arith.constant 13 : i32
    %159 = tpu.dynamic_rotate %1 by %c13_i32 dim 1 : vector<1x256xf32>, i32 -> vector<1x256xf32>
    %c13_i32_64 = arith.constant 13 : i32
    %160 = tpu.dynamic_rotate %2 by %c13_i32_64 dim 1 : vector<1x256xf32>, i32 -> vector<1x256xf32>
    %c20 = arith.constant 20 : index
    %c0_65 = arith.constant 0 : index
    %161 = vector.load %arg2[%c20, %c0_65] : memref<98x256xf32, #tpu.memory_space<vmem>>, vector<1x256xf32>
    %c69 = arith.constant 69 : index
    %c0_66 = arith.constant 0 : index
    %162 = vector.load %arg2[%c69, %c0_66] : memref<98x256xf32, #tpu.memory_space<vmem>>, vector<1x256xf32>
    %163 = arith.mulf %161, %159 : vector<1x256xf32>
    %164 = arith.mulf %162, %160 : vector<1x256xf32>
    %165 = arith.addf %149, %163 : vector<1x256xf32>
    %166 = arith.addf %150, %164 : vector<1x256xf32>
    %c3_i32 = arith.constant 3 : i32
    %167 = tpu.dynamic_rotate %1 by %c3_i32 dim 1 : vector<1x256xf32>, i32 -> vector<1x256xf32>
    %c3_i32_67 = arith.constant 3 : i32
    %168 = tpu.dynamic_rotate %2 by %c3_i32_67 dim 1 : vector<1x256xf32>, i32 -> vector<1x256xf32>
    %c21 = arith.constant 21 : index
    %c0_68 = arith.constant 0 : index
    %169 = vector.load %arg2[%c21, %c0_68] : memref<98x256xf32, #tpu.memory_space<vmem>>, vector<1x256xf32>
    %c70 = arith.constant 70 : index
    %c0_69 = arith.constant 0 : index
    %170 = vector.load %arg2[%c70, %c0_69] : memref<98x256xf32, #tpu.memory_space<vmem>>, vector<1x256xf32>
    %171 = arith.mulf %169, %167 : vector<1x256xf32>
    %172 = arith.mulf %170, %168 : vector<1x256xf32>
    %173 = arith.addf %157, %171 : vector<1x256xf32>
    %174 = arith.addf %158, %172 : vector<1x256xf32>
    %c2_i32 = arith.constant 2 : i32
    %175 = tpu.dynamic_rotate %1 by %c2_i32 dim 1 : vector<1x256xf32>, i32 -> vector<1x256xf32>
    %c2_i32_70 = arith.constant 2 : i32
    %176 = tpu.dynamic_rotate %2 by %c2_i32_70 dim 1 : vector<1x256xf32>, i32 -> vector<1x256xf32>
    %c22 = arith.constant 22 : index
    %c0_71 = arith.constant 0 : index
    %177 = vector.load %arg2[%c22, %c0_71] : memref<98x256xf32, #tpu.memory_space<vmem>>, vector<1x256xf32>
    %c71 = arith.constant 71 : index
    %c0_72 = arith.constant 0 : index
    %178 = vector.load %arg2[%c71, %c0_72] : memref<98x256xf32, #tpu.memory_space<vmem>>, vector<1x256xf32>
    %179 = arith.mulf %177, %175 : vector<1x256xf32>
    %180 = arith.mulf %178, %176 : vector<1x256xf32>
    %181 = arith.addf %165, %179 : vector<1x256xf32>
    %182 = arith.addf %166, %180 : vector<1x256xf32>
    %c1_i32 = arith.constant 1 : i32
    %183 = tpu.dynamic_rotate %1 by %c1_i32 dim 1 : vector<1x256xf32>, i32 -> vector<1x256xf32>
    %c1_i32_73 = arith.constant 1 : i32
    %184 = tpu.dynamic_rotate %2 by %c1_i32_73 dim 1 : vector<1x256xf32>, i32 -> vector<1x256xf32>
    %c23 = arith.constant 23 : index
    %c0_74 = arith.constant 0 : index
    %185 = vector.load %arg2[%c23, %c0_74] : memref<98x256xf32, #tpu.memory_space<vmem>>, vector<1x256xf32>
    %c72 = arith.constant 72 : index
    %c0_75 = arith.constant 0 : index
    %186 = vector.load %arg2[%c72, %c0_75] : memref<98x256xf32, #tpu.memory_space<vmem>>, vector<1x256xf32>
    %187 = arith.mulf %185, %183 : vector<1x256xf32>
    %188 = arith.mulf %186, %184 : vector<1x256xf32>
    %189 = arith.addf %173, %187 : vector<1x256xf32>
    %190 = arith.addf %174, %188 : vector<1x256xf32>
    %c24 = arith.constant 24 : index
    %c0_76 = arith.constant 0 : index
    %191 = vector.load %arg2[%c24, %c0_76] : memref<98x256xf32, #tpu.memory_space<vmem>>, vector<1x256xf32>
    %c73 = arith.constant 73 : index
    %c0_77 = arith.constant 0 : index
    %192 = vector.load %arg2[%c73, %c0_77] : memref<98x256xf32, #tpu.memory_space<vmem>>, vector<1x256xf32>
    %193 = arith.mulf %191, %1 : vector<1x256xf32>
    %194 = arith.mulf %192, %2 : vector<1x256xf32>
    %195 = arith.addf %181, %193 : vector<1x256xf32>
    %196 = arith.addf %182, %194 : vector<1x256xf32>
    %c255_i32 = arith.constant 255 : i32
    %197 = tpu.dynamic_rotate %1 by %c255_i32 dim 1 : vector<1x256xf32>, i32 -> vector<1x256xf32>
    %c255_i32_78 = arith.constant 255 : i32
    %198 = tpu.dynamic_rotate %2 by %c255_i32_78 dim 1 : vector<1x256xf32>, i32 -> vector<1x256xf32>
    %c25 = arith.constant 25 : index
    %c0_79 = arith.constant 0 : index
    %199 = vector.load %arg2[%c25, %c0_79] : memref<98x256xf32, #tpu.memory_space<vmem>>, vector<1x256xf32>
    %c74 = arith.constant 74 : index
    %c0_80 = arith.constant 0 : index
    %200 = vector.load %arg2[%c74, %c0_80] : memref<98x256xf32, #tpu.memory_space<vmem>>, vector<1x256xf32>
    %201 = arith.mulf %199, %197 : vector<1x256xf32>
    %202 = arith.mulf %200, %198 : vector<1x256xf32>
    %203 = arith.addf %189, %201 : vector<1x256xf32>
    %204 = arith.addf %190, %202 : vector<1x256xf32>
    %c254_i32 = arith.constant 254 : i32
    %205 = tpu.dynamic_rotate %1 by %c254_i32 dim 1 : vector<1x256xf32>, i32 -> vector<1x256xf32>
    %c254_i32_81 = arith.constant 254 : i32
    %206 = tpu.dynamic_rotate %2 by %c254_i32_81 dim 1 : vector<1x256xf32>, i32 -> vector<1x256xf32>
    %c26 = arith.constant 26 : index
    %c0_82 = arith.constant 0 : index
    %207 = vector.load %arg2[%c26, %c0_82] : memref<98x256xf32, #tpu.memory_space<vmem>>, vector<1x256xf32>
    %c75 = arith.constant 75 : index
    %c0_83 = arith.constant 0 : index
    %208 = vector.load %arg2[%c75, %c0_83] : memref<98x256xf32, #tpu.memory_space<vmem>>, vector<1x256xf32>
    %209 = arith.mulf %207, %205 : vector<1x256xf32>
    %210 = arith.mulf %208, %206 : vector<1x256xf32>
    %211 = arith.addf %195, %209 : vector<1x256xf32>
    %212 = arith.addf %196, %210 : vector<1x256xf32>
    %c253_i32 = arith.constant 253 : i32
    %213 = tpu.dynamic_rotate %1 by %c253_i32 dim 1 : vector<1x256xf32>, i32 -> vector<1x256xf32>
    %c253_i32_84 = arith.constant 253 : i32
    %214 = tpu.dynamic_rotate %2 by %c253_i32_84 dim 1 : vector<1x256xf32>, i32 -> vector<1x256xf32>
    %c27 = arith.constant 27 : index
    %c0_85 = arith.constant 0 : index
    %215 = vector.load %arg2[%c27, %c0_85] : memref<98x256xf32, #tpu.memory_space<vmem>>, vector<1x256xf32>
    %c76 = arith.constant 76 : index
    %c0_86 = arith.constant 0 : index
    %216 = vector.load %arg2[%c76, %c0_86] : memref<98x256xf32, #tpu.memory_space<vmem>>, vector<1x256xf32>
    %217 = arith.mulf %215, %213 : vector<1x256xf32>
    %218 = arith.mulf %216, %214 : vector<1x256xf32>
    %219 = arith.addf %203, %217 : vector<1x256xf32>
    %220 = arith.addf %204, %218 : vector<1x256xf32>
    %c243_i32 = arith.constant 243 : i32
    %221 = tpu.dynamic_rotate %1 by %c243_i32 dim 1 : vector<1x256xf32>, i32 -> vector<1x256xf32>
    %c243_i32_87 = arith.constant 243 : i32
    %222 = tpu.dynamic_rotate %2 by %c243_i32_87 dim 1 : vector<1x256xf32>, i32 -> vector<1x256xf32>
    %c28 = arith.constant 28 : index
    %c0_88 = arith.constant 0 : index
    %223 = vector.load %arg2[%c28, %c0_88] : memref<98x256xf32, #tpu.memory_space<vmem>>, vector<1x256xf32>
    %c77 = arith.constant 77 : index
    %c0_89 = arith.constant 0 : index
    %224 = vector.load %arg2[%c77, %c0_89] : memref<98x256xf32, #tpu.memory_space<vmem>>, vector<1x256xf32>
    %225 = arith.mulf %223, %221 : vector<1x256xf32>
    %226 = arith.mulf %224, %222 : vector<1x256xf32>
    %227 = arith.addf %211, %225 : vector<1x256xf32>
    %228 = arith.addf %212, %226 : vector<1x256xf32>
    %c242_i32 = arith.constant 242 : i32
    %229 = tpu.dynamic_rotate %1 by %c242_i32 dim 1 : vector<1x256xf32>, i32 -> vector<1x256xf32>
    %c242_i32_90 = arith.constant 242 : i32
    %230 = tpu.dynamic_rotate %2 by %c242_i32_90 dim 1 : vector<1x256xf32>, i32 -> vector<1x256xf32>
    %c29 = arith.constant 29 : index
    %c0_91 = arith.constant 0 : index
    %231 = vector.load %arg2[%c29, %c0_91] : memref<98x256xf32, #tpu.memory_space<vmem>>, vector<1x256xf32>
    %c78 = arith.constant 78 : index
    %c0_92 = arith.constant 0 : index
    %232 = vector.load %arg2[%c78, %c0_92] : memref<98x256xf32, #tpu.memory_space<vmem>>, vector<1x256xf32>
    %233 = arith.mulf %231, %229 : vector<1x256xf32>
    %234 = arith.mulf %232, %230 : vector<1x256xf32>
    %235 = arith.addf %219, %233 : vector<1x256xf32>
    %236 = arith.addf %220, %234 : vector<1x256xf32>
    %c241_i32 = arith.constant 241 : i32
    %237 = tpu.dynamic_rotate %1 by %c241_i32 dim 1 : vector<1x256xf32>, i32 -> vector<1x256xf32>
    %c241_i32_93 = arith.constant 241 : i32
    %238 = tpu.dynamic_rotate %2 by %c241_i32_93 dim 1 : vector<1x256xf32>, i32 -> vector<1x256xf32>
    %c30 = arith.constant 30 : index
    %c0_94 = arith.constant 0 : index
    %239 = vector.load %arg2[%c30, %c0_94] : memref<98x256xf32, #tpu.memory_space<vmem>>, vector<1x256xf32>
    %c79 = arith.constant 79 : index
    %c0_95 = arith.constant 0 : index
    %240 = vector.load %arg2[%c79, %c0_95] : memref<98x256xf32, #tpu.memory_space<vmem>>, vector<1x256xf32>
    %241 = arith.mulf %239, %237 : vector<1x256xf32>
    %242 = arith.mulf %240, %238 : vector<1x256xf32>
    %243 = arith.addf %227, %241 : vector<1x256xf32>
    %244 = arith.addf %228, %242 : vector<1x256xf32>
    %c240_i32 = arith.constant 240 : i32
    %245 = tpu.dynamic_rotate %1 by %c240_i32 dim 1 : vector<1x256xf32>, i32 -> vector<1x256xf32>
    %c240_i32_96 = arith.constant 240 : i32
    %246 = tpu.dynamic_rotate %2 by %c240_i32_96 dim 1 : vector<1x256xf32>, i32 -> vector<1x256xf32>
    %c31 = arith.constant 31 : index
    %c0_97 = arith.constant 0 : index
    %247 = vector.load %arg2[%c31, %c0_97] : memref<98x256xf32, #tpu.memory_space<vmem>>, vector<1x256xf32>
    %c80 = arith.constant 80 : index
    %c0_98 = arith.constant 0 : index
    %248 = vector.load %arg2[%c80, %c0_98] : memref<98x256xf32, #tpu.memory_space<vmem>>, vector<1x256xf32>
    %249 = arith.mulf %247, %245 : vector<1x256xf32>
    %250 = arith.mulf %248, %246 : vector<1x256xf32>
    %251 = arith.addf %235, %249 : vector<1x256xf32>
    %252 = arith.addf %236, %250 : vector<1x256xf32>
    %c239_i32 = arith.constant 239 : i32
    %253 = tpu.dynamic_rotate %1 by %c239_i32 dim 1 : vector<1x256xf32>, i32 -> vector<1x256xf32>
    %c239_i32_99 = arith.constant 239 : i32
    %254 = tpu.dynamic_rotate %2 by %c239_i32_99 dim 1 : vector<1x256xf32>, i32 -> vector<1x256xf32>
    %c32 = arith.constant 32 : index
    %c0_100 = arith.constant 0 : index
    %255 = vector.load %arg2[%c32, %c0_100] : memref<98x256xf32, #tpu.memory_space<vmem>>, vector<1x256xf32>
    %c81 = arith.constant 81 : index
    %c0_101 = arith.constant 0 : index
    %256 = vector.load %arg2[%c81, %c0_101] : memref<98x256xf32, #tpu.memory_space<vmem>>, vector<1x256xf32>
    %257 = arith.mulf %255, %253 : vector<1x256xf32>
    %258 = arith.mulf %256, %254 : vector<1x256xf32>
    %259 = arith.addf %243, %257 : vector<1x256xf32>
    %260 = arith.addf %244, %258 : vector<1x256xf32>
    %c238_i32 = arith.constant 238 : i32
    %261 = tpu.dynamic_rotate %1 by %c238_i32 dim 1 : vector<1x256xf32>, i32 -> vector<1x256xf32>
    %c238_i32_102 = arith.constant 238 : i32
    %262 = tpu.dynamic_rotate %2 by %c238_i32_102 dim 1 : vector<1x256xf32>, i32 -> vector<1x256xf32>
    %c33 = arith.constant 33 : index
    %c0_103 = arith.constant 0 : index
    %263 = vector.load %arg2[%c33, %c0_103] : memref<98x256xf32, #tpu.memory_space<vmem>>, vector<1x256xf32>
    %c82 = arith.constant 82 : index
    %c0_104 = arith.constant 0 : index
    %264 = vector.load %arg2[%c82, %c0_104] : memref<98x256xf32, #tpu.memory_space<vmem>>, vector<1x256xf32>
    %265 = arith.mulf %263, %261 : vector<1x256xf32>
    %266 = arith.mulf %264, %262 : vector<1x256xf32>
    %267 = arith.addf %251, %265 : vector<1x256xf32>
    %268 = arith.addf %252, %266 : vector<1x256xf32>
    %c237_i32 = arith.constant 237 : i32
    %269 = tpu.dynamic_rotate %1 by %c237_i32 dim 1 : vector<1x256xf32>, i32 -> vector<1x256xf32>
    %c237_i32_105 = arith.constant 237 : i32
    %270 = tpu.dynamic_rotate %2 by %c237_i32_105 dim 1 : vector<1x256xf32>, i32 -> vector<1x256xf32>
    %c34 = arith.constant 34 : index
    %c0_106 = arith.constant 0 : index
    %271 = vector.load %arg2[%c34, %c0_106] : memref<98x256xf32, #tpu.memory_space<vmem>>, vector<1x256xf32>
    %c83 = arith.constant 83 : index
    %c0_107 = arith.constant 0 : index
    %272 = vector.load %arg2[%c83, %c0_107] : memref<98x256xf32, #tpu.memory_space<vmem>>, vector<1x256xf32>
    %273 = arith.mulf %271, %269 : vector<1x256xf32>
    %274 = arith.mulf %272, %270 : vector<1x256xf32>
    %275 = arith.addf %259, %273 : vector<1x256xf32>
    %276 = arith.addf %260, %274 : vector<1x256xf32>
    %c227_i32 = arith.constant 227 : i32
    %277 = tpu.dynamic_rotate %1 by %c227_i32 dim 1 : vector<1x256xf32>, i32 -> vector<1x256xf32>
    %c227_i32_108 = arith.constant 227 : i32
    %278 = tpu.dynamic_rotate %2 by %c227_i32_108 dim 1 : vector<1x256xf32>, i32 -> vector<1x256xf32>
    %c35 = arith.constant 35 : index
    %c0_109 = arith.constant 0 : index
    %279 = vector.load %arg2[%c35, %c0_109] : memref<98x256xf32, #tpu.memory_space<vmem>>, vector<1x256xf32>
    %c84 = arith.constant 84 : index
    %c0_110 = arith.constant 0 : index
    %280 = vector.load %arg2[%c84, %c0_110] : memref<98x256xf32, #tpu.memory_space<vmem>>, vector<1x256xf32>
    %281 = arith.mulf %279, %277 : vector<1x256xf32>
    %282 = arith.mulf %280, %278 : vector<1x256xf32>
    %283 = arith.addf %267, %281 : vector<1x256xf32>
    %284 = arith.addf %268, %282 : vector<1x256xf32>
    %c226_i32 = arith.constant 226 : i32
    %285 = tpu.dynamic_rotate %1 by %c226_i32 dim 1 : vector<1x256xf32>, i32 -> vector<1x256xf32>
    %c226_i32_111 = arith.constant 226 : i32
    %286 = tpu.dynamic_rotate %2 by %c226_i32_111 dim 1 : vector<1x256xf32>, i32 -> vector<1x256xf32>
    %c36 = arith.constant 36 : index
    %c0_112 = arith.constant 0 : index
    %287 = vector.load %arg2[%c36, %c0_112] : memref<98x256xf32, #tpu.memory_space<vmem>>, vector<1x256xf32>
    %c85 = arith.constant 85 : index
    %c0_113 = arith.constant 0 : index
    %288 = vector.load %arg2[%c85, %c0_113] : memref<98x256xf32, #tpu.memory_space<vmem>>, vector<1x256xf32>
    %289 = arith.mulf %287, %285 : vector<1x256xf32>
    %290 = arith.mulf %288, %286 : vector<1x256xf32>
    %291 = arith.addf %275, %289 : vector<1x256xf32>
    %292 = arith.addf %276, %290 : vector<1x256xf32>
    %c225_i32 = arith.constant 225 : i32
    %293 = tpu.dynamic_rotate %1 by %c225_i32 dim 1 : vector<1x256xf32>, i32 -> vector<1x256xf32>
    %c225_i32_114 = arith.constant 225 : i32
    %294 = tpu.dynamic_rotate %2 by %c225_i32_114 dim 1 : vector<1x256xf32>, i32 -> vector<1x256xf32>
    %c37 = arith.constant 37 : index
    %c0_115 = arith.constant 0 : index
    %295 = vector.load %arg2[%c37, %c0_115] : memref<98x256xf32, #tpu.memory_space<vmem>>, vector<1x256xf32>
    %c86 = arith.constant 86 : index
    %c0_116 = arith.constant 0 : index
    %296 = vector.load %arg2[%c86, %c0_116] : memref<98x256xf32, #tpu.memory_space<vmem>>, vector<1x256xf32>
    %297 = arith.mulf %295, %293 : vector<1x256xf32>
    %298 = arith.mulf %296, %294 : vector<1x256xf32>
    %299 = arith.addf %283, %297 : vector<1x256xf32>
    %300 = arith.addf %284, %298 : vector<1x256xf32>
    %c224_i32 = arith.constant 224 : i32
    %301 = tpu.dynamic_rotate %1 by %c224_i32 dim 1 : vector<1x256xf32>, i32 -> vector<1x256xf32>
    %c224_i32_117 = arith.constant 224 : i32
    %302 = tpu.dynamic_rotate %2 by %c224_i32_117 dim 1 : vector<1x256xf32>, i32 -> vector<1x256xf32>
    %c38 = arith.constant 38 : index
    %c0_118 = arith.constant 0 : index
    %303 = vector.load %arg2[%c38, %c0_118] : memref<98x256xf32, #tpu.memory_space<vmem>>, vector<1x256xf32>
    %c87 = arith.constant 87 : index
    %c0_119 = arith.constant 0 : index
    %304 = vector.load %arg2[%c87, %c0_119] : memref<98x256xf32, #tpu.memory_space<vmem>>, vector<1x256xf32>
    %305 = arith.mulf %303, %301 : vector<1x256xf32>
    %306 = arith.mulf %304, %302 : vector<1x256xf32>
    %307 = arith.addf %291, %305 : vector<1x256xf32>
    %308 = arith.addf %292, %306 : vector<1x256xf32>
    %c223_i32 = arith.constant 223 : i32
    %309 = tpu.dynamic_rotate %1 by %c223_i32 dim 1 : vector<1x256xf32>, i32 -> vector<1x256xf32>
    %c223_i32_120 = arith.constant 223 : i32
    %310 = tpu.dynamic_rotate %2 by %c223_i32_120 dim 1 : vector<1x256xf32>, i32 -> vector<1x256xf32>
    %c39 = arith.constant 39 : index
    %c0_121 = arith.constant 0 : index
    %311 = vector.load %arg2[%c39, %c0_121] : memref<98x256xf32, #tpu.memory_space<vmem>>, vector<1x256xf32>
    %c88 = arith.constant 88 : index
    %c0_122 = arith.constant 0 : index
    %312 = vector.load %arg2[%c88, %c0_122] : memref<98x256xf32, #tpu.memory_space<vmem>>, vector<1x256xf32>
    %313 = arith.mulf %311, %309 : vector<1x256xf32>
    %314 = arith.mulf %312, %310 : vector<1x256xf32>
    %315 = arith.addf %299, %313 : vector<1x256xf32>
    %316 = arith.addf %300, %314 : vector<1x256xf32>
    %c222_i32 = arith.constant 222 : i32
    %317 = tpu.dynamic_rotate %1 by %c222_i32 dim 1 : vector<1x256xf32>, i32 -> vector<1x256xf32>
    %c222_i32_123 = arith.constant 222 : i32
    %318 = tpu.dynamic_rotate %2 by %c222_i32_123 dim 1 : vector<1x256xf32>, i32 -> vector<1x256xf32>
    %c40 = arith.constant 40 : index
    %c0_124 = arith.constant 0 : index
    %319 = vector.load %arg2[%c40, %c0_124] : memref<98x256xf32, #tpu.memory_space<vmem>>, vector<1x256xf32>
    %c89 = arith.constant 89 : index
    %c0_125 = arith.constant 0 : index
    %320 = vector.load %arg2[%c89, %c0_125] : memref<98x256xf32, #tpu.memory_space<vmem>>, vector<1x256xf32>
    %321 = arith.mulf %319, %317 : vector<1x256xf32>
    %322 = arith.mulf %320, %318 : vector<1x256xf32>
    %323 = arith.addf %307, %321 : vector<1x256xf32>
    %324 = arith.addf %308, %322 : vector<1x256xf32>
    %c221_i32 = arith.constant 221 : i32
    %325 = tpu.dynamic_rotate %1 by %c221_i32 dim 1 : vector<1x256xf32>, i32 -> vector<1x256xf32>
    %c221_i32_126 = arith.constant 221 : i32
    %326 = tpu.dynamic_rotate %2 by %c221_i32_126 dim 1 : vector<1x256xf32>, i32 -> vector<1x256xf32>
    %c41 = arith.constant 41 : index
    %c0_127 = arith.constant 0 : index
    %327 = vector.load %arg2[%c41, %c0_127] : memref<98x256xf32, #tpu.memory_space<vmem>>, vector<1x256xf32>
    %c90 = arith.constant 90 : index
    %c0_128 = arith.constant 0 : index
    %328 = vector.load %arg2[%c90, %c0_128] : memref<98x256xf32, #tpu.memory_space<vmem>>, vector<1x256xf32>
    %329 = arith.mulf %327, %325 : vector<1x256xf32>
    %330 = arith.mulf %328, %326 : vector<1x256xf32>
    %331 = arith.addf %315, %329 : vector<1x256xf32>
    %332 = arith.addf %316, %330 : vector<1x256xf32>
    %c211_i32 = arith.constant 211 : i32
    %333 = tpu.dynamic_rotate %1 by %c211_i32 dim 1 : vector<1x256xf32>, i32 -> vector<1x256xf32>
    %c211_i32_129 = arith.constant 211 : i32
    %334 = tpu.dynamic_rotate %2 by %c211_i32_129 dim 1 : vector<1x256xf32>, i32 -> vector<1x256xf32>
    %c42 = arith.constant 42 : index
    %c0_130 = arith.constant 0 : index
    %335 = vector.load %arg2[%c42, %c0_130] : memref<98x256xf32, #tpu.memory_space<vmem>>, vector<1x256xf32>
    %c91 = arith.constant 91 : index
    %c0_131 = arith.constant 0 : index
    %336 = vector.load %arg2[%c91, %c0_131] : memref<98x256xf32, #tpu.memory_space<vmem>>, vector<1x256xf32>
    %337 = arith.mulf %335, %333 : vector<1x256xf32>
    %338 = arith.mulf %336, %334 : vector<1x256xf32>
    %339 = arith.addf %323, %337 : vector<1x256xf32>
    %340 = arith.addf %324, %338 : vector<1x256xf32>
    %c210_i32 = arith.constant 210 : i32
    %341 = tpu.dynamic_rotate %1 by %c210_i32 dim 1 : vector<1x256xf32>, i32 -> vector<1x256xf32>
    %c210_i32_132 = arith.constant 210 : i32
    %342 = tpu.dynamic_rotate %2 by %c210_i32_132 dim 1 : vector<1x256xf32>, i32 -> vector<1x256xf32>
    %c43 = arith.constant 43 : index
    %c0_133 = arith.constant 0 : index
    %343 = vector.load %arg2[%c43, %c0_133] : memref<98x256xf32, #tpu.memory_space<vmem>>, vector<1x256xf32>
    %c92 = arith.constant 92 : index
    %c0_134 = arith.constant 0 : index
    %344 = vector.load %arg2[%c92, %c0_134] : memref<98x256xf32, #tpu.memory_space<vmem>>, vector<1x256xf32>
    %345 = arith.mulf %343, %341 : vector<1x256xf32>
    %346 = arith.mulf %344, %342 : vector<1x256xf32>
    %347 = arith.addf %331, %345 : vector<1x256xf32>
    %348 = arith.addf %332, %346 : vector<1x256xf32>
    %c209_i32 = arith.constant 209 : i32
    %349 = tpu.dynamic_rotate %1 by %c209_i32 dim 1 : vector<1x256xf32>, i32 -> vector<1x256xf32>
    %c209_i32_135 = arith.constant 209 : i32
    %350 = tpu.dynamic_rotate %2 by %c209_i32_135 dim 1 : vector<1x256xf32>, i32 -> vector<1x256xf32>
    %c44 = arith.constant 44 : index
    %c0_136 = arith.constant 0 : index
    %351 = vector.load %arg2[%c44, %c0_136] : memref<98x256xf32, #tpu.memory_space<vmem>>, vector<1x256xf32>
    %c93 = arith.constant 93 : index
    %c0_137 = arith.constant 0 : index
    %352 = vector.load %arg2[%c93, %c0_137] : memref<98x256xf32, #tpu.memory_space<vmem>>, vector<1x256xf32>
    %353 = arith.mulf %351, %349 : vector<1x256xf32>
    %354 = arith.mulf %352, %350 : vector<1x256xf32>
    %355 = arith.addf %339, %353 : vector<1x256xf32>
    %356 = arith.addf %340, %354 : vector<1x256xf32>
    %c208_i32 = arith.constant 208 : i32
    %357 = tpu.dynamic_rotate %1 by %c208_i32 dim 1 : vector<1x256xf32>, i32 -> vector<1x256xf32>
    %c208_i32_138 = arith.constant 208 : i32
    %358 = tpu.dynamic_rotate %2 by %c208_i32_138 dim 1 : vector<1x256xf32>, i32 -> vector<1x256xf32>
    %c45 = arith.constant 45 : index
    %c0_139 = arith.constant 0 : index
    %359 = vector.load %arg2[%c45, %c0_139] : memref<98x256xf32, #tpu.memory_space<vmem>>, vector<1x256xf32>
    %c94 = arith.constant 94 : index
    %c0_140 = arith.constant 0 : index
    %360 = vector.load %arg2[%c94, %c0_140] : memref<98x256xf32, #tpu.memory_space<vmem>>, vector<1x256xf32>
    %361 = arith.mulf %359, %357 : vector<1x256xf32>
    %362 = arith.mulf %360, %358 : vector<1x256xf32>
    %363 = arith.addf %347, %361 : vector<1x256xf32>
    %364 = arith.addf %348, %362 : vector<1x256xf32>
    %c207_i32 = arith.constant 207 : i32
    %365 = tpu.dynamic_rotate %1 by %c207_i32 dim 1 : vector<1x256xf32>, i32 -> vector<1x256xf32>
    %c207_i32_141 = arith.constant 207 : i32
    %366 = tpu.dynamic_rotate %2 by %c207_i32_141 dim 1 : vector<1x256xf32>, i32 -> vector<1x256xf32>
    %c46 = arith.constant 46 : index
    %c0_142 = arith.constant 0 : index
    %367 = vector.load %arg2[%c46, %c0_142] : memref<98x256xf32, #tpu.memory_space<vmem>>, vector<1x256xf32>
    %c95 = arith.constant 95 : index
    %c0_143 = arith.constant 0 : index
    %368 = vector.load %arg2[%c95, %c0_143] : memref<98x256xf32, #tpu.memory_space<vmem>>, vector<1x256xf32>
    %369 = arith.mulf %367, %365 : vector<1x256xf32>
    %370 = arith.mulf %368, %366 : vector<1x256xf32>
    %371 = arith.addf %355, %369 : vector<1x256xf32>
    %372 = arith.addf %356, %370 : vector<1x256xf32>
    %c206_i32 = arith.constant 206 : i32
    %373 = tpu.dynamic_rotate %1 by %c206_i32 dim 1 : vector<1x256xf32>, i32 -> vector<1x256xf32>
    %c206_i32_144 = arith.constant 206 : i32
    %374 = tpu.dynamic_rotate %2 by %c206_i32_144 dim 1 : vector<1x256xf32>, i32 -> vector<1x256xf32>
    %c47 = arith.constant 47 : index
    %c0_145 = arith.constant 0 : index
    %375 = vector.load %arg2[%c47, %c0_145] : memref<98x256xf32, #tpu.memory_space<vmem>>, vector<1x256xf32>
    %c96 = arith.constant 96 : index
    %c0_146 = arith.constant 0 : index
    %376 = vector.load %arg2[%c96, %c0_146] : memref<98x256xf32, #tpu.memory_space<vmem>>, vector<1x256xf32>
    %377 = arith.mulf %375, %373 : vector<1x256xf32>
    %378 = arith.mulf %376, %374 : vector<1x256xf32>
    %379 = arith.addf %363, %377 : vector<1x256xf32>
    %380 = arith.addf %364, %378 : vector<1x256xf32>
    %c205_i32 = arith.constant 205 : i32
    %381 = tpu.dynamic_rotate %1 by %c205_i32 dim 1 : vector<1x256xf32>, i32 -> vector<1x256xf32>
    %c205_i32_147 = arith.constant 205 : i32
    %382 = tpu.dynamic_rotate %2 by %c205_i32_147 dim 1 : vector<1x256xf32>, i32 -> vector<1x256xf32>
    %c48 = arith.constant 48 : index
    %c0_148 = arith.constant 0 : index
    %383 = vector.load %arg2[%c48, %c0_148] : memref<98x256xf32, #tpu.memory_space<vmem>>, vector<1x256xf32>
    %c97 = arith.constant 97 : index
    %c0_149 = arith.constant 0 : index
    %384 = vector.load %arg2[%c97, %c0_149] : memref<98x256xf32, #tpu.memory_space<vmem>>, vector<1x256xf32>
    %385 = arith.mulf %383, %381 : vector<1x256xf32>
    %386 = arith.mulf %384, %382 : vector<1x256xf32>
    %387 = arith.addf %371, %385 : vector<1x256xf32>
    %388 = arith.addf %372, %386 : vector<1x256xf32>
    %389 = arith.addf %387, %379 : vector<1x256xf32>
    %390 = arith.addf %389, %388 : vector<1x256xf32>
    %391 = arith.addf %390, %380 : vector<1x256xf32>
    %cst_150 = arith.constant 0.000000e+00 : f32
    %392 = vector.broadcast %cst_150 : f32 to vector<1x256xf32>
    %393 = arith.subf %392, %391 : vector<1x256xf32>
    %394 = math.exp %393 : vector<1x256xf32>
    %cst_151 = arith.constant 1.000000e+00 : f32
    %395 = vector.broadcast %cst_151 : f32 to vector<1x256xf32>
    %396 = arith.addf %395, %394 : vector<1x256xf32>
    %397 = tpu.reciprocal %396 : vector<1x256xf32> -> vector<1x256xf32>
    %c0_152 = arith.constant 0 : index
    %c0_153 = arith.constant 0 : index
    %c0_154 = arith.constant 0 : index
    %398 = vector.load %arg1[%c0_152, %c0_153, %c0_154] : memref<1x4x256xf32, #tpu.memory_space<vmem>>, vector<1x4x256xf32>
    %399 = vector.shape_cast %397 : vector<1x256xf32> to vector<1x1x256xf32>
    %400 = vector.broadcast %399 : vector<1x1x256xf32> to vector<1x4x256xf32>
    %401 = arith.mulf %398, %400 : vector<1x4x256xf32>
    %c0_155 = arith.constant 0 : index
    %c0_156 = arith.constant 0 : index
    %c0_157 = arith.constant 0 : index
    %402 = vector.load %arg3[%c0_155, %c0_156, %c0_157] : memref<1x4x256xf32, #tpu.memory_space<vmem>>, vector<1x4x256xf32>
    tpu.vector_store %arg3[%c0_155, %c0_156, %c0_157], %401 {strides = array<i32>} : memref<1x4x256xf32, #tpu.memory_space<vmem>>, vector<1x4x256xf32>,
    return
  }
  func.func @transform_0(%arg0: i32) -> (i32, i32, i32) {
    %c0_i32 = arith.constant 0 : i32
    %c0_i32_0 = arith.constant 0 : i32
    %c0_i32_1 = arith.constant 0 : i32
    return %arg0, %c0_i32, %c0_i32_0 : i32, i32, i32
  }
  func.func @transform_1(%arg0: i32) -> (i32, i32) {
    %c0_i32 = arith.constant 0 : i32
    %c0_i32_0 = arith.constant 0 : i32
    %c0_i32_1 = arith.constant 0 : i32
    return %c0_i32, %c0_i32_0 : i32, i32
  }
  func.func @transform_2(%arg0: i32) -> (i32, i32, i32) {
    %c0_i32 = arith.constant 0 : i32
    %c0_i32_0 = arith.constant 0 : i32
    %c0_i32_1 = arith.constant 0 : i32
    return %arg0, %c0_i32, %c0_i32_0 : i32, i32, i32
  }
}

</mosaic_0001>

<llo_original>
// kernel: tpu_custom_call.1
$region0: #{tpu_custom_call.1}
  #allocation0 [shape = 'u32[]', space=smem, size = 0x4, offset = 0x4, fixed_abs, tag = 'smem constant byte address 0x4 - core index']
  #allocation1 [shape = 'u32[144,128]{1,0:T(1,128)}', space=vmem, size = 0x12000, scoped, tag = 'internal scratch']
  %s0 = inlined_call_operand.hbm [shape: f32[2,4,256], index: 0, kind: input, shape index: {}]
  %s1 = inlined_call_operand.hbm [shape: f32[98,256], index: 1, kind: input, shape index: {}]
  %s2 = inlined_call_operand.hbm [shape: f32[2,4,256], index: 2, kind: output, shape index: {}]
  %s3 = sld [smem:[#allocation0]]
  $region49: #{tpu_custom_call.1} parent=0
    _
  %s5 = ssub.s32 1, %s3
  %s6 = scalar_select 0, %s5, %s3
  $region1: #{tpu_custom_call.1} parent=0
    #allocation2 [shape = 'u8[8192]{0}', space=vmem, size = 0x2000, scoped, tag = 'input window, operand 0']
    #allocation3 [shape = 's32[2]{0}', space=sflag, size = 0x8, scoped, tag = 'scoped memory for tpu_custom_call.1']
    #allocation4 [shape = 's32[2]{0}', space=sflag, size = 0x8, scoped, tag = 'scoped memory for tpu_custom_call.1']
    #allocation5 [shape = 'u8[106496]{0}', space=vmem, size = 0x1a000, scoped, tag = 'input window, operand 1, single buffered']
    #allocation6 [shape = 's32[1]{0}', space=sflag, size = 0x4, scoped, tag = 'scoped memory for tpu_custom_call.1']
    #allocation7 [shape = 'u8[8192]{0}', space=vmem, size = 0x2000, scoped, tag = 'output window, operand 0']
    %7 = vsyncpa [#allocation3], 0
    %s8 = scalar_lea.sflag [#allocation3], 1
    %9 = vsyncpa %s8, 0
    %10 = vsyncpa [#allocation6], 0
    %11 = vsyncpa [#allocation4], 0
    %s12 = scalar_lea.sflag [#allocation4], 1
    %13 = vsyncpa %s12, 0
    loop: start=0, step=1, limit=4
    $region2: #{tpu_custom_call.1} parent=1 // loop_pre_header
      _
    $region3: #{tpu_custom_call.1} parent=1 // loop_header
      %s15 = sphi 0, %s19
      %p16 = scmp.ge.s32.totalorder %s15, 4
      %s25 = sphi 0, %s27
      %s28 = sphi 0, %s25
      %s29 = sphi 0, %s28
      %s45 = sphi 0, %s29
      %s49 = sphi 0, %s49
      %s51 = sphi 0, %s49
      %s52 = sphi 0, %s51
      %s66 = sphi 0, %s52
      %s72 = sphi 0, %s74
      %s75 = sphi 0, %s72
      %s76 = sphi 0, %s75
      %s92 = sphi 0, %s76
    $region4: #{tpu_custom_call.1} parent=1 // loop_header_branch
      %18 = sbr.rel (%p16) target = $region8
    $region5: #{tpu_custom_call.1} parent=1 // loop_body
      %s20 = ssub.s32 %s15, 1
      %s21 = ssub.s32 %s15, 2
      %s22 = sadd.s32 %s15, 1
      %s23 = ssub.s32 %s15, %s22
      %p24 = scmp.eq.s32.totalorder %s23, 0
      %s26 = sadd.s32 %s25, 1
      %s27 = scalar_select %p24, %s25, %s26
      %p30 = pneg %p24
      %p31 = scmp.eq.s32.totalorder %s15, 1
      %p32 = por %p30, %p31
      %p33 = scmp.ne.s32.totalorder %s25, %s28
      %p34 = scmp.eq.s32.totalorder %s15, 0
      %p35 = por %p33, %p34
      %p36 = scmp.ne.s32.totalorder %s25, %s28
      %p37 = scmp.eq.s32.totalorder %s20, 1
      %p38 = por %p36, %p37
      %p39 = scmp.ne.s32.totalorder %s28, %s29
      %p40 = scmp.eq.s32.totalorder %s20, 0
      %p41 = por %p39, %p40
      %p42 = scmp.ne.s32.totalorder %s28, %s29
      %p43 = scmp.eq.s32.totalorder %s21, 1
      %p44 = por %p42, %p43
      %p46 = scmp.ne.s32.totalorder %s29, %s45
      %p47 = scmp.eq.s32.totalorder %s21, 0
      %p48 = por %p46, %p47
      %s50 = sadd.s32 %s49, 1
      %p53 = scmp.eq.s32.totalorder %s15, 1
      %p54 = scmp.ne.s32.totalorder %s49, %s51
      %p55 = scmp.eq.s32.totalorder %s15, 0
      %p56 = por %p54, %p55
      %p57 = scmp.ne.s32.totalorder %s49, %s51
      %p58 = scmp.eq.s32.totalorder %s20, 1
      %p59 = por %p57, %p58
      %p60 = scmp.ne.s32.totalorder %s51, %s52
      %p61 = scmp.eq.s32.totalorder %s20, 0
      %p62 = por %p60, %p61
      %p63 = scmp.ne.s32.totalorder %s51, %s52
      %p64 = scmp.eq.s32.totalorder %s21, 1
      %p65 = por %p63, %p64
      %p67 = scmp.ne.s32.totalorder %s52, %s66
      %p68 = scmp.eq.s32.totalorder %s21, 0
      %p69 = por %p67, %p68
      %s70 = ssub.s32 %s15, %s22
      %p71 = scmp.eq.s32.totalorder %s70, 0
      %s73 = sadd.s32 %s72, 1
      %s74 = scalar_select %p71, %s72, %s73
      %p77 = pneg %p71
      %p78 = scmp.eq.s32.totalorder %s15, 1
      %p79 = por %p77, %p78
      %p80 = scmp.ne.s32.totalorder %s72, %s75
      %p81 = scmp.eq.s32.totalorder %s15, 0
      %p82 = por %p80, %p81
      %p83 = scmp.ne.s32.totalorder %s72, %s75
      %p84 = scmp.eq.s32.totalorder %s20, 1
      %p85 = por %p83, %p84
      %p86 = scmp.ne.s32.totalorder %s75, %s76
      %p87 = scmp.eq.s32.totalorder %s20, 0
      %p88 = por %p86, %p87
      %p89 = scmp.ne.s32.totalorder %s75, %s76
      %p90 = scmp.eq.s32.totalorder %s21, 1
      %p91 = por %p89, %p90
      %p93 = scmp.ne.s32.totalorder %s76, %s92
      %p94 = scmp.eq.s32.totalorder %s21, 0
      %p95 = por %p93, %p94
      %p96 = scmp.le.s32.totalorder 1, %s15
      %p97 = scmp.lt.s32.totalorder %s15, 3
      %p98 = pnand %p96, %p97
      %p99 = pneg %p98
      // Predicated region
      $region9: #{tpu_custom_call.1} parent=5 // pred_check
        _
      $region10: #{tpu_custom_call.1} parent=5 // pred_check_branch
        %101 = sbr.rel (%p98) target = $region12
      $region11: #{tpu_custom_call.1} parent=5 // pred_region
        %s102 = ssub.s32 %s15, 1
        // Predicated region
        $region13: #{tpu_custom_call.1} parent=11 // pred_check
          %p103 = pneg %p62
        $region14: #{tpu_custom_call.1} parent=11 // pred_check_branch
          %105 = sbr.rel (%p103) target = $region16
        $region15: #{tpu_custom_call.1} parent=11 // pred_region
          %s107 = ssub.s32 3328, 3328
          %108 = vsyncadd [#allocation6], %s107
          %s109 = sshll.u32 [#allocation5], 4
          %s110 = int_to_ptr.vmem [resolvable:$true] %s109
          %115 = dma.hbm_to_vmem [thread:$0]  %s1, 3328, %s110, [#allocation6], 256, 256, 16
        $region16: #{tpu_custom_call.1} parent=11 // pred_fallthru
          _
      $region12: #{tpu_custom_call.1} parent=5 // pred_fallthru
        _
      %p116 = scmp.lt.s32.totalorder %s15, 2
      // Predicated region
      $region17: #{tpu_custom_call.1} parent=5 // pred_check
        %p117 = pneg %p116
      $region18: #{tpu_custom_call.1} parent=5 // pred_check_branch
        %119 = sbr.rel (%p117) target = $region20
      $region19: #{tpu_custom_call.1} parent=5 // pred_region
        // Predicated region
        $region21: #{tpu_custom_call.1} parent=19 // pred_check
          %p120 = pneg %p35
        $region22: #{tpu_custom_call.1} parent=19 // pred_check_branch
          %122 = sbr.rel (%p120) target = $region24
        $region23: #{tpu_custom_call.1} parent=19 // pred_region
          %s123 = sand.u32 %s25, 1
          %s124 = scalar_lea.sflag [#allocation3], %s123
          %s125 = sand.u32 %s25, 1
          %s126 = smul.addr %s125, 8
          %s127 = scalar_lea.vmem [#allocation2], %s126
          %s129 = ssub.s32 128, 128
          %130 = vsyncadd %s124, %s129
          %s131 = smul.addr %s15, 2
          %s132 = smul.addr %s131, 64
          %s133 = scalar_lea.hbm %s0, %s132
          %s135 = sshll.u32 %s127, 4
          %s136 = int_to_ptr.vmem [resolvable:$true] %s135
          %138 = dma.hbm_to_vmem [thread:$0]  %s133, 128, %s136, %s124
        $region24: #{tpu_custom_call.1} parent=19 // pred_fallthru
          _
      $region20: #{tpu_custom_call.1} parent=5 // pred_fallthru
        _
      %p139 = scmp.le.s32.totalorder 1, %s15
      %p140 = scmp.lt.s32.totalorder %s15, 3
      %p141 = pnand %p139, %p140
      %p142 = pneg %p141
      // Predicated region
      $region25: #{tpu_custom_call.1} parent=5 // pred_check
        _
      $region26: #{tpu_custom_call.1} parent=5 // pred_check_branch
        %144 = sbr.rel (%p141) target = $region28
      $region27: #{tpu_custom_call.1} parent=5 // pred_region
        %s145 = ssub.s32 %s15, 1
        %s146 = sand.u32 %s28, 1
        %s147 = scalar_lea.sflag [#allocation3], %s146
        %s148 = sand.u32 %s28, 1
        %s149 = smul.addr %s148, 8
        %s150 = scalar_lea.vmem [#allocation2], %s149
        // Predicated region
        $region29: #{tpu_custom_call.1} parent=27 // pred_check
          %p151 = pneg %p41
        $region30: #{tpu_custom_call.1} parent=27 // pred_check_branch
          %153 = sbr.rel (%p151) target = $region32
        $region31: #{tpu_custom_call.1} parent=27 // pred_region
          %154 = dma.done %s147, 128
        $region32: #{tpu_custom_call.1} parent=27 // pred_fallthru
          _
        // Predicated region
        $region33: #{tpu_custom_call.1} parent=27 // pred_check
          %p155 = pneg %p62
        $region34: #{tpu_custom_call.1} parent=27 // pred_check_branch
          %157 = sbr.rel (%p155) target = $region36
        $region35: #{tpu_custom_call.1} parent=27 // pred_region
          %158 = dma.done [#allocation6], 3328
        $region36: #{tpu_custom_call.1} parent=27 // pred_fallthru
          _
        %s159 = sand.u32 %s28, 1
        %s160 = scalar_lea.sflag [#allocation3], %s159
        %s161 = sand.u32 %s28, 1
        %s162 = smul.addr %s161, 8
        %s163 = scalar_lea.vmem [#allocation2], %s162
        %p164 = pneg %p41
        %p165 = pneg %p38
        %p166 = pneg %p62
        %p167 = pneg %p59
        %p168 = pneg %p88
        %p169 = pneg %p85
        %s170 = sand.u32 %s75, 1
        %s171 = scalar_lea.sflag [#allocation4], %s170
        %s172 = sand.u32 %s75, 1
        %s173 = smul.addr %s172, 8
        %s174 = scalar_lea.vmem [#allocation7], %s173
        %v175 = vld [vmem:[%s150] sm:$0xff]
        %v177 = vcombine.high %v175, %v175
        %vm179 = vcmask 1043456
        %v180 = vsel %vm179, %v175, 0.0
        %v181 = vrot.slane %v180, 4
        %v182 = vadd.f32 %v180, %v181
        %v183 = vrot.slane %v182, 2
        %v184 = vadd.f32 %v182, %v183
        %v185 = vrot.slane %v184, 1
        %v186 = vadd.f32 %v184, %v185
        %v187 = vsel %vm179, %v177, 0.0
        %v188 = vrot.slane %v187, 4
        %v189 = vadd.f32 %v187, %v188
        %v190 = vrot.slane %v189, 2
        %v191 = vadd.f32 %v189, %v190
        %v192 = vrot.slane %v191, 1
        %v193 = vadd.f32 %v191, %v192
        %v194 = vsel %vm179, %v175, -inf
        %v195 = vrot.slane %v194, 4
        %v196 = vmax.f32 %v194, %v195
        %v197 = vrot.slane %v196, 2
        %v198 = vmax.f32 %v196, %v197
        %v199 = vrot.slane %v198, 1
        %v200 = vmax.f32 %v198, %v199
        %v201 = vsel %vm179, %v177, -inf
        %v202 = vrot.slane %v201, 4
        %v203 = vmax.f32 %v201, %v202
        %v204 = vrot.slane %v203, 2
        %v205 = vmax.f32 %v203, %v204
        %v206 = vrot.slane %v205, 1
        %v207 = vmax.f32 %v205, %v206
        %208 = vrot.lane.b32.xlu0 %v186, 51
        %v209 = vpop.permute.xlu0 %208
        %210 = vrot.lane.b32.xlu0 %v193, 51
        %v211 = vpop.permute.xlu0 %210
        %v212 = vlaneseq
        %v213 = vand.u32 %v212, 127
        %vm214 = vcmp.lt.s32.totalorder %v213, 51
        %v215 = vsel %vm214, %v209, %v211
        %v216 = vsel %vm214, %v211, %v209
        %217 = vrot.lane.b32.xlu0 %v200, 51
        %v218 = vpop.permute.xlu0 %217
        %219 = vrot.lane.b32.xlu0 %v207, 51
        %v220 = vpop.permute.xlu0 %219
        %v221 = vsel %vm214, %v218, %v220
        %v222 = vsel %vm214, %v220, %v218
        %v223 = vld [vmem:[#allocation5] ss:$8 sm:$0x3]
        %s224 = scalar_lea.vmem [#allocation5], 97
        %v225 = vld [vmem:[%s224] ss:$8 sm:$0x3]
        %v228 = vcombine.low %v216, %v215
        %v230 = vunpack.c.l.s4 1966171168
        %v231 = vunpack.c.0.s8 %v230
        %v232 = vlaneseq
        %v233 = vshrl.u32 %v232, 7
        %v234 = vsub.s32 %v231, %v233
        %v235 = vrot.slane %v228, %v234
        %v237 = vunpack.c.l.s4 1966171168
        %v238 = vunpack.c.0.s8 %v237
        %v239 = vlaneseq
        %v240 = vshrl.u32 %v239, 7
        %v241 = vsub.s32 %v238, %v240
        %v242 = vrot.slane %v235, %v241
        %v244 = vmul.f32 %v223, %v242
        %v247 = vcombine.low %v222, %v221
        %v249 = vunpack.c.l.s4 1966171168
        %v250 = vunpack.c.0.s8 %v249
        %v251 = vlaneseq
        %v252 = vshrl.u32 %v251, 7
        %v253 = vsub.s32 %v250, %v252
        %v254 = vrot.slane %v247, %v253
        %v256 = vunpack.c.l.s4 1966171168
        %v257 = vunpack.c.0.s8 %v256
        %v258 = vlaneseq
        %v259 = vshrl.u32 %v258, 7
        %v260 = vsub.s32 %v257, %v259
        %v261 = vrot.slane %v254, %v260
        %v263 = vmul.f32 %v225, %v261
        %264 = vrot.lane.b32.xlu0 %v186, 50
        %v265 = vpop.permute.xlu0 %264
        %266 = vrot.lane.b32.xlu0 %v193, 50
        %v267 = vpop.permute.xlu0 %266
        %vm268 = vcmp.lt.s32.totalorder %v213, 50
        %v269 = vsel %vm268, %v265, %v267
        %v270 = vsel %vm268, %v267, %v265
        %271 = vrot.lane.b32.xlu0 %v200, 50
        %v272 = vpop.permute.xlu0 %271
        %273 = vrot.lane.b32.xlu0 %v207, 50
        %v274 = vpop.permute.xlu0 %273
        %v275 = vsel %vm268, %v272, %v274
        %v276 = vsel %vm268, %v274, %v272
        %s277 = scalar_lea.vmem [#allocation5], 1
        %v278 = vld [vmem:[%s277] ss:$8 sm:$0x3]
        %s279 = scalar_lea.vmem [#allocation5], 98
        %v280 = vld [vmem:[%s279] ss:$8 sm:$0x3]
        %v283 = vcombine.low %v270, %v269
        %v285 = vunpack.c.l.s4 1966171168
        %v286 = vunpack.c.0.s8 %v285
        %v287 = vlaneseq
        %v288 = vshrl.u32 %v287, 7
        %v289 = vsub.s32 %v286, %v288
        %v290 = vrot.slane %v283, %v289
        %v292 = vunpack.c.l.s4 1966171168
        %v293 = vunpack.c.0.s8 %v292
        %v294 = vlaneseq
        %v295 = vshrl.u32 %v294, 7
        %v296 = vsub.s32 %v293, %v295
        %v297 = vrot.slane %v290, %v296
        %v299 = vmul.f32 %v278, %v297
        %v302 = vcombine.low %v276, %v275
        %v304 = vunpack.c.l.s4 1966171168
        %v305 = vunpack.c.0.s8 %v304
        %v306 = vlaneseq
        %v307 = vshrl.u32 %v306, 7
        %v308 = vsub.s32 %v305, %v307
        %v309 = vrot.slane %v302, %v308
        %v311 = vunpack.c.l.s4 1966171168
        %v312 = vunpack.c.0.s8 %v311
        %v313 = vlaneseq
        %v314 = vshrl.u32 %v313, 7
        %v315 = vsub.s32 %v312, %v314
        %v316 = vrot.slane %v309, %v315
        %v318 = vmul.f32 %v280, %v316
        %319 = vrot.lane.b32.xlu0 %v186, 49
        %v320 = vpop.permute.xlu0 %319
        %321 = vrot.lane.b32.xlu0 %v193, 49
        %v322 = vpop.permute.xlu0 %321
        %vm323 = vcmp.lt.s32.totalorder %v213, 49
        %v324 = vsel %vm323, %v320, %v322
        %v325 = vsel %vm323, %v322, %v320
        %326 = vrot.lane.b32.xlu0 %v200, 49
        %v327 = vpop.permute.xlu0 %326
        %328 = vrot.lane.b32.xlu0 %v207, 49
        %v329 = vpop.permute.xlu0 %328
        %v330 = vsel %vm323, %v327, %v329
        %v331 = vsel %vm323, %v329, %v327
        %s332 = scalar_lea.vmem [#allocation5], 2
        %v333 = vld [vmem:[%s332] ss:$8 sm:$0x3]
        %s334 = scalar_lea.vmem [#allocation5], 99
        %v335 = vld [vmem:[%s334] ss:$8 sm:$0x3]
        %v338 = vcombine.low %v325, %v324
        %v340 = vunpack.c.l.s4 1966171168
        %v341 = vunpack.c.0.s8 %v340
        %v342 = vlaneseq
        %v343 = vshrl.u32 %v342, 7
        %v344 = vsub.s32 %v341, %v343
        %v345 = vrot.slane %v338, %v344
        %v347 = vunpack.c.l.s4 1966171168
        %v348 = vunpack.c.0.s8 %v347
        %v349 = vlaneseq
        %v350 = vshrl.u32 %v349, 7
        %v351 = vsub.s32 %v348, %v350
        %v352 = vrot.slane %v345, %v351
        %v354 = vmul.f32 %v333, %v352
        %v357 = vcombine.low %v331, %v330
        %v359 = vunpack.c.l.s4 1966171168
        %v360 = vunpack.c.0.s8 %v359
        %v361 = vlaneseq
        %v362 = vshrl.u32 %v361, 7
        %v363 = vsub.s32 %v360, %v362
        %v364 = vrot.slane %v357, %v363
        %v366 = vunpack.c.l.s4 1966171168
        %v367 = vunpack.c.0.s8 %v366
        %v368 = vlaneseq
        %v369 = vshrl.u32 %v368, 7
        %v370 = vsub.s32 %v367, %v369
        %v371 = vrot.slane %v364, %v370
        %v373 = vmul.f32 %v335, %v371
        %v374 = vadd.f32 %v244, %v354
        %v375 = vadd.f32 %v263, %v373
        %376 = vrot.lane.b32.xlu0 %v186, 48
        %v377 = vpop.permute.xlu0 %376
        %378 = vrot.lane.b32.xlu0 %v193, 48
        %v379 = vpop.permute.xlu0 %378
        %vm380 = vcmp.lt.s32.totalorder %v213, 48
        %v381 = vsel %vm380, %v377, %v379
        %v382 = vsel %vm380, %v379, %v377
        %383 = vrot.lane.b32.xlu0 %v200, 48
        %v384 = vpop.permute.xlu0 %383
        %385 = vrot.lane.b32.xlu0 %v207, 48
        %v386 = vpop.permute.xlu0 %385
        %v387 = vsel %vm380, %v384, %v386
        %v388 = vsel %vm380, %v386, %v384
        %s389 = scalar_lea.vmem [#allocation5], 3
        %v390 = vld [vmem:[%s389] ss:$8 sm:$0x3]
        %s391 = scalar_lea.vmem [#allocation5], 100
        %v392 = vld [vmem:[%s391] ss:$8 sm:$0x3]
        %v395 = vcombine.low %v382, %v381
        %v397 = vunpack.c.l.s4 1966171168
        %v398 = vunpack.c.0.s8 %v397
        %v399 = vlaneseq
        %v400 = vshrl.u32 %v399, 7
        %v401 = vsub.s32 %v398, %v400
        %v402 = vrot.slane %v395, %v401
        %v404 = vunpack.c.l.s4 1966171168
        %v405 = vunpack.c.0.s8 %v404
        %v406 = vlaneseq
        %v407 = vshrl.u32 %v406, 7
        %v408 = vsub.s32 %v405, %v407
        %v409 = vrot.slane %v402, %v408
        %v411 = vmul.f32 %v390, %v409
        %v414 = vcombine.low %v388, %v387
        %v416 = vunpack.c.l.s4 1966171168
        %v417 = vunpack.c.0.s8 %v416
        %v418 = vlaneseq
        %v419 = vshrl.u32 %v418, 7
        %v420 = vsub.s32 %v417, %v419
        %v421 = vrot.slane %v414, %v420
        %v423 = vunpack.c.l.s4 1966171168
        %v424 = vunpack.c.0.s8 %v423
        %v425 = vlaneseq
        %v426 = vshrl.u32 %v425, 7
        %v427 = vsub.s32 %v424, %v426
        %v428 = vrot.slane %v421, %v427
        %v430 = vmul.f32 %v392, %v428
        %v431 = vadd.f32 %v299, %v411
        %v432 = vadd.f32 %v318, %v430
        %433 = vrot.lane.b32.xlu0 %v186, 47
        %v434 = vpop.permute.xlu0 %433
        %435 = vrot.lane.b32.xlu0 %v193, 47
        %v436 = vpop.permute.xlu0 %435
        %vm437 = vcmp.lt.s32.totalorder %v213, 47
        %v438 = vsel %vm437, %v434, %v436
        %v439 = vsel %vm437, %v436, %v434
        %440 = vrot.lane.b32.xlu0 %v200, 47
        %v441 = vpop.permute.xlu0 %440
        %442 = vrot.lane.b32.xlu0 %v207, 47
        %v443 = vpop.permute.xlu0 %442
        %v444 = vsel %vm437, %v441, %v443
        %v445 = vsel %vm437, %v443, %v441
        %s446 = scalar_lea.vmem [#allocation5], 4
        %v447 = vld [vmem:[%s446] ss:$8 sm:$0x3]
        %s448 = scalar_lea.vmem [#allocation5], 101
        %v449 = vld [vmem:[%s448] ss:$8 sm:$0x3]
        %v452 = vcombine.low %v439, %v438
        %v454 = vunpack.c.l.s4 1966171168
        %v455 = vunpack.c.0.s8 %v454
        %v456 = vlaneseq
        %v457 = vshrl.u32 %v456, 7
        %v458 = vsub.s32 %v455, %v457
        %v459 = vrot.slane %v452, %v458
        %v461 = vunpack.c.l.s4 1966171168
        %v462 = vunpack.c.0.s8 %v461
        %v463 = vlaneseq
        %v464 = vshrl.u32 %v463, 7
        %v465 = vsub.s32 %v462, %v464
        %v466 = vrot.slane %v459, %v465
        %v468 = vmul.f32 %v447, %v466
        %v471 = vcombine.low %v445, %v444
        %v473 = vunpack.c.l.s4 1966171168
        %v474 = vunpack.c.0.s8 %v473
        %v475 = vlaneseq
        %v476 = vshrl.u32 %v475, 7
        %v477 = vsub.s32 %v474, %v476
        %v478 = vrot.slane %v471, %v477
        %v480 = vunpack.c.l.s4 1966171168
        %v481 = vunpack.c.0.s8 %v480
        %v482 = vlaneseq
        %v483 = vshrl.u32 %v482, 7
        %v484 = vsub.s32 %v481, %v483
        %v485 = vrot.slane %v478, %v484
        %v487 = vmul.f32 %v449, %v485
        %v488 = vadd.f32 %v374, %v468
        %v489 = vadd.f32 %v375, %v487
        %490 = vrot.lane.b32.xlu0 %v186, 46
        %v491 = vpop.permute.xlu0 %490
        %492 = vrot.lane.b32.xlu0 %v193, 46
        %v493 = vpop.permute.xlu0 %492
        %vm494 = vcmp.lt.s32.totalorder %v213, 46
        %v495 = vsel %vm494, %v491, %v493
        %v496 = vsel %vm494, %v493, %v491
        %497 = vrot.lane.b32.xlu0 %v200, 46
        %v498 = vpop.permute.xlu0 %497
        %499 = vrot.lane.b32.xlu0 %v207, 46
        %v500 = vpop.permute.xlu0 %499
        %v501 = vsel %vm494, %v498, %v500
        %v502 = vsel %vm494, %v500, %v498
        %s503 = scalar_lea.vmem [#allocation5], 5
        %v504 = vld [vmem:[%s503] ss:$8 sm:$0x3]
        %s505 = scalar_lea.vmem [#allocation5], 102
        %v506 = vld [vmem:[%s505] ss:$8 sm:$0x3]
        %v509 = vcombine.low %v496, %v495
        %v511 = vunpack.c.l.s4 1966171168
        %v512 = vunpack.c.0.s8 %v511
        %v513 = vlaneseq
        %v514 = vshrl.u32 %v513, 7
        %v515 = vsub.s32 %v512, %v514
        %v516 = vrot.slane %v509, %v515
        %v518 = vunpack.c.l.s4 1966171168
        %v519 = vunpack.c.0.s8 %v518
        %v520 = vlaneseq
        %v521 = vshrl.u32 %v520, 7
        %v522 = vsub.s32 %v519, %v521
        %v523 = vrot.slane %v516, %v522
        %v525 = vmul.f32 %v504, %v523
        %v528 = vcombine.low %v502, %v501
        %v530 = vunpack.c.l.s4 1966171168
        %v531 = vunpack.c.0.s8 %v530
        %v532 = vlaneseq
        %v533 = vshrl.u32 %v532, 7
        %v534 = vsub.s32 %v531, %v533
        %v535 = vrot.slane %v528, %v534
        %v537 = vunpack.c.l.s4 1966171168
        %v538 = vunpack.c.0.s8 %v537
        %v539 = vlaneseq
        %v540 = vshrl.u32 %v539, 7
        %v541 = vsub.s32 %v538, %v540
        %v542 = vrot.slane %v535, %v541
        %v544 = vmul.f32 %v506, %v542
        %v545 = vadd.f32 %v431, %v525
        %v546 = vadd.f32 %v432, %v544
        %547 = vrot.lane.b32.xlu0 %v186, 45
        %v548 = vpop.permute.xlu0 %547
        %549 = vrot.lane.b32.xlu0 %v193, 45
        %v550 = vpop.permute.xlu0 %549
        %vm551 = vcmp.lt.s32.totalorder %v213, 45
        %v552 = vsel %vm551, %v548, %v550
        %v553 = vsel %vm551, %v550, %v548
        %554 = vrot.lane.b32.xlu0 %v200, 45
        %v555 = vpop.permute.xlu0 %554
        %556 = vrot.lane.b32.xlu0 %v207, 45
        %v557 = vpop.permute.xlu0 %556
        %v558 = vsel %vm551, %v555, %v557
        %v559 = vsel %vm551, %v557, %v555
        %s560 = scalar_lea.vmem [#allocation5], 6
        %v561 = vld [vmem:[%s560] ss:$8 sm:$0x3]
        %s562 = scalar_lea.vmem [#allocation5], 103
        %v563 = vld [vmem:[%s562] ss:$8 sm:$0x3]
        %v566 = vcombine.low %v553, %v552
        %v568 = vunpack.c.l.s4 1966171168
        %v569 = vunpack.c.0.s8 %v568
        %v570 = vlaneseq
        %v571 = vshrl.u32 %v570, 7
        %v572 = vsub.s32 %v569, %v571
        %v573 = vrot.slane %v566, %v572
        %v575 = vunpack.c.l.s4 1966171168
        %v576 = vunpack.c.0.s8 %v575
        %v577 = vlaneseq
        %v578 = vshrl.u32 %v577, 7
        %v579 = vsub.s32 %v576, %v578
        %v580 = vrot.slane %v573, %v579
        %v582 = vmul.f32 %v561, %v580
        %v585 = vcombine.low %v559, %v558
        %v587 = vunpack.c.l.s4 1966171168
        %v588 = vunpack.c.0.s8 %v587
        %v589 = vlaneseq
        %v590 = vshrl.u32 %v589, 7
        %v591 = vsub.s32 %v588, %v590
        %v592 = vrot.slane %v585, %v591
        %v594 = vunpack.c.l.s4 1966171168
        %v595 = vunpack.c.0.s8 %v594
        %v596 = vlaneseq
        %v597 = vshrl.u32 %v596, 7
        %v598 = vsub.s32 %v595, %v597
        %v599 = vrot.slane %v592, %v598
        %v601 = vmul.f32 %v563, %v599
        %v602 = vadd.f32 %v488, %v582
        %v603 = vadd.f32 %v489, %v601
        %604 = vrot.lane.b32.xlu0 %v186, 35
        %v605 = vpop.permute.xlu0 %604
        %606 = vrot.lane.b32.xlu0 %v193, 35
        %v607 = vpop.permute.xlu0 %606
        %vm608 = vcmp.lt.s32.totalorder %v213, 35
        %v609 = vsel %vm608, %v605, %v607
        %v610 = vsel %vm608, %v607, %v605
        %611 = vrot.lane.b32.xlu0 %v200, 35
        %v612 = vpop.permute.xlu0 %611
        %613 = vrot.lane.b32.xlu0 %v207, 35
        %v614 = vpop.permute.xlu0 %613
        %v615 = vsel %vm608, %v612, %v614
        %v616 = vsel %vm608, %v614, %v612
        %s617 = scalar_lea.vmem [#allocation5], 7
        %v618 = vld [vmem:[%s617] ss:$8 sm:$0x3]
        %s619 = scalar_lea.vmem [#allocation5], 112
        %v620 = vld [vmem:[%s619] ss:$8 sm:$0x3]
        %v623 = vcombine.low %v610, %v609
        %v625 = vunpack.c.l.s4 1966171168
        %v626 = vunpack.c.0.s8 %v625
        %v627 = vlaneseq
        %v628 = vshrl.u32 %v627, 7
        %v629 = vsub.s32 %v626, %v628
        %v630 = vrot.slane %v623, %v629
        %v632 = vunpack.c.l.s4 1966171168
        %v633 = vunpack.c.0.s8 %v632
        %v634 = vlaneseq
        %v635 = vshrl.u32 %v634, 7
        %v636 = vsub.s32 %v633, %v635
        %v637 = vrot.slane %v630, %v636
        %v639 = vmul.f32 %v618, %v637
        %v642 = vcombine.low %v616, %v615
        %v644 = vunpack.c.l.s4 1966171168
        %v645 = vunpack.c.0.s8 %v644
        %v646 = vlaneseq
        %v647 = vshrl.u32 %v646, 7
        %v648 = vsub.s32 %v645, %v647
        %v649 = vrot.slane %v642, %v648
        %v651 = vunpack.c.l.s4 1966171168
        %v652 = vunpack.c.0.s8 %v651
        %v653 = vlaneseq
        %v654 = vshrl.u32 %v653, 7
        %v655 = vsub.s32 %v652, %v654
        %v656 = vrot.slane %v649, %v655
        %v658 = vmul.f32 %v620, %v656
        %v659 = vadd.f32 %v545, %v639
        %v660 = vadd.f32 %v546, %v658
        %661 = vrot.lane.b32.xlu0 %v186, 34
        %v662 = vpop.permute.xlu0 %661
        %663 = vrot.lane.b32.xlu0 %v193, 34
        %v664 = vpop.permute.xlu0 %663
        %vm665 = vcmp.lt.s32.totalorder %v213, 34
        %v666 = vsel %vm665, %v662, %v664
        %v667 = vsel %vm665, %v664, %v662
        %668 = vrot.lane.b32.xlu0 %v200, 34
        %v669 = vpop.permute.xlu0 %668
        %670 = vrot.lane.b32.xlu0 %v207, 34
        %v671 = vpop.permute.xlu0 %670
        %v672 = vsel %vm665, %v669, %v671
        %v673 = vsel %vm665, %v671, %v669
        %s674 = scalar_lea.vmem [#allocation5], 16
        %v675 = vld [vmem:[%s674] ss:$8 sm:$0x3]
        %s676 = scalar_lea.vmem [#allocation5], 113
        %v677 = vld [vmem:[%s676] ss:$8 sm:$0x3]
        %v680 = vcombine.low %v667, %v666
        %v682 = vunpack.c.l.s4 1966171168
        %v683 = vunpack.c.0.s8 %v682
        %v684 = vlaneseq
        %v685 = vshrl.u32 %v684, 7
        %v686 = vsub.s32 %v683, %v685
        %v687 = vrot.slane %v680, %v686
        %v689 = vunpack.c.l.s4 1966171168
        %v690 = vunpack.c.0.s8 %v689
        %v691 = vlaneseq
        %v692 = vshrl.u32 %v691, 7
        %v693 = vsub.s32 %v690, %v692
        %v694 = vrot.slane %v687, %v693
        %v696 = vmul.f32 %v675, %v694
        %v699 = vcombine.low %v673, %v672
        %v701 = vunpack.c.l.s4 1966171168
        %v702 = vunpack.c.0.s8 %v701
        %v703 = vlaneseq
        %v704 = vshrl.u32 %v703, 7
        %v705 = vsub.s32 %v702, %v704
        %v706 = vrot.slane %v699, %v705
        %v708 = vunpack.c.l.s4 1966171168
        %v709 = vunpack.c.0.s8 %v708
        %v710 = vlaneseq
        %v711 = vshrl.u32 %v710, 7
        %v712 = vsub.s32 %v709, %v711
        %v713 = vrot.slane %v706, %v712
        %v715 = vmul.f32 %v677, %v713
        %v716 = vadd.f32 %v602, %v696
        %v717 = vadd.f32 %v603, %v715
        %718 = vrot.lane.b32.xlu0 %v186, 33
        %v719 = vpop.permute.xlu0 %718
        %720 = vrot.lane.b32.xlu0 %v193, 33
        %v721 = vpop.permute.xlu0 %720
        %vm722 = vcmp.lt.s32.totalorder %v213, 33
        %v723 = vsel %vm722, %v719, %v721
        %v724 = vsel %vm722, %v721, %v719
        %725 = vrot.lane.b32.xlu0 %v200, 33
        %v726 = vpop.permute.xlu0 %725
        %727 = vrot.lane.b32.xlu0 %v207, 33
        %v728 = vpop.permute.xlu0 %727
        %v729 = vsel %vm722, %v726, %v728
        %v730 = vsel %vm722, %v728, %v726
        %s731 = scalar_lea.vmem [#allocation5], 17
        %v732 = vld [vmem:[%s731] ss:$8 sm:$0x3]
        %s733 = scalar_lea.vmem [#allocation5], 114
        %v734 = vld [vmem:[%s733] ss:$8 sm:$0x3]
        %v737 = vcombine.low %v724, %v723
        %v739 = vunpack.c.l.s4 1966171168
        %v740 = vunpack.c.0.s8 %v739
        %v741 = vlaneseq
        %v742 = vshrl.u32 %v741, 7
        %v743 = vsub.s32 %v740, %v742
        %v744 = vrot.slane %v737, %v743
        %v746 = vunpack.c.l.s4 1966171168
        %v747 = vunpack.c.0.s8 %v746
        %v748 = vlaneseq
        %v749 = vshrl.u32 %v748, 7
        %v750 = vsub.s32 %v747, %v749
        %v751 = vrot.slane %v744, %v750
        %v753 = vmul.f32 %v732, %v751
        %v756 = vcombine.low %v730, %v729
        %v758 = vunpack.c.l.s4 1966171168
        %v759 = vunpack.c.0.s8 %v758
        %v760 = vlaneseq
        %v761 = vshrl.u32 %v760, 7
        %v762 = vsub.s32 %v759, %v761
        %v763 = vrot.slane %v756, %v762
        %v765 = vunpack.c.l.s4 1966171168
        %v766 = vunpack.c.0.s8 %v765
        %v767 = vlaneseq
        %v768 = vshrl.u32 %v767, 7
        %v769 = vsub.s32 %v766, %v768
        %v770 = vrot.slane %v763, %v769
        %v772 = vmul.f32 %v734, %v770
        %v773 = vadd.f32 %v659, %v753
        %v774 = vadd.f32 %v660, %v772
        %775 = vrot.lane.b32.xlu0 %v186, 32
        %v776 = vpop.permute.xlu0 %775
        %777 = vrot.lane.b32.xlu0 %v193, 32
        %v778 = vpop.permute.xlu0 %777
        %vm779 = vcmp.lt.s32.totalorder %v213, 32
        %v780 = vsel %vm779, %v776, %v778
        %v781 = vsel %vm779, %v778, %v776
        %782 = vrot.lane.b32.xlu0 %v200, 32
        %v783 = vpop.permute.xlu0 %782
        %784 = vrot.lane.b32.xlu0 %v207, 32
        %v785 = vpop.permute.xlu0 %784
        %v786 = vsel %vm779, %v783, %v785
        %v787 = vsel %vm779, %v785, %v783
        %s788 = scalar_lea.vmem [#allocation5], 18
        %v789 = vld [vmem:[%s788] ss:$8 sm:$0x3]
        %s790 = scalar_lea.vmem [#allocation5], 115
        %v791 = vld [vmem:[%s790] ss:$8 sm:$0x3]
        %v794 = vcombine.low %v781, %v780
        %v796 = vunpack.c.l.s4 1966171168
        %v797 = vunpack.c.0.s8 %v796
        %v798 = vlaneseq
        %v799 = vshrl.u32 %v798, 7
        %v800 = vsub.s32 %v797, %v799
        %v801 = vrot.slane %v794, %v800
        %v803 = vunpack.c.l.s4 1966171168
        %v804 = vunpack.c.0.s8 %v803
        %v805 = vlaneseq
        %v806 = vshrl.u32 %v805, 7
        %v807 = vsub.s32 %v804, %v806
        %v808 = vrot.slane %v801, %v807
        %v810 = vmul.f32 %v789, %v808
        %v813 = vcombine.low %v787, %v786
        %v815 = vunpack.c.l.s4 1966171168
        %v816 = vunpack.c.0.s8 %v815
        %v817 = vlaneseq
        %v818 = vshrl.u32 %v817, 7
        %v819 = vsub.s32 %v816, %v818
        %v820 = vrot.slane %v813, %v819
        %v822 = vunpack.c.l.s4 1966171168
        %v823 = vunpack.c.0.s8 %v822
        %v824 = vlaneseq
        %v825 = vshrl.u32 %v824, 7
        %v826 = vsub.s32 %v823, %v825
        %v827 = vrot.slane %v820, %v826
        %v829 = vmul.f32 %v791, %v827
        %v830 = vadd.f32 %v716, %v810
        %v831 = vadd.f32 %v717, %v829
        %832 = vrot.lane.b32.xlu0 %v186, 31
        %v833 = vpop.permute.xlu0 %832
        %834 = vrot.lane.b32.xlu0 %v193, 31
        %v835 = vpop.permute.xlu0 %834
        %vm836 = vcmp.lt.s32.totalorder %v213, 31
        %v837 = vsel %vm836, %v833, %v835
        %v838 = vsel %vm836, %v835, %v833
        %839 = vrot.lane.b32.xlu0 %v200, 31
        %v840 = vpop.permute.xlu0 %839
        %841 = vrot.lane.b32.xlu0 %v207, 31
        %v842 = vpop.permute.xlu0 %841
        %v843 = vsel %vm836, %v840, %v842
        %v844 = vsel %vm836, %v842, %v840
        %s845 = scalar_lea.vmem [#allocation5], 19
        %v846 = vld [vmem:[%s845] ss:$8 sm:$0x3]
        %s847 = scalar_lea.vmem [#allocation5], 116
        %v848 = vld [vmem:[%s847] ss:$8 sm:$0x3]
        %v851 = vcombine.low %v838, %v837
        %v853 = vunpack.c.l.s4 1966171168
        %v854 = vunpack.c.0.s8 %v853
        %v855 = vlaneseq
        %v856 = vshrl.u32 %v855, 7
        %v857 = vsub.s32 %v854, %v856
        %v858 = vrot.slane %v851, %v857
        %v860 = vunpack.c.l.s4 1966171168
        %v861 = vunpack.c.0.s8 %v860
        %v862 = vlaneseq
        %v863 = vshrl.u32 %v862, 7
        %v864 = vsub.s32 %v861, %v863
        %v865 = vrot.slane %v858, %v864
        %v867 = vmul.f32 %v846, %v865
        %v870 = vcombine.low %v844, %v843
        %v872 = vunpack.c.l.s4 1966171168
        %v873 = vunpack.c.0.s8 %v872
        %v874 = vlaneseq
        %v875 = vshrl.u32 %v874, 7
        %v876 = vsub.s32 %v873, %v875
        %v877 = vrot.slane %v870, %v876
        %v879 = vunpack.c.l.s4 1966171168
        %v880 = vunpack.c.0.s8 %v879
        %v881 = vlaneseq
        %v882 = vshrl.u32 %v881, 7
        %v883 = vsub.s32 %v880, %v882
        %v884 = vrot.slane %v877, %v883
        %v886 = vmul.f32 %v848, %v884
        %v887 = vadd.f32 %v773, %v867
        %v888 = vadd.f32 %v774, %v886
        %889 = vrot.lane.b32.xlu0 %v186, 30
        %v890 = vpop.permute.xlu0 %889
        %891 = vrot.lane.b32.xlu0 %v193, 30
        %v892 = vpop.permute.xlu0 %891
        %vm893 = vcmp.lt.s32.totalorder %v213, 30
        %v894 = vsel %vm893, %v890, %v892
        %v895 = vsel %vm893, %v892, %v890
        %896 = vrot.lane.b32.xlu0 %v200, 30
        %v897 = vpop.permute.xlu0 %896
        %898 = vrot.lane.b32.xlu0 %v207, 30
        %v899 = vpop.permute.xlu0 %898
        %v900 = vsel %vm893, %v897, %v899
        %v901 = vsel %vm893, %v899, %v897
        %s902 = scalar_lea.vmem [#allocation5], 20
        %v903 = vld [vmem:[%s902] ss:$8 sm:$0x3]
        %s904 = scalar_lea.vmem [#allocation5], 117
        %v905 = vld [vmem:[%s904] ss:$8 sm:$0x3]
        %v908 = vcombine.low %v895, %v894
        %v910 = vunpack.c.l.s4 1966171168
        %v911 = vunpack.c.0.s8 %v910
        %v912 = vlaneseq
        %v913 = vshrl.u32 %v912, 7
        %v914 = vsub.s32 %v911, %v913
        %v915 = vrot.slane %v908, %v914
        %v917 = vunpack.c.l.s4 1966171168
        %v918 = vunpack.c.0.s8 %v917
        %v919 = vlaneseq
        %v920 = vshrl.u32 %v919, 7
        %v921 = vsub.s32 %v918, %v920
        %v922 = vrot.slane %v915, %v921
        %v924 = vmul.f32 %v903, %v922
        %v927 = vcombine.low %v901, %v900
        %v929 = vunpack.c.l.s4 1966171168
        %v930 = vunpack.c.0.s8 %v929
        %v931 = vlaneseq
        %v932 = vshrl.u32 %v931, 7
        %v933 = vsub.s32 %v930, %v932
        %v934 = vrot.slane %v927, %v933
        %v936 = vunpack.c.l.s4 1966171168
        %v937 = vunpack.c.0.s8 %v936
        %v938 = vlaneseq
        %v939 = vshrl.u32 %v938, 7
        %v940 = vsub.s32 %v937, %v939
        %v941 = vrot.slane %v934, %v940
        %v943 = vmul.f32 %v905, %v941
        %v944 = vadd.f32 %v830, %v924
        %v945 = vadd.f32 %v831, %v943
        %946 = vrot.lane.b32.xlu0 %v186, 29
        %v947 = vpop.permute.xlu0 %946
        %948 = vrot.lane.b32.xlu0 %v193, 29
        %v949 = vpop.permute.xlu0 %948
        %vm950 = vcmp.lt.s32.totalorder %v213, 29
        %v951 = vsel %vm950, %v947, %v949
        %v952 = vsel %vm950, %v949, %v947
        %953 = vrot.lane.b32.xlu0 %v200, 29
        %v954 = vpop.permute.xlu0 %953
        %955 = vrot.lane.b32.xlu0 %v207, 29
        %v956 = vpop.permute.xlu0 %955
        %v957 = vsel %vm950, %v954, %v956
        %v958 = vsel %vm950, %v956, %v954
        %s959 = scalar_lea.vmem [#allocation5], 21
        %v960 = vld [vmem:[%s959] ss:$8 sm:$0x3]
        %s961 = scalar_lea.vmem [#allocation5], 118
        %v962 = vld [vmem:[%s961] ss:$8 sm:$0x3]
        %v965 = vcombine.low %v952, %v951
        %v967 = vunpack.c.l.s4 1966171168
        %v968 = vunpack.c.0.s8 %v967
        %v969 = vlaneseq
        %v970 = vshrl.u32 %v969, 7
        %v971 = vsub.s32 %v968, %v970
        %v972 = vrot.slane %v965, %v971
        %v974 = vunpack.c.l.s4 1966171168
        %v975 = vunpack.c.0.s8 %v974
        %v976 = vlaneseq
        %v977 = vshrl.u32 %v976, 7
        %v978 = vsub.s32 %v975, %v977
        %v979 = vrot.slane %v972, %v978
        %v981 = vmul.f32 %v960, %v979
        %v984 = vcombine.low %v958, %v957
        %v986 = vunpack.c.l.s4 1966171168
        %v987 = vunpack.c.0.s8 %v986
        %v988 = vlaneseq
        %v989 = vshrl.u32 %v988, 7
        %v990 = vsub.s32 %v987, %v989
        %v991 = vrot.slane %v984, %v990
        %v993 = vunpack.c.l.s4 1966171168
        %v994 = vunpack.c.0.s8 %v993
        %v995 = vlaneseq
        %v996 = vshrl.u32 %v995, 7
        %v997 = vsub.s32 %v994, %v996
        %v998 = vrot.slane %v991, %v997
        %v1000 = vmul.f32 %v962, %v998
        %v1001 = vadd.f32 %v887, %v981
        %v1002 = vadd.f32 %v888, %v1000
        %1003 = vrot.lane.b32.xlu0 %v186, 19
        %v1004 = vpop.permute.xlu0 %1003
        %1005 = vrot.lane.b32.xlu0 %v193, 19
        %v1006 = vpop.permute.xlu0 %1005
        %vm1007 = vcmp.lt.s32.totalorder %v213, 19
        %v1008 = vsel %vm1007, %v1004, %v1006
        %v1009 = vsel %vm1007, %v1006, %v1004
        %1010 = vrot.lane.b32.xlu0 %v200, 19
        %v1011 = vpop.permute.xlu0 %1010
        %1012 = vrot.lane.b32.xlu0 %v207, 19
        %v1013 = vpop.permute.xlu0 %1012
        %v1014 = vsel %vm1007, %v1011, %v1013
        %v1015 = vsel %vm1007, %v1013, %v1011
        %s1016 = scalar_lea.vmem [#allocation5], 22
        %v1017 = vld [vmem:[%s1016] ss:$8 sm:$0x3]
        %s1018 = scalar_lea.vmem [#allocation5], 119
        %v1019 = vld [vmem:[%s1018] ss:$8 sm:$0x3]
        %v1022 = vcombine.low %v1009, %v1008
        %v1024 = vunpack.c.l.s4 1966171168
        %v1025 = vunpack.c.0.s8 %v1024
        %v1026 = vlaneseq
        %v1027 = vshrl.u32 %v1026, 7
        %v1028 = vsub.s32 %v1025, %v1027
        %v1029 = vrot.slane %v1022, %v1028
        %v1031 = vunpack.c.l.s4 1966171168
        %v1032 = vunpack.c.0.s8 %v1031
        %v1033 = vlaneseq
        %v1034 = vshrl.u32 %v1033, 7
        %v1035 = vsub.s32 %v1032, %v1034
        %v1036 = vrot.slane %v1029, %v1035
        %v1038 = vmul.f32 %v1017, %v1036
        %v1041 = vcombine.low %v1015, %v1014
        %v1043 = vunpack.c.l.s4 1966171168
        %v1044 = vunpack.c.0.s8 %v1043
        %v1045 = vlaneseq
        %v1046 = vshrl.u32 %v1045, 7
        %v1047 = vsub.s32 %v1044, %v1046
        %v1048 = vrot.slane %v1041, %v1047
        %v1050 = vunpack.c.l.s4 1966171168
        %v1051 = vunpack.c.0.s8 %v1050
        %v1052 = vlaneseq
        %v1053 = vshrl.u32 %v1052, 7
        %v1054 = vsub.s32 %v1051, %v1053
        %v1055 = vrot.slane %v1048, %v1054
        %v1057 = vmul.f32 %v1019, %v1055
        %v1058 = vadd.f32 %v944, %v1038
        %v1059 = vadd.f32 %v945, %v1057
        %1060 = vrot.lane.b32.xlu0 %v186, 18
        %v1061 = vpop.permute.xlu0 %1060
        %1062 = vrot.lane.b32.xlu0 %v193, 18
        %v1063 = vpop.permute.xlu0 %1062
        %vm1064 = vcmp.lt.s32.totalorder %v213, 18
        %v1065 = vsel %vm1064, %v1061, %v1063
        %v1066 = vsel %vm1064, %v1063, %v1061
        %1067 = vrot.lane.b32.xlu0 %v200, 18
        %v1068 = vpop.permute.xlu0 %1067
        %1069 = vrot.lane.b32.xlu0 %v207, 18
        %v1070 = vpop.permute.xlu0 %1069
        %v1071 = vsel %vm1064, %v1068, %v1070
        %v1072 = vsel %vm1064, %v1070, %v1068
        %s1073 = scalar_lea.vmem [#allocation5], 23
        %v1074 = vld [vmem:[%s1073] ss:$8 sm:$0x3]
        %s1075 = scalar_lea.vmem [#allocation5], 128
        %v1076 = vld [vmem:[%s1075] ss:$8 sm:$0x3]
        %v1079 = vcombine.low %v1066, %v1065
        %v1081 = vunpack.c.l.s4 1966171168
        %v1082 = vunpack.c.0.s8 %v1081
        %v1083 = vlaneseq
        %v1084 = vshrl.u32 %v1083, 7
        %v1085 = vsub.s32 %v1082, %v1084
        %v1086 = vrot.slane %v1079, %v1085
        %v1088 = vunpack.c.l.s4 1966171168
        %v1089 = vunpack.c.0.s8 %v1088
        %v1090 = vlaneseq
        %v1091 = vshrl.u32 %v1090, 7
        %v1092 = vsub.s32 %v1089, %v1091
        %v1093 = vrot.slane %v1086, %v1092
        %v1095 = vmul.f32 %v1074, %v1093
        %v1098 = vcombine.low %v1072, %v1071
        %v1100 = vunpack.c.l.s4 1966171168
        %v1101 = vunpack.c.0.s8 %v1100
        %v1102 = vlaneseq
        %v1103 = vshrl.u32 %v1102, 7
        %v1104 = vsub.s32 %v1101, %v1103
        %v1105 = vrot.slane %v1098, %v1104
        %v1107 = vunpack.c.l.s4 1966171168
        %v1108 = vunpack.c.0.s8 %v1107
        %v1109 = vlaneseq
        %v1110 = vshrl.u32 %v1109, 7
        %v1111 = vsub.s32 %v1108, %v1110
        %v1112 = vrot.slane %v1105, %v1111
        %v1114 = vmul.f32 %v1076, %v1112
        %v1115 = vadd.f32 %v1001, %v1095
        %v1116 = vadd.f32 %v1002, %v1114
        %1117 = vrot.lane.b32.xlu0 %v186, 17
        %v1118 = vpop.permute.xlu0 %1117
        %1119 = vrot.lane.b32.xlu0 %v193, 17
        %v1120 = vpop.permute.xlu0 %1119
        %vm1121 = vcmp.lt.s32.totalorder %v213, 17
        %v1122 = vsel %vm1121, %v1118, %v1120
        %v1123 = vsel %vm1121, %v1120, %v1118
        %1124 = vrot.lane.b32.xlu0 %v200, 17
        %v1125 = vpop.permute.xlu0 %1124
        %1126 = vrot.lane.b32.xlu0 %v207, 17
        %v1127 = vpop.permute.xlu0 %1126
        %v1128 = vsel %vm1121, %v1125, %v1127
        %v1129 = vsel %vm1121, %v1127, %v1125
        %s1130 = scalar_lea.vmem [#allocation5], 32
        %v1131 = vld [vmem:[%s1130] ss:$8 sm:$0x3]
        %s1132 = scalar_lea.vmem [#allocation5], 129
        %v1133 = vld [vmem:[%s1132] ss:$8 sm:$0x3]
        %v1136 = vcombine.low %v1123, %v1122
        %v1138 = vunpack.c.l.s4 1966171168
        %v1139 = vunpack.c.0.s8 %v1138
        %v1140 = vlaneseq
        %v1141 = vshrl.u32 %v1140, 7
        %v1142 = vsub.s32 %v1139, %v1141
        %v1143 = vrot.slane %v1136, %v1142
        %v1145 = vunpack.c.l.s4 1966171168
        %v1146 = vunpack.c.0.s8 %v1145
        %v1147 = vlaneseq
        %v1148 = vshrl.u32 %v1147, 7
        %v1149 = vsub.s32 %v1146, %v1148
        %v1150 = vrot.slane %v1143, %v1149
        %v1152 = vmul.f32 %v1131, %v1150
        %v1155 = vcombine.low %v1129, %v1128
        %v1157 = vunpack.c.l.s4 1966171168
        %v1158 = vunpack.c.0.s8 %v1157
        %v1159 = vlaneseq
        %v1160 = vshrl.u32 %v1159, 7
        %v1161 = vsub.s32 %v1158, %v1160
        %v1162 = vrot.slane %v1155, %v1161
        %v1164 = vunpack.c.l.s4 1966171168
        %v1165 = vunpack.c.0.s8 %v1164
        %v1166 = vlaneseq
        %v1167 = vshrl.u32 %v1166, 7
        %v1168 = vsub.s32 %v1165, %v1167
        %v1169 = vrot.slane %v1162, %v1168
        %v1171 = vmul.f32 %v1133, %v1169
        %v1172 = vadd.f32 %v1058, %v1152
        %v1173 = vadd.f32 %v1059, %v1171
        %1174 = vrot.lane.b32.xlu0 %v186, 16
        %v1175 = vpop.permute.xlu0 %1174
        %1176 = vrot.lane.b32.xlu0 %v193, 16
        %v1177 = vpop.permute.xlu0 %1176
        %vm1178 = vcmp.lt.s32.totalorder %v213, 16
        %v1179 = vsel %vm1178, %v1175, %v1177
        %v1180 = vsel %vm1178, %v1177, %v1175
        %1181 = vrot.lane.b32.xlu0 %v200, 16
        %v1182 = vpop.permute.xlu0 %1181
        %1183 = vrot.lane.b32.xlu0 %v207, 16
        %v1184 = vpop.permute.xlu0 %1183
        %v1185 = vsel %vm1178, %v1182, %v1184
        %v1186 = vsel %vm1178, %v1184, %v1182
        %s1187 = scalar_lea.vmem [#allocation5], 33
        %v1188 = vld [vmem:[%s1187] ss:$8 sm:$0x3]
        %s1189 = scalar_lea.vmem [#allocation5], 130
        %v1190 = vld [vmem:[%s1189] ss:$8 sm:$0x3]
        %v1193 = vcombine.low %v1180, %v1179
        %v1195 = vunpack.c.l.s4 1966171168
        %v1196 = vunpack.c.0.s8 %v1195
        %v1197 = vlaneseq
        %v1198 = vshrl.u32 %v1197, 7
        %v1199 = vsub.s32 %v1196, %v1198
        %v1200 = vrot.slane %v1193, %v1199
        %v1202 = vunpack.c.l.s4 1966171168
        %v1203 = vunpack.c.0.s8 %v1202
        %v1204 = vlaneseq
        %v1205 = vshrl.u32 %v1204, 7
        %v1206 = vsub.s32 %v1203, %v1205
        %v1207 = vrot.slane %v1200, %v1206
        %v1209 = vmul.f32 %v1188, %v1207
        %v1212 = vcombine.low %v1186, %v1185
        %v1214 = vunpack.c.l.s4 1966171168
        %v1215 = vunpack.c.0.s8 %v1214
        %v1216 = vlaneseq
        %v1217 = vshrl.u32 %v1216, 7
        %v1218 = vsub.s32 %v1215, %v1217
        %v1219 = vrot.slane %v1212, %v1218
        %v1221 = vunpack.c.l.s4 1966171168
        %v1222 = vunpack.c.0.s8 %v1221
        %v1223 = vlaneseq
        %v1224 = vshrl.u32 %v1223, 7
        %v1225 = vsub.s32 %v1222, %v1224
        %v1226 = vrot.slane %v1219, %v1225
        %v1228 = vmul.f32 %v1190, %v1226
        %v1229 = vadd.f32 %v1115, %v1209
        %v1230 = vadd.f32 %v1116, %v1228
        %1231 = vrot.lane.b32.xlu0 %v186, 15
        %v1232 = vpop.permute.xlu0 %1231
        %1233 = vrot.lane.b32.xlu0 %v193, 15
        %v1234 = vpop.permute.xlu0 %1233
        %vm1235 = vcmp.lt.s32.totalorder %v213, 15
        %v1236 = vsel %vm1235, %v1232, %v1234
        %v1237 = vsel %vm1235, %v1234, %v1232
        %1238 = vrot.lane.b32.xlu0 %v200, 15
        %v1239 = vpop.permute.xlu0 %1238
        %1240 = vrot.lane.b32.xlu0 %v207, 15
        %v1241 = vpop.permute.xlu0 %1240
        %v1242 = vsel %vm1235, %v1239, %v1241
        %v1243 = vsel %vm1235, %v1241, %v1239
        %s1244 = scalar_lea.vmem [#allocation5], 34
        %v1245 = vld [vmem:[%s1244] ss:$8 sm:$0x3]
        %s1246 = scalar_lea.vmem [#allocation5], 131
        %v1247 = vld [vmem:[%s1246] ss:$8 sm:$0x3]
        %v1250 = vcombine.low %v1237, %v1236
        %v1252 = vunpack.c.l.s4 1966171168
        %v1253 = vunpack.c.0.s8 %v1252
        %v1254 = vlaneseq
        %v1255 = vshrl.u32 %v1254, 7
        %v1256 = vsub.s32 %v1253, %v1255
        %v1257 = vrot.slane %v1250, %v1256
        %v1259 = vunpack.c.l.s4 1966171168
        %v1260 = vunpack.c.0.s8 %v1259
        %v1261 = vlaneseq
        %v1262 = vshrl.u32 %v1261, 7
        %v1263 = vsub.s32 %v1260, %v1262
        %v1264 = vrot.slane %v1257, %v1263
        %v1266 = vmul.f32 %v1245, %v1264
        %v1269 = vcombine.low %v1243, %v1242
        %v1271 = vunpack.c.l.s4 1966171168
        %v1272 = vunpack.c.0.s8 %v1271
        %v1273 = vlaneseq
        %v1274 = vshrl.u32 %v1273, 7
        %v1275 = vsub.s32 %v1272, %v1274
        %v1276 = vrot.slane %v1269, %v1275
        %v1278 = vunpack.c.l.s4 1966171168
        %v1279 = vunpack.c.0.s8 %v1278
        %v1280 = vlaneseq
        %v1281 = vshrl.u32 %v1280, 7
        %v1282 = vsub.s32 %v1279, %v1281
        %v1283 = vrot.slane %v1276, %v1282
        %v1285 = vmul.f32 %v1247, %v1283
        %v1286 = vadd.f32 %v1172, %v1266
        %v1287 = vadd.f32 %v1173, %v1285
        %1288 = vrot.lane.b32.xlu0 %v186, 14
        %v1289 = vpop.permute.xlu0 %1288
        %1290 = vrot.lane.b32.xlu0 %v193, 14
        %v1291 = vpop.permute.xlu0 %1290
        %vm1292 = vcmp.lt.s32.totalorder %v213, 14
        %v1293 = vsel %vm1292, %v1289, %v1291
        %v1294 = vsel %vm1292, %v1291, %v1289
        %1295 = vrot.lane.b32.xlu0 %v200, 14
        %v1296 = vpop.permute.xlu0 %1295
        %1297 = vrot.lane.b32.xlu0 %v207, 14
        %v1298 = vpop.permute.xlu0 %1297
        %v1299 = vsel %vm1292, %v1296, %v1298
        %v1300 = vsel %vm1292, %v1298, %v1296
        %s1301 = scalar_lea.vmem [#allocation5], 35
        %v1302 = vld [vmem:[%s1301] ss:$8 sm:$0x3]
        %s1303 = scalar_lea.vmem [#allocation5], 132
        %v1304 = vld [vmem:[%s1303] ss:$8 sm:$0x3]
        %v1307 = vcombine.low %v1294, %v1293
        %v1309 = vunpack.c.l.s4 1966171168
        %v1310 = vunpack.c.0.s8 %v1309
        %v1311 = vlaneseq
        %v1312 = vshrl.u32 %v1311, 7
        %v1313 = vsub.s32 %v1310, %v1312
        %v1314 = vrot.slane %v1307, %v1313
        %v1316 = vunpack.c.l.s4 1966171168
        %v1317 = vunpack.c.0.s8 %v1316
        %v1318 = vlaneseq
        %v1319 = vshrl.u32 %v1318, 7
        %v1320 = vsub.s32 %v1317, %v1319
        %v1321 = vrot.slane %v1314, %v1320
        %v1323 = vmul.f32 %v1302, %v1321
        %v1326 = vcombine.low %v1300, %v1299
        %v1328 = vunpack.c.l.s4 1966171168
        %v1329 = vunpack.c.0.s8 %v1328
        %v1330 = vlaneseq
        %v1331 = vshrl.u32 %v1330, 7
        %v1332 = vsub.s32 %v1329, %v1331
        %v1333 = vrot.slane %v1326, %v1332
        %v1335 = vunpack.c.l.s4 1966171168
        %v1336 = vunpack.c.0.s8 %v1335
        %v1337 = vlaneseq
        %v1338 = vshrl.u32 %v1337, 7
        %v1339 = vsub.s32 %v1336, %v1338
        %v1340 = vrot.slane %v1333, %v1339
        %v1342 = vmul.f32 %v1304, %v1340
        %v1343 = vadd.f32 %v1229, %v1323
        %v1344 = vadd.f32 %v1230, %v1342
        %1345 = vrot.lane.b32.xlu0 %v186, 13
        %v1346 = vpop.permute.xlu0 %1345
        %1347 = vrot.lane.b32.xlu0 %v193, 13
        %v1348 = vpop.permute.xlu0 %1347
        %vm1349 = vcmp.lt.s32.totalorder %v213, 13
        %v1350 = vsel %vm1349, %v1346, %v1348
        %v1351 = vsel %vm1349, %v1348, %v1346
        %1352 = vrot.lane.b32.xlu0 %v200, 13
        %v1353 = vpop.permute.xlu0 %1352
        %1354 = vrot.lane.b32.xlu0 %v207, 13
        %v1355 = vpop.permute.xlu0 %1354
        %v1356 = vsel %vm1349, %v1353, %v1355
        %v1357 = vsel %vm1349, %v1355, %v1353
        %s1358 = scalar_lea.vmem [#allocation5], 36
        %v1359 = vld [vmem:[%s1358] ss:$8 sm:$0x3]
        %s1360 = scalar_lea.vmem [#allocation5], 133
        %v1361 = vld [vmem:[%s1360] ss:$8 sm:$0x3]
        %v1364 = vcombine.low %v1351, %v1350
        %v1366 = vunpack.c.l.s4 1966171168
        %v1367 = vunpack.c.0.s8 %v1366
        %v1368 = vlaneseq
        %v1369 = vshrl.u32 %v1368, 7
        %v1370 = vsub.s32 %v1367, %v1369
        %v1371 = vrot.slane %v1364, %v1370
        %v1373 = vunpack.c.l.s4 1966171168
        %v1374 = vunpack.c.0.s8 %v1373
        %v1375 = vlaneseq
        %v1376 = vshrl.u32 %v1375, 7
        %v1377 = vsub.s32 %v1374, %v1376
        %v1378 = vrot.slane %v1371, %v1377
        %v1380 = vmul.f32 %v1359, %v1378
        %v1383 = vcombine.low %v1357, %v1356
        %v1385 = vunpack.c.l.s4 1966171168
        %v1386 = vunpack.c.0.s8 %v1385
        %v1387 = vlaneseq
        %v1388 = vshrl.u32 %v1387, 7
        %v1389 = vsub.s32 %v1386, %v1388
        %v1390 = vrot.slane %v1383, %v1389
        %v1392 = vunpack.c.l.s4 1966171168
        %v1393 = vunpack.c.0.s8 %v1392
        %v1394 = vlaneseq
        %v1395 = vshrl.u32 %v1394, 7
        %v1396 = vsub.s32 %v1393, %v1395
        %v1397 = vrot.slane %v1390, %v1396
        %v1399 = vmul.f32 %v1361, %v1397
        %v1400 = vadd.f32 %v1286, %v1380
        %v1401 = vadd.f32 %v1287, %v1399
        %1402 = vrot.lane.b32.xlu0 %v186, 3
        %v1403 = vpop.permute.xlu0 %1402
        %1404 = vrot.lane.b32.xlu0 %v193, 3
        %v1405 = vpop.permute.xlu0 %1404
        %vm1406 = vcmp.lt.s32.totalorder %v213, 3
        %v1407 = vsel %vm1406, %v1403, %v1405
        %v1408 = vsel %vm1406, %v1405, %v1403
        %1409 = vrot.lane.b32.xlu0 %v200, 3
        %v1410 = vpop.permute.xlu0 %1409
        %1411 = vrot.lane.b32.xlu0 %v207, 3
        %v1412 = vpop.permute.xlu0 %1411
        %v1413 = vsel %vm1406, %v1410, %v1412
        %v1414 = vsel %vm1406, %v1412, %v1410
        %s1415 = scalar_lea.vmem [#allocation5], 37
        %v1416 = vld [vmem:[%s1415] ss:$8 sm:$0x3]
        %s1417 = scalar_lea.vmem [#allocation5], 134
        %v1418 = vld [vmem:[%s1417] ss:$8 sm:$0x3]
        %v1421 = vcombine.low %v1408, %v1407
        %v1423 = vunpack.c.l.s4 1966171168
        %v1424 = vunpack.c.0.s8 %v1423
        %v1425 = vlaneseq
        %v1426 = vshrl.u32 %v1425, 7
        %v1427 = vsub.s32 %v1424, %v1426
        %v1428 = vrot.slane %v1421, %v1427
        %v1430 = vunpack.c.l.s4 1966171168
        %v1431 = vunpack.c.0.s8 %v1430
        %v1432 = vlaneseq
        %v1433 = vshrl.u32 %v1432, 7
        %v1434 = vsub.s32 %v1431, %v1433
        %v1435 = vrot.slane %v1428, %v1434
        %v1437 = vmul.f32 %v1416, %v1435
        %v1440 = vcombine.low %v1414, %v1413
        %v1442 = vunpack.c.l.s4 1966171168
        %v1443 = vunpack.c.0.s8 %v1442
        %v1444 = vlaneseq
        %v1445 = vshrl.u32 %v1444, 7
        %v1446 = vsub.s32 %v1443, %v1445
        %v1447 = vrot.slane %v1440, %v1446
        %v1449 = vunpack.c.l.s4 1966171168
        %v1450 = vunpack.c.0.s8 %v1449
        %v1451 = vlaneseq
        %v1452 = vshrl.u32 %v1451, 7
        %v1453 = vsub.s32 %v1450, %v1452
        %v1454 = vrot.slane %v1447, %v1453
        %v1456 = vmul.f32 %v1418, %v1454
        %v1457 = vadd.f32 %v1343, %v1437
        %v1458 = vadd.f32 %v1344, %v1456
        %1459 = vrot.lane.b32.xlu0 %v186, 2
        %v1460 = vpop.permute.xlu0 %1459
        %1461 = vrot.lane.b32.xlu0 %v193, 2
        %v1462 = vpop.permute.xlu0 %1461
        %vm1463 = vcmp.lt.s32.totalorder %v213, 2
        %v1464 = vsel %vm1463, %v1460, %v1462
        %v1465 = vsel %vm1463, %v1462, %v1460
        %1466 = vrot.lane.b32.xlu0 %v200, 2
        %v1467 = vpop.permute.xlu0 %1466
        %1468 = vrot.lane.b32.xlu0 %v207, 2
        %v1469 = vpop.permute.xlu0 %1468
        %v1470 = vsel %vm1463, %v1467, %v1469
        %v1471 = vsel %vm1463, %v1469, %v1467
        %s1472 = scalar_lea.vmem [#allocation5], 38
        %v1473 = vld [vmem:[%s1472] ss:$8 sm:$0x3]
        %s1474 = scalar_lea.vmem [#allocation5], 135
        %v1475 = vld [vmem:[%s1474] ss:$8 sm:$0x3]
        %v1478 = vcombine.low %v1465, %v1464
        %v1480 = vunpack.c.l.s4 1966171168
        %v1481 = vunpack.c.0.s8 %v1480
        %v1482 = vlaneseq
        %v1483 = vshrl.u32 %v1482, 7
        %v1484 = vsub.s32 %v1481, %v1483
        %v1485 = vrot.slane %v1478, %v1484
        %v1487 = vunpack.c.l.s4 1966171168
        %v1488 = vunpack.c.0.s8 %v1487
        %v1489 = vlaneseq
        %v1490 = vshrl.u32 %v1489, 7
        %v1491 = vsub.s32 %v1488, %v1490
        %v1492 = vrot.slane %v1485, %v1491
        %v1494 = vmul.f32 %v1473, %v1492
        %v1497 = vcombine.low %v1471, %v1470
        %v1499 = vunpack.c.l.s4 1966171168
        %v1500 = vunpack.c.0.s8 %v1499
        %v1501 = vlaneseq
        %v1502 = vshrl.u32 %v1501, 7
        %v1503 = vsub.s32 %v1500, %v1502
        %v1504 = vrot.slane %v1497, %v1503
        %v1506 = vunpack.c.l.s4 1966171168
        %v1507 = vunpack.c.0.s8 %v1506
        %v1508 = vlaneseq
        %v1509 = vshrl.u32 %v1508, 7
        %v1510 = vsub.s32 %v1507, %v1509
        %v1511 = vrot.slane %v1504, %v1510
        %v1513 = vmul.f32 %v1475, %v1511
        %v1514 = vadd.f32 %v1400, %v1494
        %v1515 = vadd.f32 %v1401, %v1513
        %1516 = vrot.lane.b32.xlu0 %v186, 1
        %v1517 = vpop.permute.xlu0 %1516
        %1518 = vrot.lane.b32.xlu0 %v193, 1
        %v1519 = vpop.permute.xlu0 %1518
        %vm1520 = vcmp.lt.s32.totalorder %v213, 1
        %v1521 = vsel %vm1520, %v1517, %v1519
        %v1522 = vsel %vm1520, %v1519, %v1517
        %1523 = vrot.lane.b32.xlu0 %v200, 1
        %v1524 = vpop.permute.xlu0 %1523
        %1525 = vrot.lane.b32.xlu0 %v207, 1
        %v1526 = vpop.permute.xlu0 %1525
        %v1527 = vsel %vm1520, %v1524, %v1526
        %v1528 = vsel %vm1520, %v1526, %v1524
        %s1529 = scalar_lea.vmem [#allocation5], 39
        %v1530 = vld [vmem:[%s1529] ss:$8 sm:$0x3]
        %s1531 = scalar_lea.vmem [#allocation5], 144
        %v1532 = vld [vmem:[%s1531] ss:$8 sm:$0x3]
        %v1535 = vcombine.low %v1522, %v1521
        %v1537 = vunpack.c.l.s4 1966171168
        %v1538 = vunpack.c.0.s8 %v1537
        %v1539 = vlaneseq
        %v1540 = vshrl.u32 %v1539, 7
        %v1541 = vsub.s32 %v1538, %v1540
        %v1542 = vrot.slane %v1535, %v1541
        %v1544 = vunpack.c.l.s4 1966171168
        %v1545 = vunpack.c.0.s8 %v1544
        %v1546 = vlaneseq
        %v1547 = vshrl.u32 %v1546, 7
        %v1548 = vsub.s32 %v1545, %v1547
        %v1549 = vrot.slane %v1542, %v1548
        %v1551 = vmul.f32 %v1530, %v1549
        %v1554 = vcombine.low %v1528, %v1527
        %v1556 = vunpack.c.l.s4 1966171168
        %v1557 = vunpack.c.0.s8 %v1556
        %v1558 = vlaneseq
        %v1559 = vshrl.u32 %v1558, 7
        %v1560 = vsub.s32 %v1557, %v1559
        %v1561 = vrot.slane %v1554, %v1560
        %v1563 = vunpack.c.l.s4 1966171168
        %v1564 = vunpack.c.0.s8 %v1563
        %v1565 = vlaneseq
        %v1566 = vshrl.u32 %v1565, 7
        %v1567 = vsub.s32 %v1564, %v1566
        %v1568 = vrot.slane %v1561, %v1567
        %v1570 = vmul.f32 %v1532, %v1568
        %v1571 = vadd.f32 %v1457, %v1551
        %v1572 = vadd.f32 %v1458, %v1570
        %s1573 = scalar_lea.vmem [#allocation5], 48
        %v1574 = vld [vmem:[%s1573] ss:$8 sm:$0x3]
        %s1575 = scalar_lea.vmem [#allocation5], 145
        %v1576 = vld [vmem:[%s1575] ss:$8 sm:$0x3]
        %v1579 = vcombine.low %v186, %v193
        %v1581 = vunpack.c.l.s4 1966171168
        %v1582 = vunpack.c.0.s8 %v1581
        %v1583 = vlaneseq
        %v1584 = vshrl.u32 %v1583, 7
        %v1585 = vsub.s32 %v1582, %v1584
        %v1586 = vrot.slane %v1579, %v1585
        %v1588 = vunpack.c.l.s4 1966171168
        %v1589 = vunpack.c.0.s8 %v1588
        %v1590 = vlaneseq
        %v1591 = vshrl.u32 %v1590, 7
        %v1592 = vsub.s32 %v1589, %v1591
        %v1593 = vrot.slane %v1586, %v1592
        %v1595 = vmul.f32 %v1574, %v1593
        %v1598 = vcombine.low %v200, %v207
        %v1600 = vunpack.c.l.s4 1966171168
        %v1601 = vunpack.c.0.s8 %v1600
        %v1602 = vlaneseq
        %v1603 = vshrl.u32 %v1602, 7
        %v1604 = vsub.s32 %v1601, %v1603
        %v1605 = vrot.slane %v1598, %v1604
        %v1607 = vunpack.c.l.s4 1966171168
        %v1608 = vunpack.c.0.s8 %v1607
        %v1609 = vlaneseq
        %v1610 = vshrl.u32 %v1609, 7
        %v1611 = vsub.s32 %v1608, %v1610
        %v1612 = vrot.slane %v1605, %v1611
        %v1614 = vmul.f32 %v1576, %v1612
        %v1615 = vadd.f32 %v1514, %v1595
        %v1616 = vadd.f32 %v1515, %v1614
        %1617 = vrot.lane.b32.xlu0 %v186, 127
        %v1618 = vpop.permute.xlu0 %1617
        %1619 = vrot.lane.b32.xlu0 %v193, 127
        %v1620 = vpop.permute.xlu0 %1619
        %vm1621 = vcmp.lt.s32.totalorder %v213, 127
        %v1622 = vsel %vm1621, %v1618, %v1620
        %v1623 = vsel %vm1621, %v1620, %v1618
        %1624 = vrot.lane.b32.xlu0 %v200, 127
        %v1625 = vpop.permute.xlu0 %1624
        %1626 = vrot.lane.b32.xlu0 %v207, 127
        %v1627 = vpop.permute.xlu0 %1626
        %v1628 = vsel %vm1621, %v1625, %v1627
        %v1629 = vsel %vm1621, %v1627, %v1625
        %s1630 = scalar_lea.vmem [#allocation5], 49
        %v1631 = vld [vmem:[%s1630] ss:$8 sm:$0x3]
        %s1632 = scalar_lea.vmem [#allocation5], 146
        %v1633 = vld [vmem:[%s1632] ss:$8 sm:$0x3]
        %v1636 = vcombine.low %v1622, %v1623
        %v1638 = vunpack.c.l.s4 1966171168
        %v1639 = vunpack.c.0.s8 %v1638
        %v1640 = vlaneseq
        %v1641 = vshrl.u32 %v1640, 7
        %v1642 = vsub.s32 %v1639, %v1641
        %v1643 = vrot.slane %v1636, %v1642
        %v1645 = vunpack.c.l.s4 1966171168
        %v1646 = vunpack.c.0.s8 %v1645
        %v1647 = vlaneseq
        %v1648 = vshrl.u32 %v1647, 7
        %v1649 = vsub.s32 %v1646, %v1648
        %v1650 = vrot.slane %v1643, %v1649
        %v1652 = vmul.f32 %v1631, %v1650
        %v1655 = vcombine.low %v1628, %v1629
        %v1657 = vunpack.c.l.s4 1966171168
        %v1658 = vunpack.c.0.s8 %v1657
        %v1659 = vlaneseq
        %v1660 = vshrl.u32 %v1659, 7
        %v1661 = vsub.s32 %v1658, %v1660
        %v1662 = vrot.slane %v1655, %v1661
        %v1664 = vunpack.c.l.s4 1966171168
        %v1665 = vunpack.c.0.s8 %v1664
        %v1666 = vlaneseq
        %v1667 = vshrl.u32 %v1666, 7
        %v1668 = vsub.s32 %v1665, %v1667
        %v1669 = vrot.slane %v1662, %v1668
        %v1671 = vmul.f32 %v1633, %v1669
        %v1672 = vadd.f32 %v1571, %v1652
        %v1673 = vadd.f32 %v1572, %v1671
        %1674 = vrot.lane.b32.xlu0 %v186, 126
        %v1675 = vpop.permute.xlu0 %1674
        %1676 = vrot.lane.b32.xlu0 %v193, 126
        %v1677 = vpop.permute.xlu0 %1676
        %vm1678 = vcmp.lt.s32.totalorder %v213, 126
        %v1679 = vsel %vm1678, %v1675, %v1677
        %v1680 = vsel %vm1678, %v1677, %v1675
        %1681 = vrot.lane.b32.xlu0 %v200, 126
        %v1682 = vpop.permute.xlu0 %1681
        %1683 = vrot.lane.b32.xlu0 %v207, 126
        %v1684 = vpop.permute.xlu0 %1683
        %v1685 = vsel %vm1678, %v1682, %v1684
        %v1686 = vsel %vm1678, %v1684, %v1682
        %s1687 = scalar_lea.vmem [#allocation5], 50
        %v1688 = vld [vmem:[%s1687] ss:$8 sm:$0x3]
        %s1689 = scalar_lea.vmem [#allocation5], 147
        %v1690 = vld [vmem:[%s1689] ss:$8 sm:$0x3]
        %v1693 = vcombine.low %v1679, %v1680
        %v1695 = vunpack.c.l.s4 1966171168
        %v1696 = vunpack.c.0.s8 %v1695
        %v1697 = vlaneseq
        %v1698 = vshrl.u32 %v1697, 7
        %v1699 = vsub.s32 %v1696, %v1698
        %v1700 = vrot.slane %v1693, %v1699
        %v1702 = vunpack.c.l.s4 1966171168
        %v1703 = vunpack.c.0.s8 %v1702
        %v1704 = vlaneseq
        %v1705 = vshrl.u32 %v1704, 7
        %v1706 = vsub.s32 %v1703, %v1705
        %v1707 = vrot.slane %v1700, %v1706
        %v1709 = vmul.f32 %v1688, %v1707
        %v1712 = vcombine.low %v1685, %v1686
        %v1714 = vunpack.c.l.s4 1966171168
        %v1715 = vunpack.c.0.s8 %v1714
        %v1716 = vlaneseq
        %v1717 = vshrl.u32 %v1716, 7
        %v1718 = vsub.s32 %v1715, %v1717
        %v1719 = vrot.slane %v1712, %v1718
        %v1721 = vunpack.c.l.s4 1966171168
        %v1722 = vunpack.c.0.s8 %v1721
        %v1723 = vlaneseq
        %v1724 = vshrl.u32 %v1723, 7
        %v1725 = vsub.s32 %v1722, %v1724
        %v1726 = vrot.slane %v1719, %v1725
        %v1728 = vmul.f32 %v1690, %v1726
        %v1729 = vadd.f32 %v1615, %v1709
        %v1730 = vadd.f32 %v1616, %v1728
        %1731 = vrot.lane.b32.xlu0 %v186, 125
        %v1732 = vpop.permute.xlu0 %1731
        %1733 = vrot.lane.b32.xlu0 %v193, 125
        %v1734 = vpop.permute.xlu0 %1733
        %vm1735 = vcmp.lt.s32.totalorder %v213, 125
        %v1736 = vsel %vm1735, %v1732, %v1734
        %v1737 = vsel %vm1735, %v1734, %v1732
        %1738 = vrot.lane.b32.xlu0 %v200, 125
        %v1739 = vpop.permute.xlu0 %1738
        %1740 = vrot.lane.b32.xlu0 %v207, 125
        %v1741 = vpop.permute.xlu0 %1740
        %v1742 = vsel %vm1735, %v1739, %v1741
        %v1743 = vsel %vm1735, %v1741, %v1739
        %s1744 = scalar_lea.vmem [#allocation5], 51
        %v1745 = vld [vmem:[%s1744] ss:$8 sm:$0x3]
        %s1746 = scalar_lea.vmem [#allocation5], 148
        %v1747 = vld [vmem:[%s1746] ss:$8 sm:$0x3]
        %v1750 = vcombine.low %v1736, %v1737
        %v1752 = vunpack.c.l.s4 1966171168
        %v1753 = vunpack.c.0.s8 %v1752
        %v1754 = vlaneseq
        %v1755 = vshrl.u32 %v1754, 7
        %v1756 = vsub.s32 %v1753, %v1755
        %v1757 = vrot.slane %v1750, %v1756
        %v1759 = vunpack.c.l.s4 1966171168
        %v1760 = vunpack.c.0.s8 %v1759
        %v1761 = vlaneseq
        %v1762 = vshrl.u32 %v1761, 7
        %v1763 = vsub.s32 %v1760, %v1762
        %v1764 = vrot.slane %v1757, %v1763
        %v1766 = vmul.f32 %v1745, %v1764
        %v1769 = vcombine.low %v1742, %v1743
        %v1771 = vunpack.c.l.s4 1966171168
        %v1772 = vunpack.c.0.s8 %v1771
        %v1773 = vlaneseq
        %v1774 = vshrl.u32 %v1773, 7
        %v1775 = vsub.s32 %v1772, %v1774
        %v1776 = vrot.slane %v1769, %v1775
        %v1778 = vunpack.c.l.s4 1966171168
        %v1779 = vunpack.c.0.s8 %v1778
        %v1780 = vlaneseq
        %v1781 = vshrl.u32 %v1780, 7
        %v1782 = vsub.s32 %v1779, %v1781
        %v1783 = vrot.slane %v1776, %v1782
        %v1785 = vmul.f32 %v1747, %v1783
        %v1786 = vadd.f32 %v1672, %v1766
        %v1787 = vadd.f32 %v1673, %v1785
        %1788 = vrot.lane.b32.xlu0 %v186, 115
        %v1789 = vpop.permute.xlu0 %1788
        %1790 = vrot.lane.b32.xlu0 %v193, 115
        %v1791 = vpop.permute.xlu0 %1790
        %vm1792 = vcmp.lt.s32.totalorder %v213, 115
        %v1793 = vsel %vm1792, %v1789, %v1791
        %v1794 = vsel %vm1792, %v1791, %v1789
        %1795 = vrot.lane.b32.xlu0 %v200, 115
        %v1796 = vpop.permute.xlu0 %1795
        %1797 = vrot.lane.b32.xlu0 %v207, 115
        %v1798 = vpop.permute.xlu0 %1797
        %v1799 = vsel %vm1792, %v1796, %v1798
        %v1800 = vsel %vm1792, %v1798, %v1796
        %s1801 = scalar_lea.vmem [#allocation5], 52
        %v1802 = vld [vmem:[%s1801] ss:$8 sm:$0x3]
        %s1803 = scalar_lea.vmem [#allocation5], 149
        %v1804 = vld [vmem:[%s1803] ss:$8 sm:$0x3]
        %v1807 = vcombine.low %v1793, %v1794
        %v1809 = vunpack.c.l.s4 1966171168
        %v1810 = vunpack.c.0.s8 %v1809
        %v1811 = vlaneseq
        %v1812 = vshrl.u32 %v1811, 7
        %v1813 = vsub.s32 %v1810, %v1812
        %v1814 = vrot.slane %v1807, %v1813
        %v1816 = vunpack.c.l.s4 1966171168
        %v1817 = vunpack.c.0.s8 %v1816
        %v1818 = vlaneseq
        %v1819 = vshrl.u32 %v1818, 7
        %v1820 = vsub.s32 %v1817, %v1819
        %v1821 = vrot.slane %v1814, %v1820
        %v1823 = vmul.f32 %v1802, %v1821
        %v1826 = vcombine.low %v1799, %v1800
        %v1828 = vunpack.c.l.s4 1966171168
        %v1829 = vunpack.c.0.s8 %v1828
        %v1830 = vlaneseq
        %v1831 = vshrl.u32 %v1830, 7
        %v1832 = vsub.s32 %v1829, %v1831
        %v1833 = vrot.slane %v1826, %v1832
        %v1835 = vunpack.c.l.s4 1966171168
        %v1836 = vunpack.c.0.s8 %v1835
        %v1837 = vlaneseq
        %v1838 = vshrl.u32 %v1837, 7
        %v1839 = vsub.s32 %v1836, %v1838
        %v1840 = vrot.slane %v1833, %v1839
        %v1842 = vmul.f32 %v1804, %v1840
        %v1843 = vadd.f32 %v1729, %v1823
        %v1844 = vadd.f32 %v1730, %v1842
        %1845 = vrot.lane.b32.xlu0 %v186, 114
        %v1846 = vpop.permute.xlu0 %1845
        %1847 = vrot.lane.b32.xlu0 %v193, 114
        %v1848 = vpop.permute.xlu0 %1847
        %vm1849 = vcmp.lt.s32.totalorder %v213, 114
        %v1850 = vsel %vm1849, %v1846, %v1848
        %v1851 = vsel %vm1849, %v1848, %v1846
        %1852 = vrot.lane.b32.xlu0 %v200, 114
        %v1853 = vpop.permute.xlu0 %1852
        %1854 = vrot.lane.b32.xlu0 %v207, 114
        %v1855 = vpop.permute.xlu0 %1854
        %v1856 = vsel %vm1849, %v1853, %v1855
        %v1857 = vsel %vm1849, %v1855, %v1853
        %s1858 = scalar_lea.vmem [#allocation5], 53
        %v1859 = vld [vmem:[%s1858] ss:$8 sm:$0x3]
        %s1860 = scalar_lea.vmem [#allocation5], 150
        %v1861 = vld [vmem:[%s1860] ss:$8 sm:$0x3]
        %v1864 = vcombine.low %v1850, %v1851
        %v1866 = vunpack.c.l.s4 1966171168
        %v1867 = vunpack.c.0.s8 %v1866
        %v1868 = vlaneseq
        %v1869 = vshrl.u32 %v1868, 7
        %v1870 = vsub.s32 %v1867, %v1869
        %v1871 = vrot.slane %v1864, %v1870
        %v1873 = vunpack.c.l.s4 1966171168
        %v1874 = vunpack.c.0.s8 %v1873
        %v1875 = vlaneseq
        %v1876 = vshrl.u32 %v1875, 7
        %v1877 = vsub.s32 %v1874, %v1876
        %v1878 = vrot.slane %v1871, %v1877
        %v1880 = vmul.f32 %v1859, %v1878
        %v1883 = vcombine.low %v1856, %v1857
        %v1885 = vunpack.c.l.s4 1966171168
        %v1886 = vunpack.c.0.s8 %v1885
        %v1887 = vlaneseq
        %v1888 = vshrl.u32 %v1887, 7
        %v1889 = vsub.s32 %v1886, %v1888
        %v1890 = vrot.slane %v1883, %v1889
        %v1892 = vunpack.c.l.s4 1966171168
        %v1893 = vunpack.c.0.s8 %v1892
        %v1894 = vlaneseq
        %v1895 = vshrl.u32 %v1894, 7
        %v1896 = vsub.s32 %v1893, %v1895
        %v1897 = vrot.slane %v1890, %v1896
        %v1899 = vmul.f32 %v1861, %v1897
        %v1900 = vadd.f32 %v1786, %v1880
        %v1901 = vadd.f32 %v1787, %v1899
        %1902 = vrot.lane.b32.xlu0 %v186, 113
        %v1903 = vpop.permute.xlu0 %1902
        %1904 = vrot.lane.b32.xlu0 %v193, 113
        %v1905 = vpop.permute.xlu0 %1904
        %vm1906 = vcmp.lt.s32.totalorder %v213, 113
        %v1907 = vsel %vm1906, %v1903, %v1905
        %v1908 = vsel %vm1906, %v1905, %v1903
        %1909 = vrot.lane.b32.xlu0 %v200, 113
        %v1910 = vpop.permute.xlu0 %1909
        %1911 = vrot.lane.b32.xlu0 %v207, 113
        %v1912 = vpop.permute.xlu0 %1911
        %v1913 = vsel %vm1906, %v1910, %v1912
        %v1914 = vsel %vm1906, %v1912, %v1910
        %s1915 = scalar_lea.vmem [#allocation5], 54
        %v1916 = vld [vmem:[%s1915] ss:$8 sm:$0x3]
        %s1917 = scalar_lea.vmem [#allocation5], 151
        %v1918 = vld [vmem:[%s1917] ss:$8 sm:$0x3]
        %v1921 = vcombine.low %v1907, %v1908
        %v1923 = vunpack.c.l.s4 1966171168
        %v1924 = vunpack.c.0.s8 %v1923
        %v1925 = vlaneseq
        %v1926 = vshrl.u32 %v1925, 7
        %v1927 = vsub.s32 %v1924, %v1926
        %v1928 = vrot.slane %v1921, %v1927
        %v1930 = vunpack.c.l.s4 1966171168
        %v1931 = vunpack.c.0.s8 %v1930
        %v1932 = vlaneseq
        %v1933 = vshrl.u32 %v1932, 7
        %v1934 = vsub.s32 %v1931, %v1933
        %v1935 = vrot.slane %v1928, %v1934
        %v1937 = vmul.f32 %v1916, %v1935
        %v1940 = vcombine.low %v1913, %v1914
        %v1942 = vunpack.c.l.s4 1966171168
        %v1943 = vunpack.c.0.s8 %v1942
        %v1944 = vlaneseq
        %v1945 = vshrl.u32 %v1944, 7
        %v1946 = vsub.s32 %v1943, %v1945
        %v1947 = vrot.slane %v1940, %v1946
        %v1949 = vunpack.c.l.s4 1966171168
        %v1950 = vunpack.c.0.s8 %v1949
        %v1951 = vlaneseq
        %v1952 = vshrl.u32 %v1951, 7
        %v1953 = vsub.s32 %v1950, %v1952
        %v1954 = vrot.slane %v1947, %v1953
        %v1956 = vmul.f32 %v1918, %v1954
        %v1957 = vadd.f32 %v1843, %v1937
        %v1958 = vadd.f32 %v1844, %v1956
        %1959 = vrot.lane.b32.xlu0 %v186, 112
        %v1960 = vpop.permute.xlu0 %1959
        %1961 = vrot.lane.b32.xlu0 %v193, 112
        %v1962 = vpop.permute.xlu0 %1961
        %vm1963 = vcmp.lt.s32.totalorder %v213, 112
        %v1964 = vsel %vm1963, %v1960, %v1962
        %v1965 = vsel %vm1963, %v1962, %v1960
        %1966 = vrot.lane.b32.xlu0 %v200, 112
        %v1967 = vpop.permute.xlu0 %1966
        %1968 = vrot.lane.b32.xlu0 %v207, 112
        %v1969 = vpop.permute.xlu0 %1968
        %v1970 = vsel %vm1963, %v1967, %v1969
        %v1971 = vsel %vm1963, %v1969, %v1967
        %s1972 = scalar_lea.vmem [#allocation5], 55
        %v1973 = vld [vmem:[%s1972] ss:$8 sm:$0x3]
        %s1974 = scalar_lea.vmem [#allocation5], 160
        %v1975 = vld [vmem:[%s1974] ss:$8 sm:$0x3]
        %v1978 = vcombine.low %v1964, %v1965
        %v1980 = vunpack.c.l.s4 1966171168
        %v1981 = vunpack.c.0.s8 %v1980
        %v1982 = vlaneseq
        %v1983 = vshrl.u32 %v1982, 7
        %v1984 = vsub.s32 %v1981, %v1983
        %v1985 = vrot.slane %v1978, %v1984
        %v1987 = vunpack.c.l.s4 1966171168
        %v1988 = vunpack.c.0.s8 %v1987
        %v1989 = vlaneseq
        %v1990 = vshrl.u32 %v1989, 7
        %v1991 = vsub.s32 %v1988, %v1990
        %v1992 = vrot.slane %v1985, %v1991
        %v1994 = vmul.f32 %v1973, %v1992
        %v1997 = vcombine.low %v1970, %v1971
        %v1999 = vunpack.c.l.s4 1966171168
        %v2000 = vunpack.c.0.s8 %v1999
        %v2001 = vlaneseq
        %v2002 = vshrl.u32 %v2001, 7
        %v2003 = vsub.s32 %v2000, %v2002
        %v2004 = vrot.slane %v1997, %v2003
        %v2006 = vunpack.c.l.s4 1966171168
        %v2007 = vunpack.c.0.s8 %v2006
        %v2008 = vlaneseq
        %v2009 = vshrl.u32 %v2008, 7
        %v2010 = vsub.s32 %v2007, %v2009
        %v2011 = vrot.slane %v2004, %v2010
        %v2013 = vmul.f32 %v1975, %v2011
        %v2014 = vadd.f32 %v1900, %v1994
        %v2015 = vadd.f32 %v1901, %v2013
        %2016 = vrot.lane.b32.xlu0 %v186, 111
        %v2017 = vpop.permute.xlu0 %2016
        %2018 = vrot.lane.b32.xlu0 %v193, 111
        %v2019 = vpop.permute.xlu0 %2018
        %vm2020 = vcmp.lt.s32.totalorder %v213, 111
        %v2021 = vsel %vm2020, %v2017, %v2019
        %v2022 = vsel %vm2020, %v2019, %v2017
        %2023 = vrot.lane.b32.xlu0 %v200, 111
        %v2024 = vpop.permute.xlu0 %2023
        %2025 = vrot.lane.b32.xlu0 %v207, 111
        %v2026 = vpop.permute.xlu0 %2025
        %v2027 = vsel %vm2020, %v2024, %v2026
        %v2028 = vsel %vm2020, %v2026, %v2024
        %s2029 = scalar_lea.vmem [#allocation5], 64
        %v2030 = vld [vmem:[%s2029] ss:$8 sm:$0x3]
        %s2031 = scalar_lea.vmem [#allocation5], 161
        %v2032 = vld [vmem:[%s2031] ss:$8 sm:$0x3]
        %v2035 = vcombine.low %v2021, %v2022
        %v2037 = vunpack.c.l.s4 1966171168
        %v2038 = vunpack.c.0.s8 %v2037
        %v2039 = vlaneseq
        %v2040 = vshrl.u32 %v2039, 7
        %v2041 = vsub.s32 %v2038, %v2040
        %v2042 = vrot.slane %v2035, %v2041
        %v2044 = vunpack.c.l.s4 1966171168
        %v2045 = vunpack.c.0.s8 %v2044
        %v2046 = vlaneseq
        %v2047 = vshrl.u32 %v2046, 7
        %v2048 = vsub.s32 %v2045, %v2047
        %v2049 = vrot.slane %v2042, %v2048
        %v2051 = vmul.f32 %v2030, %v2049
        %v2054 = vcombine.low %v2027, %v2028
        %v2056 = vunpack.c.l.s4 1966171168
        %v2057 = vunpack.c.0.s8 %v2056
        %v2058 = vlaneseq
        %v2059 = vshrl.u32 %v2058, 7
        %v2060 = vsub.s32 %v2057, %v2059
        %v2061 = vrot.slane %v2054, %v2060
        %v2063 = vunpack.c.l.s4 1966171168
        %v2064 = vunpack.c.0.s8 %v2063
        %v2065 = vlaneseq
        %v2066 = vshrl.u32 %v2065, 7
        %v2067 = vsub.s32 %v2064, %v2066
        %v2068 = vrot.slane %v2061, %v2067
        %v2070 = vmul.f32 %v2032, %v2068
        %v2071 = vadd.f32 %v1957, %v2051
        %v2072 = vadd.f32 %v1958, %v2070
        %2073 = vrot.lane.b32.xlu0 %v186, 110
        %v2074 = vpop.permute.xlu0 %2073
        %2075 = vrot.lane.b32.xlu0 %v193, 110
        %v2076 = vpop.permute.xlu0 %2075
        %vm2077 = vcmp.lt.s32.totalorder %v213, 110
        %v2078 = vsel %vm2077, %v2074, %v2076
        %v2079 = vsel %vm2077, %v2076, %v2074
        %2080 = vrot.lane.b32.xlu0 %v200, 110
        %v2081 = vpop.permute.xlu0 %2080
        %2082 = vrot.lane.b32.xlu0 %v207, 110
        %v2083 = vpop.permute.xlu0 %2082
        %v2084 = vsel %vm2077, %v2081, %v2083
        %v2085 = vsel %vm2077, %v2083, %v2081
        %s2086 = scalar_lea.vmem [#allocation5], 65
        %v2087 = vld [vmem:[%s2086] ss:$8 sm:$0x3]
        %s2088 = scalar_lea.vmem [#allocation5], 162
        %v2089 = vld [vmem:[%s2088] ss:$8 sm:$0x3]
        %v2092 = vcombine.low %v2078, %v2079
        %v2094 = vunpack.c.l.s4 1966171168
        %v2095 = vunpack.c.0.s8 %v2094
        %v2096 = vlaneseq
        %v2097 = vshrl.u32 %v2096, 7
        %v2098 = vsub.s32 %v2095, %v2097
        %v2099 = vrot.slane %v2092, %v2098
        %v2101 = vunpack.c.l.s4 1966171168
        %v2102 = vunpack.c.0.s8 %v2101
        %v2103 = vlaneseq
        %v2104 = vshrl.u32 %v2103, 7
        %v2105 = vsub.s32 %v2102, %v2104
        %v2106 = vrot.slane %v2099, %v2105
        %v2108 = vmul.f32 %v2087, %v2106
        %v2111 = vcombine.low %v2084, %v2085
        %v2113 = vunpack.c.l.s4 1966171168
        %v2114 = vunpack.c.0.s8 %v2113
        %v2115 = vlaneseq
        %v2116 = vshrl.u32 %v2115, 7
        %v2117 = vsub.s32 %v2114, %v2116
        %v2118 = vrot.slane %v2111, %v2117
        %v2120 = vunpack.c.l.s4 1966171168
        %v2121 = vunpack.c.0.s8 %v2120
        %v2122 = vlaneseq
        %v2123 = vshrl.u32 %v2122, 7
        %v2124 = vsub.s32 %v2121, %v2123
        %v2125 = vrot.slane %v2118, %v2124
        %v2127 = vmul.f32 %v2089, %v2125
        %v2128 = vadd.f32 %v2014, %v2108
        %v2129 = vadd.f32 %v2015, %v2127
        %2130 = vrot.lane.b32.xlu0 %v186, 109
        %v2131 = vpop.permute.xlu0 %2130
        %2132 = vrot.lane.b32.xlu0 %v193, 109
        %v2133 = vpop.permute.xlu0 %2132
        %vm2134 = vcmp.lt.s32.totalorder %v213, 109
        %v2135 = vsel %vm2134, %v2131, %v2133
        %v2136 = vsel %vm2134, %v2133, %v2131
        %2137 = vrot.lane.b32.xlu0 %v200, 109
        %v2138 = vpop.permute.xlu0 %2137
        %2139 = vrot.lane.b32.xlu0 %v207, 109
        %v2140 = vpop.permute.xlu0 %2139
        %v2141 = vsel %vm2134, %v2138, %v2140
        %v2142 = vsel %vm2134, %v2140, %v2138
        %s2143 = scalar_lea.vmem [#allocation5], 66
        %v2144 = vld [vmem:[%s2143] ss:$8 sm:$0x3]
        %s2145 = scalar_lea.vmem [#allocation5], 163
        %v2146 = vld [vmem:[%s2145] ss:$8 sm:$0x3]
        %v2149 = vcombine.low %v2135, %v2136
        %v2151 = vunpack.c.l.s4 1966171168
        %v2152 = vunpack.c.0.s8 %v2151
        %v2153 = vlaneseq
        %v2154 = vshrl.u32 %v2153, 7
        %v2155 = vsub.s32 %v2152, %v2154
        %v2156 = vrot.slane %v2149, %v2155
        %v2158 = vunpack.c.l.s4 1966171168
        %v2159 = vunpack.c.0.s8 %v2158
        %v2160 = vlaneseq
        %v2161 = vshrl.u32 %v2160, 7
        %v2162 = vsub.s32 %v2159, %v2161
        %v2163 = vrot.slane %v2156, %v2162
        %v2165 = vmul.f32 %v2144, %v2163
        %v2168 = vcombine.low %v2141, %v2142
        %v2170 = vunpack.c.l.s4 1966171168
        %v2171 = vunpack.c.0.s8 %v2170
        %v2172 = vlaneseq
        %v2173 = vshrl.u32 %v2172, 7
        %v2174 = vsub.s32 %v2171, %v2173
        %v2175 = vrot.slane %v2168, %v2174
        %v2177 = vunpack.c.l.s4 1966171168
        %v2178 = vunpack.c.0.s8 %v2177
        %v2179 = vlaneseq
        %v2180 = vshrl.u32 %v2179, 7
        %v2181 = vsub.s32 %v2178, %v2180
        %v2182 = vrot.slane %v2175, %v2181
        %v2184 = vmul.f32 %v2146, %v2182
        %v2185 = vadd.f32 %v2071, %v2165
        %v2186 = vadd.f32 %v2072, %v2184
        %2187 = vrot.lane.b32.xlu0 %v186, 99
        %v2188 = vpop.permute.xlu0 %2187
        %2189 = vrot.lane.b32.xlu0 %v193, 99
        %v2190 = vpop.permute.xlu0 %2189
        %vm2191 = vcmp.lt.s32.totalorder %v213, 99
        %v2192 = vsel %vm2191, %v2188, %v2190
        %v2193 = vsel %vm2191, %v2190, %v2188
        %2194 = vrot.lane.b32.xlu0 %v200, 99
        %v2195 = vpop.permute.xlu0 %2194
        %2196 = vrot.lane.b32.xlu0 %v207, 99
        %v2197 = vpop.permute.xlu0 %2196
        %v2198 = vsel %vm2191, %v2195, %v2197
        %v2199 = vsel %vm2191, %v2197, %v2195
        %s2200 = scalar_lea.vmem [#allocation5], 67
        %v2201 = vld [vmem:[%s2200] ss:$8 sm:$0x3]
        %s2202 = scalar_lea.vmem [#allocation5], 164
        %v2203 = vld [vmem:[%s2202] ss:$8 sm:$0x3]
        %v2206 = vcombine.low %v2192, %v2193
        %v2208 = vunpack.c.l.s4 1966171168
        %v2209 = vunpack.c.0.s8 %v2208
        %v2210 = vlaneseq
        %v2211 = vshrl.u32 %v2210, 7
        %v2212 = vsub.s32 %v2209, %v2211
        %v2213 = vrot.slane %v2206, %v2212
        %v2215 = vunpack.c.l.s4 1966171168
        %v2216 = vunpack.c.0.s8 %v2215
        %v2217 = vlaneseq
        %v2218 = vshrl.u32 %v2217, 7
        %v2219 = vsub.s32 %v2216, %v2218
        %v2220 = vrot.slane %v2213, %v2219
        %v2222 = vmul.f32 %v2201, %v2220
        %v2225 = vcombine.low %v2198, %v2199
        %v2227 = vunpack.c.l.s4 1966171168
        %v2228 = vunpack.c.0.s8 %v2227
        %v2229 = vlaneseq
        %v2230 = vshrl.u32 %v2229, 7
        %v2231 = vsub.s32 %v2228, %v2230
        %v2232 = vrot.slane %v2225, %v2231
        %v2234 = vunpack.c.l.s4 1966171168
        %v2235 = vunpack.c.0.s8 %v2234
        %v2236 = vlaneseq
        %v2237 = vshrl.u32 %v2236, 7
        %v2238 = vsub.s32 %v2235, %v2237
        %v2239 = vrot.slane %v2232, %v2238
        %v2241 = vmul.f32 %v2203, %v2239
        %v2242 = vadd.f32 %v2128, %v2222
        %v2243 = vadd.f32 %v2129, %v2241
        %2244 = vrot.lane.b32.xlu0 %v186, 98
        %v2245 = vpop.permute.xlu0 %2244
        %2246 = vrot.lane.b32.xlu0 %v193, 98
        %v2247 = vpop.permute.xlu0 %2246
        %vm2248 = vcmp.lt.s32.totalorder %v213, 98
        %v2249 = vsel %vm2248, %v2245, %v2247
        %v2250 = vsel %vm2248, %v2247, %v2245
        %2251 = vrot.lane.b32.xlu0 %v200, 98
        %v2252 = vpop.permute.xlu0 %2251
        %2253 = vrot.lane.b32.xlu0 %v207, 98
        %v2254 = vpop.permute.xlu0 %2253
        %v2255 = vsel %vm2248, %v2252, %v2254
        %v2256 = vsel %vm2248, %v2254, %v2252
        %s2257 = scalar_lea.vmem [#allocation5], 68
        %v2258 = vld [vmem:[%s2257] ss:$8 sm:$0x3]
        %s2259 = scalar_lea.vmem [#allocation5], 165
        %v2260 = vld [vmem:[%s2259] ss:$8 sm:$0x3]
        %v2263 = vcombine.low %v2249, %v2250
        %v2265 = vunpack.c.l.s4 1966171168
        %v2266 = vunpack.c.0.s8 %v2265
        %v2267 = vlaneseq
        %v2268 = vshrl.u32 %v2267, 7
        %v2269 = vsub.s32 %v2266, %v2268
        %v2270 = vrot.slane %v2263, %v2269
        %v2272 = vunpack.c.l.s4 1966171168
        %v2273 = vunpack.c.0.s8 %v2272
        %v2274 = vlaneseq
        %v2275 = vshrl.u32 %v2274, 7
        %v2276 = vsub.s32 %v2273, %v2275
        %v2277 = vrot.slane %v2270, %v2276
        %v2279 = vmul.f32 %v2258, %v2277
        %v2282 = vcombine.low %v2255, %v2256
        %v2284 = vunpack.c.l.s4 1966171168
        %v2285 = vunpack.c.0.s8 %v2284
        %v2286 = vlaneseq
        %v2287 = vshrl.u32 %v2286, 7
        %v2288 = vsub.s32 %v2285, %v2287
        %v2289 = vrot.slane %v2282, %v2288
        %v2291 = vunpack.c.l.s4 1966171168
        %v2292 = vunpack.c.0.s8 %v2291
        %v2293 = vlaneseq
        %v2294 = vshrl.u32 %v2293, 7
        %v2295 = vsub.s32 %v2292, %v2294
        %v2296 = vrot.slane %v2289, %v2295
        %v2298 = vmul.f32 %v2260, %v2296
        %v2299 = vadd.f32 %v2185, %v2279
        %v2300 = vadd.f32 %v2186, %v2298
        %2301 = vrot.lane.b32.xlu0 %v186, 97
        %v2302 = vpop.permute.xlu0 %2301
        %2303 = vrot.lane.b32.xlu0 %v193, 97
        %v2304 = vpop.permute.xlu0 %2303
        %vm2305 = vcmp.lt.s32.totalorder %v213, 97
        %v2306 = vsel %vm2305, %v2302, %v2304
        %v2307 = vsel %vm2305, %v2304, %v2302
        %2308 = vrot.lane.b32.xlu0 %v200, 97
        %v2309 = vpop.permute.xlu0 %2308
        %2310 = vrot.lane.b32.xlu0 %v207, 97
        %v2311 = vpop.permute.xlu0 %2310
        %v2312 = vsel %vm2305, %v2309, %v2311
        %v2313 = vsel %vm2305, %v2311, %v2309
        %s2314 = scalar_lea.vmem [#allocation5], 69
        %v2315 = vld [vmem:[%s2314] ss:$8 sm:$0x3]
        %s2316 = scalar_lea.vmem [#allocation5], 166
        %v2317 = vld [vmem:[%s2316] ss:$8 sm:$0x3]
        %v2320 = vcombine.low %v2306, %v2307
        %v2322 = vunpack.c.l.s4 1966171168
        %v2323 = vunpack.c.0.s8 %v2322
        %v2324 = vlaneseq
        %v2325 = vshrl.u32 %v2324, 7
        %v2326 = vsub.s32 %v2323, %v2325
        %v2327 = vrot.slane %v2320, %v2326
        %v2329 = vunpack.c.l.s4 1966171168
        %v2330 = vunpack.c.0.s8 %v2329
        %v2331 = vlaneseq
        %v2332 = vshrl.u32 %v2331, 7
        %v2333 = vsub.s32 %v2330, %v2332
        %v2334 = vrot.slane %v2327, %v2333
        %v2336 = vmul.f32 %v2315, %v2334
        %v2339 = vcombine.low %v2312, %v2313
        %v2341 = vunpack.c.l.s4 1966171168
        %v2342 = vunpack.c.0.s8 %v2341
        %v2343 = vlaneseq
        %v2344 = vshrl.u32 %v2343, 7
        %v2345 = vsub.s32 %v2342, %v2344
        %v2346 = vrot.slane %v2339, %v2345
        %v2348 = vunpack.c.l.s4 1966171168
        %v2349 = vunpack.c.0.s8 %v2348
        %v2350 = vlaneseq
        %v2351 = vshrl.u32 %v2350, 7
        %v2352 = vsub.s32 %v2349, %v2351
        %v2353 = vrot.slane %v2346, %v2352
        %v2355 = vmul.f32 %v2317, %v2353
        %v2356 = vadd.f32 %v2242, %v2336
        %v2357 = vadd.f32 %v2243, %v2355
        %2358 = vrot.lane.b32.xlu0 %v186, 96
        %v2359 = vpop.permute.xlu0 %2358
        %2360 = vrot.lane.b32.xlu0 %v193, 96
        %v2361 = vpop.permute.xlu0 %2360
        %vm2362 = vcmp.lt.s32.totalorder %v213, 96
        %v2363 = vsel %vm2362, %v2359, %v2361
        %v2364 = vsel %vm2362, %v2361, %v2359
        %2365 = vrot.lane.b32.xlu0 %v200, 96
        %v2366 = vpop.permute.xlu0 %2365
        %2367 = vrot.lane.b32.xlu0 %v207, 96
        %v2368 = vpop.permute.xlu0 %2367
        %v2369 = vsel %vm2362, %v2366, %v2368
        %v2370 = vsel %vm2362, %v2368, %v2366
        %s2371 = scalar_lea.vmem [#allocation5], 70
        %v2372 = vld [vmem:[%s2371] ss:$8 sm:$0x3]
        %s2373 = scalar_lea.vmem [#allocation5], 167
        %v2374 = vld [vmem:[%s2373] ss:$8 sm:$0x3]
        %v2377 = vcombine.low %v2363, %v2364
        %v2379 = vunpack.c.l.s4 1966171168
        %v2380 = vunpack.c.0.s8 %v2379
        %v2381 = vlaneseq
        %v2382 = vshrl.u32 %v2381, 7
        %v2383 = vsub.s32 %v2380, %v2382
        %v2384 = vrot.slane %v2377, %v2383
        %v2386 = vunpack.c.l.s4 1966171168
        %v2387 = vunpack.c.0.s8 %v2386
        %v2388 = vlaneseq
        %v2389 = vshrl.u32 %v2388, 7
        %v2390 = vsub.s32 %v2387, %v2389
        %v2391 = vrot.slane %v2384, %v2390
        %v2393 = vmul.f32 %v2372, %v2391
        %v2396 = vcombine.low %v2369, %v2370
        %v2398 = vunpack.c.l.s4 1966171168
        %v2399 = vunpack.c.0.s8 %v2398
        %v2400 = vlaneseq
        %v2401 = vshrl.u32 %v2400, 7
        %v2402 = vsub.s32 %v2399, %v2401
        %v2403 = vrot.slane %v2396, %v2402
        %v2405 = vunpack.c.l.s4 1966171168
        %v2406 = vunpack.c.0.s8 %v2405
        %v2407 = vlaneseq
        %v2408 = vshrl.u32 %v2407, 7
        %v2409 = vsub.s32 %v2406, %v2408
        %v2410 = vrot.slane %v2403, %v2409
        %v2412 = vmul.f32 %v2374, %v2410
        %v2413 = vadd.f32 %v2299, %v2393
        %v2414 = vadd.f32 %v2300, %v2412
        %2415 = vrot.lane.b32.xlu0 %v186, 95
        %v2416 = vpop.permute.xlu0 %2415
        %2417 = vrot.lane.b32.xlu0 %v193, 95
        %v2418 = vpop.permute.xlu0 %2417
        %vm2419 = vcmp.lt.s32.totalorder %v213, 95
        %v2420 = vsel %vm2419, %v2416, %v2418
        %v2421 = vsel %vm2419, %v2418, %v2416
        %2422 = vrot.lane.b32.xlu0 %v200, 95
        %v2423 = vpop.permute.xlu0 %2422
        %2424 = vrot.lane.b32.xlu0 %v207, 95
        %v2425 = vpop.permute.xlu0 %2424
        %v2426 = vsel %vm2419, %v2423, %v2425
        %v2427 = vsel %vm2419, %v2425, %v2423
        %s2428 = scalar_lea.vmem [#allocation5], 71
        %v2429 = vld [vmem:[%s2428] ss:$8 sm:$0x3]
        %s2430 = scalar_lea.vmem [#allocation5], 176
        %v2431 = vld [vmem:[%s2430] ss:$8 sm:$0x3]
        %v2434 = vcombine.low %v2420, %v2421
        %v2436 = vunpack.c.l.s4 1966171168
        %v2437 = vunpack.c.0.s8 %v2436
        %v2438 = vlaneseq
        %v2439 = vshrl.u32 %v2438, 7
        %v2440 = vsub.s32 %v2437, %v2439
        %v2441 = vrot.slane %v2434, %v2440
        %v2443 = vunpack.c.l.s4 1966171168
        %v2444 = vunpack.c.0.s8 %v2443
        %v2445 = vlaneseq
        %v2446 = vshrl.u32 %v2445, 7
        %v2447 = vsub.s32 %v2444, %v2446
        %v2448 = vrot.slane %v2441, %v2447
        %v2450 = vmul.f32 %v2429, %v2448
        %v2453 = vcombine.low %v2426, %v2427
        %v2455 = vunpack.c.l.s4 1966171168
        %v2456 = vunpack.c.0.s8 %v2455
        %v2457 = vlaneseq
        %v2458 = vshrl.u32 %v2457, 7
        %v2459 = vsub.s32 %v2456, %v2458
        %v2460 = vrot.slane %v2453, %v2459
        %v2462 = vunpack.c.l.s4 1966171168
        %v2463 = vunpack.c.0.s8 %v2462
        %v2464 = vlaneseq
        %v2465 = vshrl.u32 %v2464, 7
        %v2466 = vsub.s32 %v2463, %v2465
        %v2467 = vrot.slane %v2460, %v2466
        %v2469 = vmul.f32 %v2431, %v2467
        %v2470 = vadd.f32 %v2356, %v2450
        %v2471 = vadd.f32 %v2357, %v2469
        %2472 = vrot.lane.b32.xlu0 %v186, 94
        %v2473 = vpop.permute.xlu0 %2472
        %2474 = vrot.lane.b32.xlu0 %v193, 94
        %v2475 = vpop.permute.xlu0 %2474
        %vm2476 = vcmp.lt.s32.totalorder %v213, 94
        %v2477 = vsel %vm2476, %v2473, %v2475
        %v2478 = vsel %vm2476, %v2475, %v2473
        %2479 = vrot.lane.b32.xlu0 %v200, 94
        %v2480 = vpop.permute.xlu0 %2479
        %2481 = vrot.lane.b32.xlu0 %v207, 94
        %v2482 = vpop.permute.xlu0 %2481
        %v2483 = vsel %vm2476, %v2480, %v2482
        %v2484 = vsel %vm2476, %v2482, %v2480
        %s2485 = scalar_lea.vmem [#allocation5], 80
        %v2486 = vld [vmem:[%s2485] ss:$8 sm:$0x3]
        %s2487 = scalar_lea.vmem [#allocation5], 177
        %v2488 = vld [vmem:[%s2487] ss:$8 sm:$0x3]
        %v2491 = vcombine.low %v2477, %v2478
        %v2493 = vunpack.c.l.s4 1966171168
        %v2494 = vunpack.c.0.s8 %v2493
        %v2495 = vlaneseq
        %v2496 = vshrl.u32 %v2495, 7
        %v2497 = vsub.s32 %v2494, %v2496
        %v2498 = vrot.slane %v2491, %v2497
        %v2500 = vunpack.c.l.s4 1966171168
        %v2501 = vunpack.c.0.s8 %v2500
        %v2502 = vlaneseq
        %v2503 = vshrl.u32 %v2502, 7
        %v2504 = vsub.s32 %v2501, %v2503
        %v2505 = vrot.slane %v2498, %v2504
        %v2507 = vmul.f32 %v2486, %v2505
        %v2510 = vcombine.low %v2483, %v2484
        %v2512 = vunpack.c.l.s4 1966171168
        %v2513 = vunpack.c.0.s8 %v2512
        %v2514 = vlaneseq
        %v2515 = vshrl.u32 %v2514, 7
        %v2516 = vsub.s32 %v2513, %v2515
        %v2517 = vrot.slane %v2510, %v2516
        %v2519 = vunpack.c.l.s4 1966171168
        %v2520 = vunpack.c.0.s8 %v2519
        %v2521 = vlaneseq
        %v2522 = vshrl.u32 %v2521, 7
        %v2523 = vsub.s32 %v2520, %v2522
        %v2524 = vrot.slane %v2517, %v2523
        %v2526 = vmul.f32 %v2488, %v2524
        %v2527 = vadd.f32 %v2413, %v2507
        %v2528 = vadd.f32 %v2414, %v2526
        %2529 = vrot.lane.b32.xlu0 %v186, 93
        %v2530 = vpop.permute.xlu0 %2529
        %2531 = vrot.lane.b32.xlu0 %v193, 93
        %v2532 = vpop.permute.xlu0 %2531
        %vm2533 = vcmp.lt.s32.totalorder %v213, 93
        %v2534 = vsel %vm2533, %v2530, %v2532
        %v2535 = vsel %vm2533, %v2532, %v2530
        %2536 = vrot.lane.b32.xlu0 %v200, 93
        %v2537 = vpop.permute.xlu0 %2536
        %2538 = vrot.lane.b32.xlu0 %v207, 93
        %v2539 = vpop.permute.xlu0 %2538
        %v2540 = vsel %vm2533, %v2537, %v2539
        %v2541 = vsel %vm2533, %v2539, %v2537
        %s2542 = scalar_lea.vmem [#allocation5], 81
        %v2543 = vld [vmem:[%s2542] ss:$8 sm:$0x3]
        %s2544 = scalar_lea.vmem [#allocation5], 178
        %v2545 = vld [vmem:[%s2544] ss:$8 sm:$0x3]
        %v2548 = vcombine.low %v2534, %v2535
        %v2550 = vunpack.c.l.s4 1966171168
        %v2551 = vunpack.c.0.s8 %v2550
        %v2552 = vlaneseq
        %v2553 = vshrl.u32 %v2552, 7
        %v2554 = vsub.s32 %v2551, %v2553
        %v2555 = vrot.slane %v2548, %v2554
        %v2557 = vunpack.c.l.s4 1966171168
        %v2558 = vunpack.c.0.s8 %v2557
        %v2559 = vlaneseq
        %v2560 = vshrl.u32 %v2559, 7
        %v2561 = vsub.s32 %v2558, %v2560
        %v2562 = vrot.slane %v2555, %v2561
        %v2564 = vmul.f32 %v2543, %v2562
        %v2567 = vcombine.low %v2540, %v2541
        %v2569 = vunpack.c.l.s4 1966171168
        %v2570 = vunpack.c.0.s8 %v2569
        %v2571 = vlaneseq
        %v2572 = vshrl.u32 %v2571, 7
        %v2573 = vsub.s32 %v2570, %v2572
        %v2574 = vrot.slane %v2567, %v2573
        %v2576 = vunpack.c.l.s4 1966171168
        %v2577 = vunpack.c.0.s8 %v2576
        %v2578 = vlaneseq
        %v2579 = vshrl.u32 %v2578, 7
        %v2580 = vsub.s32 %v2577, %v2579
        %v2581 = vrot.slane %v2574, %v2580
        %v2583 = vmul.f32 %v2545, %v2581
        %v2584 = vadd.f32 %v2470, %v2564
        %v2585 = vadd.f32 %v2471, %v2583
        %2586 = vrot.lane.b32.xlu0 %v186, 83
        %v2587 = vpop.permute.xlu0 %2586
        %2588 = vrot.lane.b32.xlu0 %v193, 83
        %v2589 = vpop.permute.xlu0 %2588
        %vm2590 = vcmp.lt.s32.totalorder %v213, 83
        %v2591 = vsel %vm2590, %v2587, %v2589
        %v2592 = vsel %vm2590, %v2589, %v2587
        %2593 = vrot.lane.b32.xlu0 %v200, 83
        %v2594 = vpop.permute.xlu0 %2593
        %2595 = vrot.lane.b32.xlu0 %v207, 83
        %v2596 = vpop.permute.xlu0 %2595
        %v2597 = vsel %vm2590, %v2594, %v2596
        %v2598 = vsel %vm2590, %v2596, %v2594
        %s2599 = scalar_lea.vmem [#allocation5], 82
        %v2600 = vld [vmem:[%s2599] ss:$8 sm:$0x3]
        %s2601 = scalar_lea.vmem [#allocation5], 179
        %v2602 = vld [vmem:[%s2601] ss:$8 sm:$0x3]
        %v2605 = vcombine.low %v2591, %v2592
        %v2607 = vunpack.c.l.s4 1966171168
        %v2608 = vunpack.c.0.s8 %v2607
        %v2609 = vlaneseq
        %v2610 = vshrl.u32 %v2609, 7
        %v2611 = vsub.s32 %v2608, %v2610
        %v2612 = vrot.slane %v2605, %v2611
        %v2614 = vunpack.c.l.s4 1966171168
        %v2615 = vunpack.c.0.s8 %v2614
        %v2616 = vlaneseq
        %v2617 = vshrl.u32 %v2616, 7
        %v2618 = vsub.s32 %v2615, %v2617
        %v2619 = vrot.slane %v2612, %v2618
        %v2621 = vmul.f32 %v2600, %v2619
        %v2624 = vcombine.low %v2597, %v2598
        %v2626 = vunpack.c.l.s4 1966171168
        %v2627 = vunpack.c.0.s8 %v2626
        %v2628 = vlaneseq
        %v2629 = vshrl.u32 %v2628, 7
        %v2630 = vsub.s32 %v2627, %v2629
        %v2631 = vrot.slane %v2624, %v2630
        %v2633 = vunpack.c.l.s4 1966171168
        %v2634 = vunpack.c.0.s8 %v2633
        %v2635 = vlaneseq
        %v2636 = vshrl.u32 %v2635, 7
        %v2637 = vsub.s32 %v2634, %v2636
        %v2638 = vrot.slane %v2631, %v2637
        %v2640 = vmul.f32 %v2602, %v2638
        %v2641 = vadd.f32 %v2527, %v2621
        %v2642 = vadd.f32 %v2528, %v2640
        %2643 = vrot.lane.b32.xlu0 %v186, 82
        %v2644 = vpop.permute.xlu0 %2643
        %2645 = vrot.lane.b32.xlu0 %v193, 82
        %v2646 = vpop.permute.xlu0 %2645
        %vm2647 = vcmp.lt.s32.totalorder %v213, 82
        %v2648 = vsel %vm2647, %v2644, %v2646
        %v2649 = vsel %vm2647, %v2646, %v2644
        %2650 = vrot.lane.b32.xlu0 %v200, 82
        %v2651 = vpop.permute.xlu0 %2650
        %2652 = vrot.lane.b32.xlu0 %v207, 82
        %v2653 = vpop.permute.xlu0 %2652
        %v2654 = vsel %vm2647, %v2651, %v2653
        %v2655 = vsel %vm2647, %v2653, %v2651
        %s2656 = scalar_lea.vmem [#allocation5], 83
        %v2657 = vld [vmem:[%s2656] ss:$8 sm:$0x3]
        %s2658 = scalar_lea.vmem [#allocation5], 180
        %v2659 = vld [vmem:[%s2658] ss:$8 sm:$0x3]
        %v2662 = vcombine.low %v2648, %v2649
        %v2664 = vunpack.c.l.s4 1966171168
        %v2665 = vunpack.c.0.s8 %v2664
        %v2666 = vlaneseq
        %v2667 = vshrl.u32 %v2666, 7
        %v2668 = vsub.s32 %v2665, %v2667
        %v2669 = vrot.slane %v2662, %v2668
        %v2671 = vunpack.c.l.s4 1966171168
        %v2672 = vunpack.c.0.s8 %v2671
        %v2673 = vlaneseq
        %v2674 = vshrl.u32 %v2673, 7
        %v2675 = vsub.s32 %v2672, %v2674
        %v2676 = vrot.slane %v2669, %v2675
        %v2678 = vmul.f32 %v2657, %v2676
        %v2681 = vcombine.low %v2654, %v2655
        %v2683 = vunpack.c.l.s4 1966171168
        %v2684 = vunpack.c.0.s8 %v2683
        %v2685 = vlaneseq
        %v2686 = vshrl.u32 %v2685, 7
        %v2687 = vsub.s32 %v2684, %v2686
        %v2688 = vrot.slane %v2681, %v2687
        %v2690 = vunpack.c.l.s4 1966171168
        %v2691 = vunpack.c.0.s8 %v2690
        %v2692 = vlaneseq
        %v2693 = vshrl.u32 %v2692, 7
        %v2694 = vsub.s32 %v2691, %v2693
        %v2695 = vrot.slane %v2688, %v2694
        %v2697 = vmul.f32 %v2659, %v2695
        %v2698 = vadd.f32 %v2584, %v2678
        %v2699 = vadd.f32 %v2585, %v2697
        %2700 = vrot.lane.b32.xlu0 %v186, 81
        %v2701 = vpop.permute.xlu0 %2700
        %2702 = vrot.lane.b32.xlu0 %v193, 81
        %v2703 = vpop.permute.xlu0 %2702
        %vm2704 = vcmp.lt.s32.totalorder %v213, 81
        %v2705 = vsel %vm2704, %v2701, %v2703
        %v2706 = vsel %vm2704, %v2703, %v2701
        %2707 = vrot.lane.b32.xlu0 %v200, 81
        %v2708 = vpop.permute.xlu0 %2707
        %2709 = vrot.lane.b32.xlu0 %v207, 81
        %v2710 = vpop.permute.xlu0 %2709
        %v2711 = vsel %vm2704, %v2708, %v2710
        %v2712 = vsel %vm2704, %v2710, %v2708
        %s2713 = scalar_lea.vmem [#allocation5], 84
        %v2714 = vld [vmem:[%s2713] ss:$8 sm:$0x3]
        %s2715 = scalar_lea.vmem [#allocation5], 181
        %v2716 = vld [vmem:[%s2715] ss:$8 sm:$0x3]
        %v2719 = vcombine.low %v2705, %v2706
        %v2721 = vunpack.c.l.s4 1966171168
        %v2722 = vunpack.c.0.s8 %v2721
        %v2723 = vlaneseq
        %v2724 = vshrl.u32 %v2723, 7
        %v2725 = vsub.s32 %v2722, %v2724
        %v2726 = vrot.slane %v2719, %v2725
        %v2728 = vunpack.c.l.s4 1966171168
        %v2729 = vunpack.c.0.s8 %v2728
        %v2730 = vlaneseq
        %v2731 = vshrl.u32 %v2730, 7
        %v2732 = vsub.s32 %v2729, %v2731
        %v2733 = vrot.slane %v2726, %v2732
        %v2735 = vmul.f32 %v2714, %v2733
        %v2738 = vcombine.low %v2711, %v2712
        %v2740 = vunpack.c.l.s4 1966171168
        %v2741 = vunpack.c.0.s8 %v2740
        %v2742 = vlaneseq
        %v2743 = vshrl.u32 %v2742, 7
        %v2744 = vsub.s32 %v2741, %v2743
        %v2745 = vrot.slane %v2738, %v2744
        %v2747 = vunpack.c.l.s4 1966171168
        %v2748 = vunpack.c.0.s8 %v2747
        %v2749 = vlaneseq
        %v2750 = vshrl.u32 %v2749, 7
        %v2751 = vsub.s32 %v2748, %v2750
        %v2752 = vrot.slane %v2745, %v2751
        %v2754 = vmul.f32 %v2716, %v2752
        %v2755 = vadd.f32 %v2641, %v2735
        %v2756 = vadd.f32 %v2642, %v2754
        %2757 = vrot.lane.b32.xlu0 %v186, 80
        %v2758 = vpop.permute.xlu0 %2757
        %2759 = vrot.lane.b32.xlu0 %v193, 80
        %v2760 = vpop.permute.xlu0 %2759
        %vm2761 = vcmp.lt.s32.totalorder %v213, 80
        %v2762 = vsel %vm2761, %v2758, %v2760
        %v2763 = vsel %vm2761, %v2760, %v2758
        %2764 = vrot.lane.b32.xlu0 %v200, 80
        %v2765 = vpop.permute.xlu0 %2764
        %2766 = vrot.lane.b32.xlu0 %v207, 80
        %v2767 = vpop.permute.xlu0 %2766
        %v2768 = vsel %vm2761, %v2765, %v2767
        %v2769 = vsel %vm2761, %v2767, %v2765
        %s2770 = scalar_lea.vmem [#allocation5], 85
        %v2771 = vld [vmem:[%s2770] ss:$8 sm:$0x3]
        %s2772 = scalar_lea.vmem [#allocation5], 182
        %v2773 = vld [vmem:[%s2772] ss:$8 sm:$0x3]
        %v2776 = vcombine.low %v2762, %v2763
        %v2778 = vunpack.c.l.s4 1966171168
        %v2779 = vunpack.c.0.s8 %v2778
        %v2780 = vlaneseq
        %v2781 = vshrl.u32 %v2780, 7
        %v2782 = vsub.s32 %v2779, %v2781
        %v2783 = vrot.slane %v2776, %v2782
        %v2785 = vunpack.c.l.s4 1966171168
        %v2786 = vunpack.c.0.s8 %v2785
        %v2787 = vlaneseq
        %v2788 = vshrl.u32 %v2787, 7
        %v2789 = vsub.s32 %v2786, %v2788
        %v2790 = vrot.slane %v2783, %v2789
        %v2792 = vmul.f32 %v2771, %v2790
        %v2795 = vcombine.low %v2768, %v2769
        %v2797 = vunpack.c.l.s4 1966171168
        %v2798 = vunpack.c.0.s8 %v2797
        %v2799 = vlaneseq
        %v2800 = vshrl.u32 %v2799, 7
        %v2801 = vsub.s32 %v2798, %v2800
        %v2802 = vrot.slane %v2795, %v2801
        %v2804 = vunpack.c.l.s4 1966171168
        %v2805 = vunpack.c.0.s8 %v2804
        %v2806 = vlaneseq
        %v2807 = vshrl.u32 %v2806, 7
        %v2808 = vsub.s32 %v2805, %v2807
        %v2809 = vrot.slane %v2802, %v2808
        %v2811 = vmul.f32 %v2773, %v2809
        %v2812 = vadd.f32 %v2698, %v2792
        %v2813 = vadd.f32 %v2699, %v2811
        %2814 = vrot.lane.b32.xlu0 %v186, 79
        %v2815 = vpop.permute.xlu0 %2814
        %2816 = vrot.lane.b32.xlu0 %v193, 79
        %v2817 = vpop.permute.xlu0 %2816
        %vm2818 = vcmp.lt.s32.totalorder %v213, 79
        %v2819 = vsel %vm2818, %v2815, %v2817
        %v2820 = vsel %vm2818, %v2817, %v2815
        %2821 = vrot.lane.b32.xlu0 %v200, 79
        %v2822 = vpop.permute.xlu0 %2821
        %2823 = vrot.lane.b32.xlu0 %v207, 79
        %v2824 = vpop.permute.xlu0 %2823
        %v2825 = vsel %vm2818, %v2822, %v2824
        %v2826 = vsel %vm2818, %v2824, %v2822
        %s2827 = scalar_lea.vmem [#allocation5], 86
        %v2828 = vld [vmem:[%s2827] ss:$8 sm:$0x3]
        %s2829 = scalar_lea.vmem [#allocation5], 183
        %v2830 = vld [vmem:[%s2829] ss:$8 sm:$0x3]
        %v2833 = vcombine.low %v2819, %v2820
        %v2835 = vunpack.c.l.s4 1966171168
        %v2836 = vunpack.c.0.s8 %v2835
        %v2837 = vlaneseq
        %v2838 = vshrl.u32 %v2837, 7
        %v2839 = vsub.s32 %v2836, %v2838
        %v2840 = vrot.slane %v2833, %v2839
        %v2842 = vunpack.c.l.s4 1966171168
        %v2843 = vunpack.c.0.s8 %v2842
        %v2844 = vlaneseq
        %v2845 = vshrl.u32 %v2844, 7
        %v2846 = vsub.s32 %v2843, %v2845
        %v2847 = vrot.slane %v2840, %v2846
        %v2849 = vmul.f32 %v2828, %v2847
        %v2852 = vcombine.low %v2825, %v2826
        %v2854 = vunpack.c.l.s4 1966171168
        %v2855 = vunpack.c.0.s8 %v2854
        %v2856 = vlaneseq
        %v2857 = vshrl.u32 %v2856, 7
        %v2858 = vsub.s32 %v2855, %v2857
        %v2859 = vrot.slane %v2852, %v2858
        %v2861 = vunpack.c.l.s4 1966171168
        %v2862 = vunpack.c.0.s8 %v2861
        %v2863 = vlaneseq
        %v2864 = vshrl.u32 %v2863, 7
        %v2865 = vsub.s32 %v2862, %v2864
        %v2866 = vrot.slane %v2859, %v2865
        %v2868 = vmul.f32 %v2830, %v2866
        %v2869 = vadd.f32 %v2755, %v2849
        %v2870 = vadd.f32 %v2756, %v2868
        %2871 = vrot.lane.b32.xlu0 %v186, 78
        %v2872 = vpop.permute.xlu0 %2871
        %2873 = vrot.lane.b32.xlu0 %v193, 78
        %v2874 = vpop.permute.xlu0 %2873
        %vm2875 = vcmp.lt.s32.totalorder %v213, 78
        %v2876 = vsel %vm2875, %v2872, %v2874
        %v2877 = vsel %vm2875, %v2874, %v2872
        %2878 = vrot.lane.b32.xlu0 %v200, 78
        %v2879 = vpop.permute.xlu0 %2878
        %2880 = vrot.lane.b32.xlu0 %v207, 78
        %v2881 = vpop.permute.xlu0 %2880
        %v2882 = vsel %vm2875, %v2879, %v2881
        %v2883 = vsel %vm2875, %v2881, %v2879
        %s2884 = scalar_lea.vmem [#allocation5], 87
        %v2885 = vld [vmem:[%s2884] ss:$8 sm:$0x3]
        %s2886 = scalar_lea.vmem [#allocation5], 192
        %v2887 = vld [vmem:[%s2886] ss:$8 sm:$0x3]
        %v2890 = vcombine.low %v2876, %v2877
        %v2892 = vunpack.c.l.s4 1966171168
        %v2893 = vunpack.c.0.s8 %v2892
        %v2894 = vlaneseq
        %v2895 = vshrl.u32 %v2894, 7
        %v2896 = vsub.s32 %v2893, %v2895
        %v2897 = vrot.slane %v2890, %v2896
        %v2899 = vunpack.c.l.s4 1966171168
        %v2900 = vunpack.c.0.s8 %v2899
        %v2901 = vlaneseq
        %v2902 = vshrl.u32 %v2901, 7
        %v2903 = vsub.s32 %v2900, %v2902
        %v2904 = vrot.slane %v2897, %v2903
        %v2906 = vmul.f32 %v2885, %v2904
        %v2909 = vcombine.low %v2882, %v2883
        %v2911 = vunpack.c.l.s4 1966171168
        %v2912 = vunpack.c.0.s8 %v2911
        %v2913 = vlaneseq
        %v2914 = vshrl.u32 %v2913, 7
        %v2915 = vsub.s32 %v2912, %v2914
        %v2916 = vrot.slane %v2909, %v2915
        %v2918 = vunpack.c.l.s4 1966171168
        %v2919 = vunpack.c.0.s8 %v2918
        %v2920 = vlaneseq
        %v2921 = vshrl.u32 %v2920, 7
        %v2922 = vsub.s32 %v2919, %v2921
        %v2923 = vrot.slane %v2916, %v2922
        %v2925 = vmul.f32 %v2887, %v2923
        %v2926 = vadd.f32 %v2812, %v2906
        %v2927 = vadd.f32 %v2813, %v2925
        %2928 = vrot.lane.b32.xlu0 %v186, 77
        %v2929 = vpop.permute.xlu0 %2928
        %2930 = vrot.lane.b32.xlu0 %v193, 77
        %v2931 = vpop.permute.xlu0 %2930
        %vm2932 = vcmp.lt.s32.totalorder %v213, 77
        %v2933 = vsel %vm2932, %v2929, %v2931
        %v2934 = vsel %vm2932, %v2931, %v2929
        %2935 = vrot.lane.b32.xlu0 %v200, 77
        %v2936 = vpop.permute.xlu0 %2935
        %2937 = vrot.lane.b32.xlu0 %v207, 77
        %v2938 = vpop.permute.xlu0 %2937
        %v2939 = vsel %vm2932, %v2936, %v2938
        %v2940 = vsel %vm2932, %v2938, %v2936
        %s2941 = scalar_lea.vmem [#allocation5], 96
        %v2942 = vld [vmem:[%s2941] ss:$8 sm:$0x3]
        %s2943 = scalar_lea.vmem [#allocation5], 193
        %v2944 = vld [vmem:[%s2943] ss:$8 sm:$0x3]
        %v2947 = vcombine.low %v2933, %v2934
        %v2949 = vunpack.c.l.s4 1966171168
        %v2950 = vunpack.c.0.s8 %v2949
        %v2951 = vlaneseq
        %v2952 = vshrl.u32 %v2951, 7
        %v2953 = vsub.s32 %v2950, %v2952
        %v2954 = vrot.slane %v2947, %v2953
        %v2956 = vunpack.c.l.s4 1966171168
        %v2957 = vunpack.c.0.s8 %v2956
        %v2958 = vlaneseq
        %v2959 = vshrl.u32 %v2958, 7
        %v2960 = vsub.s32 %v2957, %v2959
        %v2961 = vrot.slane %v2954, %v2960
        %v2963 = vmul.f32 %v2942, %v2961
        %v2966 = vcombine.low %v2939, %v2940
        %v2968 = vunpack.c.l.s4 1966171168
        %v2969 = vunpack.c.0.s8 %v2968
        %v2970 = vlaneseq
        %v2971 = vshrl.u32 %v2970, 7
        %v2972 = vsub.s32 %v2969, %v2971
        %v2973 = vrot.slane %v2966, %v2972
        %v2975 = vunpack.c.l.s4 1966171168
        %v2976 = vunpack.c.0.s8 %v2975
        %v2977 = vlaneseq
        %v2978 = vshrl.u32 %v2977, 7
        %v2979 = vsub.s32 %v2976, %v2978
        %v2980 = vrot.slane %v2973, %v2979
        %v2982 = vmul.f32 %v2944, %v2980
        %v2983 = vadd.f32 %v2869, %v2963
        %v2984 = vadd.f32 %v2870, %v2982
        %v2985 = vadd.f32 %v2983, %v2926
        %v2986 = vadd.f32 %v2985, %v2984
        %v2987 = vadd.f32 %v2986, %v2927
        %v2988 = vsub.f32 0.0, %v2987
        %v2989 = vmul.f32 %v2988, 1.442695
        %v2990 = vpow.pop %v2989
        %v2991 = vadd.f32 %v2990, 1.0
        %v2992 = vrcp.pop %v2991
        %v2994 = vlaneseq
        %v2995 = vshrl.u32 %v2994, 7
        %v2996 = vsub.s32 0, %v2995
        %v2997 = vrot.slane %v2992, %v2996
        %v2998 = vlaneseq
        %v2999 = vshrl.u32 %v2998, 7
        %v3000 = vsub.s32 1, %v2999
        %v3001 = vrot.slane %v2992, %v3000
        %v3002 = vcombine.low %v2997, %v3001
        %v3004 = vmul.f32 %v175, %v3002
        %3005 = vst [vmem:[%s174] sm:$0xff] %v3004
        %s3006 = sand.u32 %s75, 1
        %s3007 = scalar_lea.sflag [#allocation4], %s3006
        %s3008 = sand.u32 %s75, 1
        %s3009 = smul.addr %s3008, 8
        %s3010 = scalar_lea.vmem [#allocation7], %s3009
        // Predicated region
        $region37: #{tpu_custom_call.1} parent=27 // pred_check
          %p3011 = pneg %p85
        $region38: #{tpu_custom_call.1} parent=27 // pred_check_branch
          %3013 = sbr.rel (%p3011) target = $region40
        $region39: #{tpu_custom_call.1} parent=27 // pred_region
          %s3015 = ssub.s32 128, 128
          %3016 = vsyncadd %s3007, %s3015
          %s3017 = smul.addr %s20, 2
          %s3018 = smul.addr %s3017, 64
          %s3019 = scalar_lea.hbm %s2, %s3018
          %s3021 = sshll.u32 %s3010, 4
          %s3022 = int_to_ptr.vmem [resolvable:$true] %s3021
          %3024 = dma.vmem_to_hbm [thread:$0]  %s3022, 128, %s3019, %s3007
        $region40: #{tpu_custom_call.1} parent=27 // pred_fallthru
          _
      $region28: #{tpu_custom_call.1} parent=5 // pred_fallthru
        _
      %p3025 = scmp.le.s32.totalorder 2, %s15
      // Predicated region
      $region41: #{tpu_custom_call.1} parent=5 // pred_check
        %p3026 = pneg %p3025
      $region42: #{tpu_custom_call.1} parent=5 // pred_check_branch
        %3028 = sbr.rel (%p3026) target = $region44
      $region43: #{tpu_custom_call.1} parent=5 // pred_region
        %s3029 = ssub.s32 %s15, 2
        // Predicated region
        $region45: #{tpu_custom_call.1} parent=43 // pred_check
          %p3030 = pneg %p91
        $region46: #{tpu_custom_call.1} parent=43 // pred_check_branch
          %3032 = sbr.rel (%p3030) target = $region48
        $region47: #{tpu_custom_call.1} parent=43 // pred_region
          %s3033 = sand.u32 %s76, 1
          %s3034 = scalar_lea.sflag [#allocation4], %s3033
          %s3035 = sand.u32 %s76, 1
          %s3036 = smul.addr %s3035, 8
          %s3037 = scalar_lea.vmem [#allocation7], %s3036
          %3038 = dma.done %s3034, 128
        $region48: #{tpu_custom_call.1} parent=43 // pred_fallthru
          _
      $region44: #{tpu_custom_call.1} parent=5 // pred_fallthru
        _
    $region6: #{tpu_custom_call.1} parent=1 // loop_footer
      %s19 = sadd.s32 1, %s15
    $region7: #{tpu_custom_call.1} parent=1 // loop_footer_branch
      %14 = sbr.rel target = $region3
    $region8: #{tpu_custom_call.1} parent=1 // loop_exit
      _
    %3039 = vsyncpa [#allocation3], 1
    %s3040 = scalar_lea.sflag [#allocation3], 1
    %3041 = vsyncpa %s3040, 1
    %3042 = vsyncpa [#allocation6], 1
    %3043 = vsyncpa [#allocation4], 1
    %s3044 = scalar_lea.sflag [#allocation4], 1
    %3045 = vsyncpa %s3044, 1

</llo_original>
